<compile_context>
chip_gen: v7x
topology: tpu7x:2x2x1
jax: 0.10.0
libtpu: 0.0.40
codegen_flags: <defaults>
</compile_context>

<pallas_src>
import functools
import numpy as np
import jax
import jax.numpy as jnp
from jax.experimental import pallas as pl
from jax.experimental.pallas import tpu as pltpu

BN_EPS = 1e-5
N_HIDDEN = 5          # (Linear, BatchNorm1d, Sigmoid) blocks in AffineCoupling.nn
LANE = 128


def round_up(n, m=LANE):
    return (n + m - 1) // m * m


# ----------------------------- Pallas kernel ------------------------------- #
def fused_revnet_kernel(x_ref,
                        # layer 1 (ActNorm+conv+perm folded)
                        w1_ref, b1_ref, ws1_ref, bs1_ref, g1_ref, be1_ref, wl1_ref, bl1_ref,
                        # layer 2 (folded conv weight pre-split into y_a / x_b row blocks)
                        w2a_ref, w2b_ref, b2_ref, ws2_ref, bs2_ref, g2_ref, be2_ref, wl2_ref, bl2_ref,
                        out_ref, *, apad1, apad2):
    def coupling(x_a, x_b, ws_ref, bs_ref, g_ref, be_ref, wl_ref, bl_ref, apad):
        h = x_b
        for l in range(N_HIDDEN):
            h = jnp.dot(h.astype(jnp.bfloat16), ws_ref[l],
                        preferred_element_type=jnp.float32) + bs_ref[l]
            # one-pass batch statistics (training-mode BatchNorm1d, biased variance)
            mean = jnp.mean(h, axis=0, keepdims=True)
            var = jnp.mean(h * h, axis=0, keepdims=True) - mean * mean
            h = g_ref[l] * (h - mean) * jax.lax.rsqrt(var + BN_EPS) + be_ref[l]
            h = jax.nn.sigmoid(h)
        st = jnp.dot(h.astype(jnp.bfloat16), wl_ref[...],
                     preferred_element_type=jnp.float32) + bl_ref[...]
        s = jnp.exp(st[:, :apad])        # padded lanes: exp(0) = 1
        t = st[:, apad:]                 # padded lanes: 0
        return s * x_a + t               # padded lanes of x_a are 0 -> stay 0

    # ---- layer 1: ActNorm + 1x1 conv + permutation as a single matmul ----
    xp1 = jnp.dot(x_ref[...].astype(jnp.bfloat16), w1_ref[...],
                  preferred_element_type=jnp.float32) + b1_ref[...]
    xa1 = xp1[:, :apad1]                 # lane-aligned split (Apad1 is a multiple of 128)
    xb1 = xp1[:, apad1:]
    ya1 = coupling(xa1, xb1, ws1_ref, bs1_ref, g1_ref, be1_ref, wl1_ref, bl1_ref, apad1)

    # ---- layer 2: folded conv applied to (y_a1 | x_b1) without a concatenate ----
    xp2 = (jnp.dot(ya1.astype(jnp.bfloat16), w2a_ref[...], preferred_element_type=jnp.float32)
           + jnp.dot(xb1.astype(jnp.bfloat16), w2b_ref[...], preferred_element_type=jnp.float32)
           + b2_ref[...])
    xa2 = xp2[:, :apad2]
    xb2 = xp2[:, apad2:]
    ya2 = coupling(xa2, xb2, ws2_ref, bs2_ref, g2_ref, be2_ref, wl2_ref, bl2_ref, apad2)

    # two lane-aligned stores instead of a concatenate
    out_ref[:, :apad2] = ya2
    out_ref[:, apad2:] = xb2


# ----------------------- parameter folding / padding ------------------------ #
def prepare_layer(p, in_cols, in_width):
    """Fold ActNorm + conv + permutation, pad splits to 128 lanes, cast weights to bf16.

    in_cols[i]  = physical column (in the padded incoming activation) of logical input i
    in_width    = physical width of the incoming activation
    """
    I, O, M, A = p['I'], p['O'], p['M'], p['A']
    Apad, Mpad = round_up(A), round_up(M)

    # W_eff = diag(an_a) @ wconv.T, then permute columns; b_eff = (an_b @ wconv.T)[perm]
    wconv_t = p['wconv'].T                                       # (I, O)
    weff = (p['an_a'][:, None] * wconv_t)[:, p['perm']]          # (I, O)
    beff = (p['an_b'] @ wconv_t)[p['perm']]                      # (O,)

    # scatter logical rows into padded physical rows; split/pad output columns
    W = jnp.zeros((in_width, Apad + Mpad), jnp.float32)
    W = W.at[in_cols, :A].set(weff[:, :A])
    W = W.at[in_cols, Apad:Apad + M].set(weff[:, A:])
    b = jnp.zeros((1, Apad + Mpad), jnp.float32)
    b = b.at[0, :A].set(beff[:A])
    b = b.at[0, Apad:Apad + M].set(beff[A:])

    # coupling-net hidden stack (Linear weights pre-transposed for x @ W)
    ws = jnp.zeros((N_HIDDEN, Mpad, Mpad), jnp.float32)
    ws = ws.at[:, :M, :M].set(jnp.transpose(p['ws'], (0, 2, 1)))
    bs = jnp.zeros((N_HIDDEN, 1, Mpad), jnp.float32).at[:, 0, :M].set(p['bs'])
    g = jnp.zeros((N_HIDDEN, 1, Mpad), jnp.float32).at[:, 0, :M].set(p['g'])
    be = jnp.zeros((N_HIDDEN, 1, Mpad), jnp.float32).at[:, 0, :M].set(p['be'])

    # final Linear -> [ s (Apad) | t (Apad) ] lane blocks
    wl_t = p['wl'].T                                             # (M, 2A)
    wl = jnp.zeros((Mpad, 2 * Apad), jnp.float32)
    wl = wl.at[:M, :A].set(wl_t[:, :A])
    wl = wl.at[:M, Apad:Apad + A].set(wl_t[:, A:])
    bl = jnp.zeros((1, 2 * Apad), jnp.float32)
    bl = bl.at[0, :A].set(p['bl'][:A])
    bl = bl.at[0, Apad:Apad + A].set(p['bl'][A:])

    prep = dict(W=W.astype(jnp.bfloat16), b=b,
                ws=ws.astype(jnp.bfloat16), bs=bs, g=g, be=be,
                wl=wl.astype(jnp.bfloat16), bl=bl,
                A=A, M=M, Apad=Apad, Mpad=Mpad)
    # layout of this layer's padded output: y_a at [0:A], x_b at [Apad:Apad+M]
    out_cols = jnp.concatenate([jnp.arange(A), Apad + jnp.arange(M)])
    return prep, out_cols, Apad + Mpad


# ------------------------------ wrapper ------------------------------------- #
def revnet_pallas(x, prep1, prep2):
    B = x.shape[0]
    apad1 = prep1['Apad']
    apad2, mpad2 = prep2['Apad'], prep2['Mpad']
    out_width = apad2 + mpad2

    w2a = prep2['W'][:apad1]      # rows multiplying y_a1
    w2b = prep2['W'][apad1:]      # rows multiplying x_b1
    args = (x,
            prep1['W'], prep1['b'], prep1['ws'], prep1['bs'],
            prep1['g'], prep1['be'], prep1['wl'], prep1['bl'],
            w2a, w2b, prep2['b'], prep2['ws'], prep2['bs'],
            prep2['g'], prep2['be'], prep2['wl'], prep2['bl'])

    def dot_flops(k, n):
        return 2 * B * k * n
    flops = (dot_flops(prep1['W'].shape[0], prep1['W'].shape[1])
             + N_HIDDEN * dot_flops(prep1['Mpad'], prep1['Mpad'])
             + dot_flops(prep1['Mpad'], 2 * prep1['Apad'])
             + dot_flops(w2a.shape[0], w2a.shape[1])
             + dot_flops(w2b.shape[0], w2b.shape[1])
             + N_HIDDEN * dot_flops(prep2['Mpad'], prep2['Mpad'])
             + dot_flops(prep2['Mpad'], 2 * prep2['Apad']))
    transcendentals = B * (N_HIDDEN * (prep1['Mpad'] + prep2['Mpad'])
                           + prep1['Apad'] + prep2['Apad'])
    bytes_accessed = (sum(int(a.size) * a.dtype.itemsize for a in args)
                      + B * out_width * 4)

    vmem = pl.BlockSpec(memory_space=pltpu.MemorySpace.VMEM)
    kernel = functools.partial(fused_revnet_kernel, apad1=apad1, apad2=apad2)
    padded = pl.pallas_call(
        kernel,
        out_shape=jax.ShapeDtypeStruct((B, out_width), jnp.float32),
        in_specs=[vmem] * len(args),
        out_specs=vmem,
        cost_estimate=pl.CostEstimate(flops=int(flops),
                                      transcendentals=int(transcendentals),
                                      bytes_accessed=int(bytes_accessed)),
    )(*args)

    # strip lane padding: real features are y_a (A2) then x_b (M2)
    A2, M2 = prep2['A'], prep2['M']
    return jnp.concatenate([padded[:, :A2], padded[:, apad2:apad2 + M2]], axis=-1)


# ------------------------- plain-JAX reference ------------------------------ #
def revnet_layer_ref(x, p):
    A = p['A']
    x = p['an_a'] * x + p['an_b']
    x = x @ p['wconv'].T
    xp = x[:, p['perm']]
    x_a, x_b = xp[:, :A], xp[:, A:]
    h = x_b
    for l in range(N_HIDDEN):
        h = h @ p['ws'][l].T + p['bs'][l]
        mean = h.mean(0, keepdims=True)
        var = ((h - mean) ** 2).mean(0, keepdims=True)
        h = p['g'][l] * (h - mean) / jnp.sqrt(var + BN_EPS) + p['be'][l]
        h = jax.nn.sigmoid(h)
    st = h @ p['wl'].T + p['bl']
    s = jnp.exp(st[:, :A])
    t = st[:, A:]
    return jnp.concatenate([s * x_a + t, x_b], axis=-1)


# --------------------------- parameter set-up ------------------------------- #
def make_raw_layer_params(key, I, O, M):
    A = O - M
    ks = jax.random.split(key, 10)
    an_a = jax.random.uniform(ks[0], (I,), jnp.float32, 0.5, 1.5)
    an_b = 0.1 * jax.random.normal(ks[1], (I,), jnp.float32)
    wconv = jax.random.normal(ks[2], (O, I), jnp.float32) / np.sqrt(I)       # (out, in)
    perm = jax.random.permutation(ks[3], O)
    ws = jax.random.normal(ks[4], (N_HIDDEN, M, M), jnp.float32) / np.sqrt(M)
    bs = 0.1 * jax.random.normal(ks[5], (N_HIDDEN, M), jnp.float32)
    g = jax.random.uniform(ks[6], (N_HIDDEN, M), jnp.float32, 0.5, 1.5)
    be = 0.1 * jax.random.normal(ks[7], (N_HIDDEN, M), jnp.float32)
    wl = 0.1 * jax.random.normal(ks[8], (2 * A, M), jnp.float32) / np.sqrt(M)
    bl = 0.1 * jax.random.normal(ks[9], (2 * A,), jnp.float32)
    return dict(an_a=an_a, an_b=an_b, wconv=wconv, perm=perm,
                ws=ws, bs=bs, g=g, be=be, wl=wl, bl=bl, I=I, O=O, M=M, A=A)


# --------------------------------- main ------------------------------------- #
if __name__ == "__main__":
    # RevNet(input_size=128, output_size=128):
    #   layer 1: RevNetLayer(128, 500, 100)   layer 2: RevNetLayer(500, 128, 100)
    INPUT_SIZE, OUTPUT_SIZE, BATCH = 128, 128, 8
    cfgs = [(INPUT_SIZE, 500, 100), (500, OUTPUT_SIZE, 100)]

    root = jax.random.PRNGKey(0)
    kx, k1, k2 = jax.random.split(root, 3)
    x = jax.random.normal(kx, (BATCH, INPUT_SIZE), jnp.float32)
    raw1 = make_raw_layer_params(k1, *cfgs[0])
    raw2 = make_raw_layer_params(k2, *cfgs[1])

    # offline folding / padding / bf16 cast (layer 2 consumes layer 1's padded layout)
    prep1, out_cols1, out_w1 = prepare_layer(raw1, jnp.arange(INPUT_SIZE), INPUT_SIZE)
    prep2, _, _ = prepare_layer(raw2, out_cols1, out_w1)

    y = revnet_pallas(x, prep1, prep2)
    y = jax.block_until_ready(y)

    y_ref = revnet_layer_ref(revnet_layer_ref(x, raw1), raw2)
    # bf16 weights vs f32 reference -> relaxed tolerance
    np.testing.assert_allclose(np.asarray(y), np.asarray(y_ref), rtol=3e-2, atol=3e-2)

    print("KERNEL_OK")
</pallas_src>

<mosaic_0001>
module attributes {stable_mosaic.version = 11 : i64} {
  func.func @fused_revnet_kernel(%arg0: memref<8x128xf32, #tpu.memory_space<vmem>>, %arg1: memref<128x640xbf16, #tpu.memory_space<vmem>>, %arg2: memref<1x640xf32, #tpu.memory_space<vmem>>, %arg3: memref<5x128x128xbf16, #tpu.memory_space<vmem>>, %arg4: memref<5x1x128xf32, #tpu.memory_space<vmem>>, %arg5: memref<5x1x128xf32, #tpu.memory_space<vmem>>, %arg6: memref<5x1x128xf32, #tpu.memory_space<vmem>>, %arg7: memref<128x1024xbf16, #tpu.memory_space<vmem>>, %arg8: memref<1x1024xf32, #tpu.memory_space<vmem>>, %arg9: memref<512x256xbf16, #tpu.memory_space<vmem>>, %arg10: memref<128x256xbf16, #tpu.memory_space<vmem>>, %arg11: memref<1x256xf32, #tpu.memory_space<vmem>>, %arg12: memref<5x128x128xbf16, #tpu.memory_space<vmem>>, %arg13: memref<5x1x128xf32, #tpu.memory_space<vmem>>, %arg14: memref<5x1x128xf32, #tpu.memory_space<vmem>>, %arg15: memref<5x1x128xf32, #tpu.memory_space<vmem>>, %arg16: memref<128x256xbf16, #tpu.memory_space<vmem>>, %arg17: memref<1x256xf32, #tpu.memory_space<vmem>>, %arg18: memref<8x256xf32, #tpu.memory_space<vmem>>) attributes {dimension_semantics = [], scalar_prefetch = 0 : i64, scratch_operands = 0 : i64, tpu.core_type = #tpu.core_type<tc>} {
    %c0 = arith.constant 0 : index
    %c0_0 = arith.constant 0 : index
    %0 = vector.load %arg0[%c0, %c0_0] : memref<8x128xf32, #tpu.memory_space<vmem>>, vector<8x128xf32>
    %1 = arith.truncf %0 : vector<8x128xf32> to vector<8x128xbf16>
    %c0_1 = arith.constant 0 : index
    %c0_2 = arith.constant 0 : index
    %2 = vector.load %arg1[%c0_1, %c0_2] : memref<128x640xbf16, #tpu.memory_space<vmem>>, vector<128x640xbf16>
    %cst = arith.constant dense<0.000000e+00> : vector<8x640xf32>
    %3 = tpu.matmul %1, %2, %cst {dimension_numbers = #tpu.dot_dimension_numbers<[1], [0], [0], [1], [0, 0, 1, 1], [], []>} : vector<8x128xbf16>, vector<128x640xbf16>, vector<8x640xf32> -> vector<8x640xf32>
    %c0_3 = arith.constant 0 : index
    %c0_4 = arith.constant 0 : index
    %4 = vector.load %arg2[%c0_3, %c0_4] : memref<1x640xf32, #tpu.memory_space<vmem>>, vector<1x640xf32>
    %5 = vector.broadcast %4 : vector<1x640xf32> to vector<8x640xf32>
    %6 = arith.addf %3, %5 : vector<8x640xf32>
    %7 = vector.extract_strided_slice %6 {offsets = [0, 0], sizes = [8, 512], strides = [1, 1]} : vector<8x640xf32> to vector<8x512xf32>
    %8 = vector.extract_strided_slice %6 {offsets = [0, 512], sizes = [8, 128], strides = [1, 1]} : vector<8x640xf32> to vector<8x128xf32>
    %9 = arith.truncf %8 : vector<8x128xf32> to vector<8x128xbf16>
    %c0_5 = arith.constant 0 : index
    %c0_6 = arith.constant 0 : index
    %c0_7 = arith.constant 0 : index
    %10 = vector.load %arg3[%c0_5, %c0_6, %c0_7] : memref<5x128x128xbf16, #tpu.memory_space<vmem>>, vector<1x128x128xbf16>
    %11 = vector.shape_cast %10 : vector<1x128x128xbf16> to vector<128x128xbf16>
    %cst_8 = arith.constant dense<0.000000e+00> : vector<8x128xf32>
    %12 = tpu.matmul %9, %11, %cst_8 {dimension_numbers = #tpu.dot_dimension_numbers<[1], [0], [0], [1], [0, 0, 1, 1], [], []>} : vector<8x128xbf16>, vector<128x128xbf16>, vector<8x128xf32> -> vector<8x128xf32>
    %c0_9 = arith.constant 0 : index
    %c0_10 = arith.constant 0 : index
    %c0_11 = arith.constant 0 : index
    %13 = vector.load %arg4[%c0_9, %c0_10, %c0_11] : memref<5x1x128xf32, #tpu.memory_space<vmem>>, vector<1x1x128xf32>
    %14 = vector.shape_cast %13 : vector<1x1x128xf32> to vector<1x128xf32>
    %15 = vector.broadcast %14 : vector<1x128xf32> to vector<8x128xf32>
    %16 = arith.addf %12, %15 : vector<8x128xf32>
    %cst_12 = arith.constant dense<0.000000e+00> : vector<128xf32>
    %17 = vector.multi_reduction <add>, %16, %cst_12 [0] : vector<8x128xf32> to vector<128xf32>
    %18 = vector.shape_cast %17 : vector<128xf32> to vector<1x128xf32>
    %cst_13 = arith.constant 8.000000e+00 : f32
    %19 = vector.broadcast %cst_13 : f32 to vector<1x128xf32>
    %20 = arith.divf %18, %19 : vector<1x128xf32>
    %21 = arith.mulf %16, %16 : vector<8x128xf32>
    %cst_14 = arith.constant dense<0.000000e+00> : vector<128xf32>
    %22 = vector.multi_reduction <add>, %21, %cst_14 [0] : vector<8x128xf32> to vector<128xf32>
    %23 = vector.shape_cast %22 : vector<128xf32> to vector<1x128xf32>
    %cst_15 = arith.constant 8.000000e+00 : f32
    %24 = vector.broadcast %cst_15 : f32 to vector<1x128xf32>
    %25 = arith.divf %23, %24 : vector<1x128xf32>
    %26 = arith.mulf %20, %20 : vector<1x128xf32>
    %27 = arith.subf %25, %26 : vector<1x128xf32>
    %c0_16 = arith.constant 0 : index
    %c0_17 = arith.constant 0 : index
    %c0_18 = arith.constant 0 : index
    %28 = vector.load %arg5[%c0_16, %c0_17, %c0_18] : memref<5x1x128xf32, #tpu.memory_space<vmem>>, vector<1x1x128xf32>
    %29 = vector.shape_cast %28 : vector<1x1x128xf32> to vector<1x128xf32>
    %30 = vector.broadcast %20 : vector<1x128xf32> to vector<8x128xf32>
    %31 = arith.subf %16, %30 : vector<8x128xf32>
    %32 = vector.broadcast %29 : vector<1x128xf32> to vector<8x128xf32>
    %33 = arith.mulf %32, %31 : vector<8x128xf32>
    %cst_19 = arith.constant 9.99999974E-6 : f32
    %34 = vector.broadcast %cst_19 : f32 to vector<1x128xf32>
    %35 = arith.addf %27, %34 : vector<1x128xf32>
    %36 = math.rsqrt %35 : vector<1x128xf32>
    %37 = vector.broadcast %36 : vector<1x128xf32> to vector<8x128xf32>
    %38 = arith.mulf %33, %37 : vector<8x128xf32>
    %c0_20 = arith.constant 0 : index
    %c0_21 = arith.constant 0 : index
    %c0_22 = arith.constant 0 : index
    %39 = vector.load %arg6[%c0_20, %c0_21, %c0_22] : memref<5x1x128xf32, #tpu.memory_space<vmem>>, vector<1x1x128xf32>
    %40 = vector.shape_cast %39 : vector<1x1x128xf32> to vector<1x128xf32>
    %41 = vector.broadcast %40 : vector<1x128xf32> to vector<8x128xf32>
    %42 = arith.addf %38, %41 : vector<8x128xf32>
    %43 = arith.negf %42 : vector<8x128xf32>
    %44 = math.exp %43 : vector<8x128xf32>
    %cst_23 = arith.constant 1.000000e+00 : f32
    %45 = vector.broadcast %cst_23 : f32 to vector<8x128xf32>
    %46 = arith.addf %45, %44 : vector<8x128xf32>
    %47 = arith.divf %45, %46 : vector<8x128xf32>
    %48 = arith.truncf %47 : vector<8x128xf32> to vector<8x128xbf16>
    %c1 = arith.constant 1 : index
    %c0_24 = arith.constant 0 : index
    %c0_25 = arith.constant 0 : index
    %49 = vector.load %arg3[%c1, %c0_24, %c0_25] : memref<5x128x128xbf16, #tpu.memory_space<vmem>>, vector<1x128x128xbf16>
    %50 = vector.shape_cast %49 : vector<1x128x128xbf16> to vector<128x128xbf16>
    %cst_26 = arith.constant dense<0.000000e+00> : vector<8x128xf32>
    %51 = tpu.matmul %48, %50, %cst_26 {dimension_numbers = #tpu.dot_dimension_numbers<[1], [0], [0], [1], [0, 0, 1, 1], [], []>} : vector<8x128xbf16>, vector<128x128xbf16>, vector<8x128xf32> -> vector<8x128xf32>
    %c1_27 = arith.constant 1 : index
    %c0_28 = arith.constant 0 : index
    %c0_29 = arith.constant 0 : index
    %52 = vector.load %arg4[%c1_27, %c0_28, %c0_29] : memref<5x1x128xf32, #tpu.memory_space<vmem>>, vector<1x1x128xf32>
    %53 = vector.shape_cast %52 : vector<1x1x128xf32> to vector<1x128xf32>
    %54 = vector.broadcast %53 : vector<1x128xf32> to vector<8x128xf32>
    %55 = arith.addf %51, %54 : vector<8x128xf32>
    %cst_30 = arith.constant dense<0.000000e+00> : vector<128xf32>
    %56 = vector.multi_reduction <add>, %55, %cst_30 [0] : vector<8x128xf32> to vector<128xf32>
    %57 = vector.shape_cast %56 : vector<128xf32> to vector<1x128xf32>
    %cst_31 = arith.constant 8.000000e+00 : f32
    %58 = vector.broadcast %cst_31 : f32 to vector<1x128xf32>
    %59 = arith.divf %57, %58 : vector<1x128xf32>
    %60 = arith.mulf %55, %55 : vector<8x128xf32>
    %cst_32 = arith.constant dense<0.000000e+00> : vector<128xf32>
    %61 = vector.multi_reduction <add>, %60, %cst_32 [0] : vector<8x128xf32> to vector<128xf32>
    %62 = vector.shape_cast %61 : vector<128xf32> to vector<1x128xf32>
    %cst_33 = arith.constant 8.000000e+00 : f32
    %63 = vector.broadcast %cst_33 : f32 to vector<1x128xf32>
    %64 = arith.divf %62, %63 : vector<1x128xf32>
    %65 = arith.mulf %59, %59 : vector<1x128xf32>
    %66 = arith.subf %64, %65 : vector<1x128xf32>
    %c1_34 = arith.constant 1 : index
    %c0_35 = arith.constant 0 : index
    %c0_36 = arith.constant 0 : index
    %67 = vector.load %arg5[%c1_34, %c0_35, %c0_36] : memref<5x1x128xf32, #tpu.memory_space<vmem>>, vector<1x1x128xf32>
    %68 = vector.shape_cast %67 : vector<1x1x128xf32> to vector<1x128xf32>
    %69 = vector.broadcast %59 : vector<1x128xf32> to vector<8x128xf32>
    %70 = arith.subf %55, %69 : vector<8x128xf32>
    %71 = vector.broadcast %68 : vector<1x128xf32> to vector<8x128xf32>
    %72 = arith.mulf %71, %70 : vector<8x128xf32>
    %cst_37 = arith.constant 9.99999974E-6 : f32
    %73 = vector.broadcast %cst_37 : f32 to vector<1x128xf32>
    %74 = arith.addf %66, %73 : vector<1x128xf32>
    %75 = math.rsqrt %74 : vector<1x128xf32>
    %76 = vector.broadcast %75 : vector<1x128xf32> to vector<8x128xf32>
    %77 = arith.mulf %72, %76 : vector<8x128xf32>
    %c1_38 = arith.constant 1 : index
    %c0_39 = arith.constant 0 : index
    %c0_40 = arith.constant 0 : index
    %78 = vector.load %arg6[%c1_38, %c0_39, %c0_40] : memref<5x1x128xf32, #tpu.memory_space<vmem>>, vector<1x1x128xf32>
    %79 = vector.shape_cast %78 : vector<1x1x128xf32> to vector<1x128xf32>
    %80 = vector.broadcast %79 : vector<1x128xf32> to vector<8x128xf32>
    %81 = arith.addf %77, %80 : vector<8x128xf32>
    %82 = arith.negf %81 : vector<8x128xf32>
    %83 = math.exp %82 : vector<8x128xf32>
    %cst_41 = arith.constant 1.000000e+00 : f32
    %84 = vector.broadcast %cst_41 : f32 to vector<8x128xf32>
    %85 = arith.addf %84, %83 : vector<8x128xf32>
    %86 = arith.divf %84, %85 : vector<8x128xf32>
    %87 = arith.truncf %86 : vector<8x128xf32> to vector<8x128xbf16>
    %c2 = arith.constant 2 : index
    %c0_42 = arith.constant 0 : index
    %c0_43 = arith.constant 0 : index
    %88 = vector.load %arg3[%c2, %c0_42, %c0_43] : memref<5x128x128xbf16, #tpu.memory_space<vmem>>, vector<1x128x128xbf16>
    %89 = vector.shape_cast %88 : vector<1x128x128xbf16> to vector<128x128xbf16>
    %cst_44 = arith.constant dense<0.000000e+00> : vector<8x128xf32>
    %90 = tpu.matmul %87, %89, %cst_44 {dimension_numbers = #tpu.dot_dimension_numbers<[1], [0], [0], [1], [0, 0, 1, 1], [], []>} : vector<8x128xbf16>, vector<128x128xbf16>, vector<8x128xf32> -> vector<8x128xf32>
    %c2_45 = arith.constant 2 : index
    %c0_46 = arith.constant 0 : index
    %c0_47 = arith.constant 0 : index
    %91 = vector.load %arg4[%c2_45, %c0_46, %c0_47] : memref<5x1x128xf32, #tpu.memory_space<vmem>>, vector<1x1x128xf32>
    %92 = vector.shape_cast %91 : vector<1x1x128xf32> to vector<1x128xf32>
    %93 = vector.broadcast %92 : vector<1x128xf32> to vector<8x128xf32>
    %94 = arith.addf %90, %93 : vector<8x128xf32>
    %cst_48 = arith.constant dense<0.000000e+00> : vector<128xf32>
    %95 = vector.multi_reduction <add>, %94, %cst_48 [0] : vector<8x128xf32> to vector<128xf32>
    %96 = vector.shape_cast %95 : vector<128xf32> to vector<1x128xf32>
    %cst_49 = arith.constant 8.000000e+00 : f32
    %97 = vector.broadcast %cst_49 : f32 to vector<1x128xf32>
    %98 = arith.divf %96, %97 : vector<1x128xf32>
    %99 = arith.mulf %94, %94 : vector<8x128xf32>
    %cst_50 = arith.constant dense<0.000000e+00> : vector<128xf32>
    %100 = vector.multi_reduction <add>, %99, %cst_50 [0] : vector<8x128xf32> to vector<128xf32>
    %101 = vector.shape_cast %100 : vector<128xf32> to vector<1x128xf32>
    %cst_51 = arith.constant 8.000000e+00 : f32
    %102 = vector.broadcast %cst_51 : f32 to vector<1x128xf32>
    %103 = arith.divf %101, %102 : vector<1x128xf32>
    %104 = arith.mulf %98, %98 : vector<1x128xf32>
    %105 = arith.subf %103, %104 : vector<1x128xf32>
    %c2_52 = arith.constant 2 : index
    %c0_53 = arith.constant 0 : index
    %c0_54 = arith.constant 0 : index
    %106 = vector.load %arg5[%c2_52, %c0_53, %c0_54] : memref<5x1x128xf32, #tpu.memory_space<vmem>>, vector<1x1x128xf32>
    %107 = vector.shape_cast %106 : vector<1x1x128xf32> to vector<1x128xf32>
    %108 = vector.broadcast %98 : vector<1x128xf32> to vector<8x128xf32>
    %109 = arith.subf %94, %108 : vector<8x128xf32>
    %110 = vector.broadcast %107 : vector<1x128xf32> to vector<8x128xf32>
    %111 = arith.mulf %110, %109 : vector<8x128xf32>
    %cst_55 = arith.constant 9.99999974E-6 : f32
    %112 = vector.broadcast %cst_55 : f32 to vector<1x128xf32>
    %113 = arith.addf %105, %112 : vector<1x128xf32>
    %114 = math.rsqrt %113 : vector<1x128xf32>
    %115 = vector.broadcast %114 : vector<1x128xf32> to vector<8x128xf32>
    %116 = arith.mulf %111, %115 : vector<8x128xf32>
    %c2_56 = arith.constant 2 : index
    %c0_57 = arith.constant 0 : index
    %c0_58 = arith.constant 0 : index
    %117 = vector.load %arg6[%c2_56, %c0_57, %c0_58] : memref<5x1x128xf32, #tpu.memory_space<vmem>>, vector<1x1x128xf32>
    %118 = vector.shape_cast %117 : vector<1x1x128xf32> to vector<1x128xf32>
    %119 = vector.broadcast %118 : vector<1x128xf32> to vector<8x128xf32>
    %120 = arith.addf %116, %119 : vector<8x128xf32>
    %121 = arith.negf %120 : vector<8x128xf32>
    %122 = math.exp %121 : vector<8x128xf32>
    %cst_59 = arith.constant 1.000000e+00 : f32
    %123 = vector.broadcast %cst_59 : f32 to vector<8x128xf32>
    %124 = arith.addf %123, %122 : vector<8x128xf32>
    %125 = arith.divf %123, %124 : vector<8x128xf32>
    %126 = arith.truncf %125 : vector<8x128xf32> to vector<8x128xbf16>
    %c3 = arith.constant 3 : index
    %c0_60 = arith.constant 0 : index
    %c0_61 = arith.constant 0 : index
    %127 = vector.load %arg3[%c3, %c0_60, %c0_61] : memref<5x128x128xbf16, #tpu.memory_space<vmem>>, vector<1x128x128xbf16>
    %128 = vector.shape_cast %127 : vector<1x128x128xbf16> to vector<128x128xbf16>
    %cst_62 = arith.constant dense<0.000000e+00> : vector<8x128xf32>
    %129 = tpu.matmul %126, %128, %cst_62 {dimension_numbers = #tpu.dot_dimension_numbers<[1], [0], [0], [1], [0, 0, 1, 1], [], []>} : vector<8x128xbf16>, vector<128x128xbf16>, vector<8x128xf32> -> vector<8x128xf32>
    %c3_63 = arith.constant 3 : index
    %c0_64 = arith.constant 0 : index
    %c0_65 = arith.constant 0 : index
    %130 = vector.load %arg4[%c3_63, %c0_64, %c0_65] : memref<5x1x128xf32, #tpu.memory_space<vmem>>, vector<1x1x128xf32>
    %131 = vector.shape_cast %130 : vector<1x1x128xf32> to vector<1x128xf32>
    %132 = vector.broadcast %131 : vector<1x128xf32> to vector<8x128xf32>
    %133 = arith.addf %129, %132 : vector<8x128xf32>
    %cst_66 = arith.constant dense<0.000000e+00> : vector<128xf32>
    %134 = vector.multi_reduction <add>, %133, %cst_66 [0] : vector<8x128xf32> to vector<128xf32>
    %135 = vector.shape_cast %134 : vector<128xf32> to vector<1x128xf32>
    %cst_67 = arith.constant 8.000000e+00 : f32
    %136 = vector.broadcast %cst_67 : f32 to vector<1x128xf32>
    %137 = arith.divf %135, %136 : vector<1x128xf32>
    %138 = arith.mulf %133, %133 : vector<8x128xf32>
    %cst_68 = arith.constant dense<0.000000e+00> : vector<128xf32>
    %139 = vector.multi_reduction <add>, %138, %cst_68 [0] : vector<8x128xf32> to vector<128xf32>
    %140 = vector.shape_cast %139 : vector<128xf32> to vector<1x128xf32>
    %cst_69 = arith.constant 8.000000e+00 : f32
    %141 = vector.broadcast %cst_69 : f32 to vector<1x128xf32>
    %142 = arith.divf %140, %141 : vector<1x128xf32>
    %143 = arith.mulf %137, %137 : vector<1x128xf32>
    %144 = arith.subf %142, %143 : vector<1x128xf32>
    %c3_70 = arith.constant 3 : index
    %c0_71 = arith.constant 0 : index
    %c0_72 = arith.constant 0 : index
    %145 = vector.load %arg5[%c3_70, %c0_71, %c0_72] : memref<5x1x128xf32, #tpu.memory_space<vmem>>, vector<1x1x128xf32>
    %146 = vector.shape_cast %145 : vector<1x1x128xf32> to vector<1x128xf32>
    %147 = vector.broadcast %137 : vector<1x128xf32> to vector<8x128xf32>
    %148 = arith.subf %133, %147 : vector<8x128xf32>
    %149 = vector.broadcast %146 : vector<1x128xf32> to vector<8x128xf32>
    %150 = arith.mulf %149, %148 : vector<8x128xf32>
    %cst_73 = arith.constant 9.99999974E-6 : f32
    %151 = vector.broadcast %cst_73 : f32 to vector<1x128xf32>
    %152 = arith.addf %144, %151 : vector<1x128xf32>
    %153 = math.rsqrt %152 : vector<1x128xf32>
    %154 = vector.broadcast %153 : vector<1x128xf32> to vector<8x128xf32>
    %155 = arith.mulf %150, %154 : vector<8x128xf32>
    %c3_74 = arith.constant 3 : index
    %c0_75 = arith.constant 0 : index
    %c0_76 = arith.constant 0 : index
    %156 = vector.load %arg6[%c3_74, %c0_75, %c0_76] : memref<5x1x128xf32, #tpu.memory_space<vmem>>, vector<1x1x128xf32>
    %157 = vector.shape_cast %156 : vector<1x1x128xf32> to vector<1x128xf32>
    %158 = vector.broadcast %157 : vector<1x128xf32> to vector<8x128xf32>
    %159 = arith.addf %155, %158 : vector<8x128xf32>
    %160 = arith.negf %159 : vector<8x128xf32>
    %161 = math.exp %160 : vector<8x128xf32>
    %cst_77 = arith.constant 1.000000e+00 : f32
    %162 = vector.broadcast %cst_77 : f32 to vector<8x128xf32>
    %163 = arith.addf %162, %161 : vector<8x128xf32>
    %164 = arith.divf %162, %163 : vector<8x128xf32>
    %165 = arith.truncf %164 : vector<8x128xf32> to vector<8x128xbf16>
    %c4 = arith.constant 4 : index
    %c0_78 = arith.constant 0 : index
    %c0_79 = arith.constant 0 : index
    %166 = vector.load %arg3[%c4, %c0_78, %c0_79] : memref<5x128x128xbf16, #tpu.memory_space<vmem>>, vector<1x128x128xbf16>
    %167 = vector.shape_cast %166 : vector<1x128x128xbf16> to vector<128x128xbf16>
    %cst_80 = arith.constant dense<0.000000e+00> : vector<8x128xf32>
    %168 = tpu.matmul %165, %167, %cst_80 {dimension_numbers = #tpu.dot_dimension_numbers<[1], [0], [0], [1], [0, 0, 1, 1], [], []>} : vector<8x128xbf16>, vector<128x128xbf16>, vector<8x128xf32> -> vector<8x128xf32>
    %c4_81 = arith.constant 4 : index
    %c0_82 = arith.constant 0 : index
    %c0_83 = arith.constant 0 : index
    %169 = vector.load %arg4[%c4_81, %c0_82, %c0_83] : memref<5x1x128xf32, #tpu.memory_space<vmem>>, vector<1x1x128xf32>
    %170 = vector.shape_cast %169 : vector<1x1x128xf32> to vector<1x128xf32>
    %171 = vector.broadcast %170 : vector<1x128xf32> to vector<8x128xf32>
    %172 = arith.addf %168, %171 : vector<8x128xf32>
    %cst_84 = arith.constant dense<0.000000e+00> : vector<128xf32>
    %173 = vector.multi_reduction <add>, %172, %cst_84 [0] : vector<8x128xf32> to vector<128xf32>
    %174 = vector.shape_cast %173 : vector<128xf32> to vector<1x128xf32>
    %cst_85 = arith.constant 8.000000e+00 : f32
    %175 = vector.broadcast %cst_85 : f32 to vector<1x128xf32>
    %176 = arith.divf %174, %175 : vector<1x128xf32>
    %177 = arith.mulf %172, %172 : vector<8x128xf32>
    %cst_86 = arith.constant dense<0.000000e+00> : vector<128xf32>
    %178 = vector.multi_reduction <add>, %177, %cst_86 [0] : vector<8x128xf32> to vector<128xf32>
    %179 = vector.shape_cast %178 : vector<128xf32> to vector<1x128xf32>
    %cst_87 = arith.constant 8.000000e+00 : f32
    %180 = vector.broadcast %cst_87 : f32 to vector<1x128xf32>
    %181 = arith.divf %179, %180 : vector<1x128xf32>
    %182 = arith.mulf %176, %176 : vector<1x128xf32>
    %183 = arith.subf %181, %182 : vector<1x128xf32>
    %c4_88 = arith.constant 4 : index
    %c0_89 = arith.constant 0 : index
    %c0_90 = arith.constant 0 : index
    %184 = vector.load %arg5[%c4_88, %c0_89, %c0_90] : memref<5x1x128xf32, #tpu.memory_space<vmem>>, vector<1x1x128xf32>
    %185 = vector.shape_cast %184 : vector<1x1x128xf32> to vector<1x128xf32>
    %186 = vector.broadcast %176 : vector<1x128xf32> to vector<8x128xf32>
    %187 = arith.subf %172, %186 : vector<8x128xf32>
    %188 = vector.broadcast %185 : vector<1x128xf32> to vector<8x128xf32>
    %189 = arith.mulf %188, %187 : vector<8x128xf32>
    %cst_91 = arith.constant 9.99999974E-6 : f32
    %190 = vector.broadcast %cst_91 : f32 to vector<1x128xf32>
    %191 = arith.addf %183, %190 : vector<1x128xf32>
    %192 = math.rsqrt %191 : vector<1x128xf32>
    %193 = vector.broadcast %192 : vector<1x128xf32> to vector<8x128xf32>
    %194 = arith.mulf %189, %193 : vector<8x128xf32>
    %c4_92 = arith.constant 4 : index
    %c0_93 = arith.constant 0 : index
    %c0_94 = arith.constant 0 : index
    %195 = vector.load %arg6[%c4_92, %c0_93, %c0_94] : memref<5x1x128xf32, #tpu.memory_space<vmem>>, vector<1x1x128xf32>
    %196 = vector.shape_cast %195 : vector<1x1x128xf32> to vector<1x128xf32>
    %197 = vector.broadcast %196 : vector<1x128xf32> to vector<8x128xf32>
    %198 = arith.addf %194, %197 : vector<8x128xf32>
    %199 = arith.negf %198 : vector<8x128xf32>
    %200 = math.exp %199 : vector<8x128xf32>
    %cst_95 = arith.constant 1.000000e+00 : f32
    %201 = vector.broadcast %cst_95 : f32 to vector<8x128xf32>
    %202 = arith.addf %201, %200 : vector<8x128xf32>
    %203 = arith.divf %201, %202 : vector<8x128xf32>
    %204 = arith.truncf %203 : vector<8x128xf32> to vector<8x128xbf16>
    %c0_96 = arith.constant 0 : index
    %c0_97 = arith.constant 0 : index
    %205 = vector.load %arg7[%c0_96, %c0_97] : memref<128x1024xbf16, #tpu.memory_space<vmem>>, vector<128x1024xbf16>
    %cst_98 = arith.constant dense<0.000000e+00> : vector<8x1024xf32>
    %206 = tpu.matmul %204, %205, %cst_98 {dimension_numbers = #tpu.dot_dimension_numbers<[1], [0], [0], [1], [0, 0, 1, 1], [], []>} : vector<8x128xbf16>, vector<128x1024xbf16>, vector<8x1024xf32> -> vector<8x1024xf32>
    %c0_99 = arith.constant 0 : index
    %c0_100 = arith.constant 0 : index
    %207 = vector.load %arg8[%c0_99, %c0_100] : memref<1x1024xf32, #tpu.memory_space<vmem>>, vector<1x1024xf32>
    %208 = vector.broadcast %207 : vector<1x1024xf32> to vector<8x1024xf32>
    %209 = arith.addf %206, %208 : vector<8x1024xf32>
    %210 = vector.extract_strided_slice %209 {offsets = [0, 0], sizes = [8, 512], strides = [1, 1]} : vector<8x1024xf32> to vector<8x512xf32>
    %211 = math.exp %210 : vector<8x512xf32>
    %212 = vector.extract_strided_slice %209 {offsets = [0, 512], sizes = [8, 512], strides = [1, 1]} : vector<8x1024xf32> to vector<8x512xf32>
    %213 = arith.mulf %211, %7 : vector<8x512xf32>
    %214 = arith.addf %213, %212 : vector<8x512xf32>
    %215 = arith.truncf %214 : vector<8x512xf32> to vector<8x512xbf16>
    %c0_101 = arith.constant 0 : index
    %c0_102 = arith.constant 0 : index
    %216 = vector.load %arg9[%c0_101, %c0_102] : memref<512x256xbf16, #tpu.memory_space<vmem>>, vector<512x256xbf16>
    %cst_103 = arith.constant dense<0.000000e+00> : vector<8x256xf32>
    %217 = tpu.matmul %215, %216, %cst_103 {dimension_numbers = #tpu.dot_dimension_numbers<[1], [0], [0], [1], [0, 0, 1, 1], [], []>} : vector<8x512xbf16>, vector<512x256xbf16>, vector<8x256xf32> -> vector<8x256xf32>
    %218 = arith.truncf %8 : vector<8x128xf32> to vector<8x128xbf16>
    %c0_104 = arith.constant 0 : index
    %c0_105 = arith.constant 0 : index
    %219 = vector.load %arg10[%c0_104, %c0_105] : memref<128x256xbf16, #tpu.memory_space<vmem>>, vector<128x256xbf16>
    %cst_106 = arith.constant dense<0.000000e+00> : vector<8x256xf32>
    %220 = tpu.matmul %218, %219, %cst_106 {dimension_numbers = #tpu.dot_dimension_numbers<[1], [0], [0], [1], [0, 0, 1, 1], [], []>} : vector<8x128xbf16>, vector<128x256xbf16>, vector<8x256xf32> -> vector<8x256xf32>
    %221 = arith.addf %217, %220 : vector<8x256xf32>
    %c0_107 = arith.constant 0 : index
    %c0_108 = arith.constant 0 : index
    %222 = vector.load %arg11[%c0_107, %c0_108] : memref<1x256xf32, #tpu.memory_space<vmem>>, vector<1x256xf32>
    %223 = vector.broadcast %222 : vector<1x256xf32> to vector<8x256xf32>
    %224 = arith.addf %221, %223 : vector<8x256xf32>
    %225 = vector.extract_strided_slice %224 {offsets = [0, 0], sizes = [8, 128], strides = [1, 1]} : vector<8x256xf32> to vector<8x128xf32>
    %226 = vector.extract_strided_slice %224 {offsets = [0, 128], sizes = [8, 128], strides = [1, 1]} : vector<8x256xf32> to vector<8x128xf32>
    %227 = arith.truncf %226 : vector<8x128xf32> to vector<8x128xbf16>
    %c0_109 = arith.constant 0 : index
    %c0_110 = arith.constant 0 : index
    %c0_111 = arith.constant 0 : index
    %228 = vector.load %arg12[%c0_109, %c0_110, %c0_111] : memref<5x128x128xbf16, #tpu.memory_space<vmem>>, vector<1x128x128xbf16>
    %229 = vector.shape_cast %228 : vector<1x128x128xbf16> to vector<128x128xbf16>
    %cst_112 = arith.constant dense<0.000000e+00> : vector<8x128xf32>
    %230 = tpu.matmul %227, %229, %cst_112 {dimension_numbers = #tpu.dot_dimension_numbers<[1], [0], [0], [1], [0, 0, 1, 1], [], []>} : vector<8x128xbf16>, vector<128x128xbf16>, vector<8x128xf32> -> vector<8x128xf32>
    %c0_113 = arith.constant 0 : index
    %c0_114 = arith.constant 0 : index
    %c0_115 = arith.constant 0 : index
    %231 = vector.load %arg13[%c0_113, %c0_114, %c0_115] : memref<5x1x128xf32, #tpu.memory_space<vmem>>, vector<1x1x128xf32>
    %232 = vector.shape_cast %231 : vector<1x1x128xf32> to vector<1x128xf32>
    %233 = vector.broadcast %232 : vector<1x128xf32> to vector<8x128xf32>
    %234 = arith.addf %230, %233 : vector<8x128xf32>
    %cst_116 = arith.constant dense<0.000000e+00> : vector<128xf32>
    %235 = vector.multi_reduction <add>, %234, %cst_116 [0] : vector<8x128xf32> to vector<128xf32>
    %236 = vector.shape_cast %235 : vector<128xf32> to vector<1x128xf32>
    %cst_117 = arith.constant 8.000000e+00 : f32
    %237 = vector.broadcast %cst_117 : f32 to vector<1x128xf32>
    %238 = arith.divf %236, %237 : vector<1x128xf32>
    %239 = arith.mulf %234, %234 : vector<8x128xf32>
    %cst_118 = arith.constant dense<0.000000e+00> : vector<128xf32>
    %240 = vector.multi_reduction <add>, %239, %cst_118 [0] : vector<8x128xf32> to vector<128xf32>
    %241 = vector.shape_cast %240 : vector<128xf32> to vector<1x128xf32>
    %cst_119 = arith.constant 8.000000e+00 : f32
    %242 = vector.broadcast %cst_119 : f32 to vector<1x128xf32>
    %243 = arith.divf %241, %242 : vector<1x128xf32>
    %244 = arith.mulf %238, %238 : vector<1x128xf32>
    %245 = arith.subf %243, %244 : vector<1x128xf32>
    %c0_120 = arith.constant 0 : index
    %c0_121 = arith.constant 0 : index
    %c0_122 = arith.constant 0 : index
    %246 = vector.load %arg14[%c0_120, %c0_121, %c0_122] : memref<5x1x128xf32, #tpu.memory_space<vmem>>, vector<1x1x128xf32>
    %247 = vector.shape_cast %246 : vector<1x1x128xf32> to vector<1x128xf32>
    %248 = vector.broadcast %238 : vector<1x128xf32> to vector<8x128xf32>
    %249 = arith.subf %234, %248 : vector<8x128xf32>
    %250 = vector.broadcast %247 : vector<1x128xf32> to vector<8x128xf32>
    %251 = arith.mulf %250, %249 : vector<8x128xf32>
    %cst_123 = arith.constant 9.99999974E-6 : f32
    %252 = vector.broadcast %cst_123 : f32 to vector<1x128xf32>
    %253 = arith.addf %245, %252 : vector<1x128xf32>
    %254 = math.rsqrt %253 : vector<1x128xf32>
    %255 = vector.broadcast %254 : vector<1x128xf32> to vector<8x128xf32>
    %256 = arith.mulf %251, %255 : vector<8x128xf32>
    %c0_124 = arith.constant 0 : index
    %c0_125 = arith.constant 0 : index
    %c0_126 = arith.constant 0 : index
    %257 = vector.load %arg15[%c0_124, %c0_125, %c0_126] : memref<5x1x128xf32, #tpu.memory_space<vmem>>, vector<1x1x128xf32>
    %258 = vector.shape_cast %257 : vector<1x1x128xf32> to vector<1x128xf32>
    %259 = vector.broadcast %258 : vector<1x128xf32> to vector<8x128xf32>
    %260 = arith.addf %256, %259 : vector<8x128xf32>
    %261 = arith.negf %260 : vector<8x128xf32>
    %262 = math.exp %261 : vector<8x128xf32>
    %cst_127 = arith.constant 1.000000e+00 : f32
    %263 = vector.broadcast %cst_127 : f32 to vector<8x128xf32>
    %264 = arith.addf %263, %262 : vector<8x128xf32>
    %265 = arith.divf %263, %264 : vector<8x128xf32>
    %266 = arith.truncf %265 : vector<8x128xf32> to vector<8x128xbf16>
    %c1_128 = arith.constant 1 : index
    %c0_129 = arith.constant 0 : index
    %c0_130 = arith.constant 0 : index
    %267 = vector.load %arg12[%c1_128, %c0_129, %c0_130] : memref<5x128x128xbf16, #tpu.memory_space<vmem>>, vector<1x128x128xbf16>
    %268 = vector.shape_cast %267 : vector<1x128x128xbf16> to vector<128x128xbf16>
    %cst_131 = arith.constant dense<0.000000e+00> : vector<8x128xf32>
    %269 = tpu.matmul %266, %268, %cst_131 {dimension_numbers = #tpu.dot_dimension_numbers<[1], [0], [0], [1], [0, 0, 1, 1], [], []>} : vector<8x128xbf16>, vector<128x128xbf16>, vector<8x128xf32> -> vector<8x128xf32>
    %c1_132 = arith.constant 1 : index
    %c0_133 = arith.constant 0 : index
    %c0_134 = arith.constant 0 : index
    %270 = vector.load %arg13[%c1_132, %c0_133, %c0_134] : memref<5x1x128xf32, #tpu.memory_space<vmem>>, vector<1x1x128xf32>
    %271 = vector.shape_cast %270 : vector<1x1x128xf32> to vector<1x128xf32>
    %272 = vector.broadcast %271 : vector<1x128xf32> to vector<8x128xf32>
    %273 = arith.addf %269, %272 : vector<8x128xf32>
    %cst_135 = arith.constant dense<0.000000e+00> : vector<128xf32>
    %274 = vector.multi_reduction <add>, %273, %cst_135 [0] : vector<8x128xf32> to vector<128xf32>
    %275 = vector.shape_cast %274 : vector<128xf32> to vector<1x128xf32>
    %cst_136 = arith.constant 8.000000e+00 : f32
    %276 = vector.broadcast %cst_136 : f32 to vector<1x128xf32>
    %277 = arith.divf %275, %276 : vector<1x128xf32>
    %278 = arith.mulf %273, %273 : vector<8x128xf32>
    %cst_137 = arith.constant dense<0.000000e+00> : vector<128xf32>
    %279 = vector.multi_reduction <add>, %278, %cst_137 [0] : vector<8x128xf32> to vector<128xf32>
    %280 = vector.shape_cast %279 : vector<128xf32> to vector<1x128xf32>
    %cst_138 = arith.constant 8.000000e+00 : f32
    %281 = vector.broadcast %cst_138 : f32 to vector<1x128xf32>
    %282 = arith.divf %280, %281 : vector<1x128xf32>
    %283 = arith.mulf %277, %277 : vector<1x128xf32>
    %284 = arith.subf %282, %283 : vector<1x128xf32>
    %c1_139 = arith.constant 1 : index
    %c0_140 = arith.constant 0 : index
    %c0_141 = arith.constant 0 : index
    %285 = vector.load %arg14[%c1_139, %c0_140, %c0_141] : memref<5x1x128xf32, #tpu.memory_space<vmem>>, vector<1x1x128xf32>
    %286 = vector.shape_cast %285 : vector<1x1x128xf32> to vector<1x128xf32>
    %287 = vector.broadcast %277 : vector<1x128xf32> to vector<8x128xf32>
    %288 = arith.subf %273, %287 : vector<8x128xf32>
    %289 = vector.broadcast %286 : vector<1x128xf32> to vector<8x128xf32>
    %290 = arith.mulf %289, %288 : vector<8x128xf32>
    %cst_142 = arith.constant 9.99999974E-6 : f32
    %291 = vector.broadcast %cst_142 : f32 to vector<1x128xf32>
    %292 = arith.addf %284, %291 : vector<1x128xf32>
    %293 = math.rsqrt %292 : vector<1x128xf32>
    %294 = vector.broadcast %293 : vector<1x128xf32> to vector<8x128xf32>
    %295 = arith.mulf %290, %294 : vector<8x128xf32>
    %c1_143 = arith.constant 1 : index
    %c0_144 = arith.constant 0 : index
    %c0_145 = arith.constant 0 : index
    %296 = vector.load %arg15[%c1_143, %c0_144, %c0_145] : memref<5x1x128xf32, #tpu.memory_space<vmem>>, vector<1x1x128xf32>
    %297 = vector.shape_cast %296 : vector<1x1x128xf32> to vector<1x128xf32>
    %298 = vector.broadcast %297 : vector<1x128xf32> to vector<8x128xf32>
    %299 = arith.addf %295, %298 : vector<8x128xf32>
    %300 = arith.negf %299 : vector<8x128xf32>
    %301 = math.exp %300 : vector<8x128xf32>
    %cst_146 = arith.constant 1.000000e+00 : f32
    %302 = vector.broadcast %cst_146 : f32 to vector<8x128xf32>
    %303 = arith.addf %302, %301 : vector<8x128xf32>
    %304 = arith.divf %302, %303 : vector<8x128xf32>
    %305 = arith.truncf %304 : vector<8x128xf32> to vector<8x128xbf16>
    %c2_147 = arith.constant 2 : index
    %c0_148 = arith.constant 0 : index
    %c0_149 = arith.constant 0 : index
    %306 = vector.load %arg12[%c2_147, %c0_148, %c0_149] : memref<5x128x128xbf16, #tpu.memory_space<vmem>>, vector<1x128x128xbf16>
    %307 = vector.shape_cast %306 : vector<1x128x128xbf16> to vector<128x128xbf16>
    %cst_150 = arith.constant dense<0.000000e+00> : vector<8x128xf32>
    %308 = tpu.matmul %305, %307, %cst_150 {dimension_numbers = #tpu.dot_dimension_numbers<[1], [0], [0], [1], [0, 0, 1, 1], [], []>} : vector<8x128xbf16>, vector<128x128xbf16>, vector<8x128xf32> -> vector<8x128xf32>
    %c2_151 = arith.constant 2 : index
    %c0_152 = arith.constant 0 : index
    %c0_153 = arith.constant 0 : index
    %309 = vector.load %arg13[%c2_151, %c0_152, %c0_153] : memref<5x1x128xf32, #tpu.memory_space<vmem>>, vector<1x1x128xf32>
    %310 = vector.shape_cast %309 : vector<1x1x128xf32> to vector<1x128xf32>
    %311 = vector.broadcast %310 : vector<1x128xf32> to vector<8x128xf32>
    %312 = arith.addf %308, %311 : vector<8x128xf32>
    %cst_154 = arith.constant dense<0.000000e+00> : vector<128xf32>
    %313 = vector.multi_reduction <add>, %312, %cst_154 [0] : vector<8x128xf32> to vector<128xf32>
    %314 = vector.shape_cast %313 : vector<128xf32> to vector<1x128xf32>
    %cst_155 = arith.constant 8.000000e+00 : f32
    %315 = vector.broadcast %cst_155 : f32 to vector<1x128xf32>
    %316 = arith.divf %314, %315 : vector<1x128xf32>
    %317 = arith.mulf %312, %312 : vector<8x128xf32>
    %cst_156 = arith.constant dense<0.000000e+00> : vector<128xf32>
    %318 = vector.multi_reduction <add>, %317, %cst_156 [0] : vector<8x128xf32> to vector<128xf32>
    %319 = vector.shape_cast %318 : vector<128xf32> to vector<1x128xf32>
    %cst_157 = arith.constant 8.000000e+00 : f32
    %320 = vector.broadcast %cst_157 : f32 to vector<1x128xf32>
    %321 = arith.divf %319, %320 : vector<1x128xf32>
    %322 = arith.mulf %316, %316 : vector<1x128xf32>
    %323 = arith.subf %321, %322 : vector<1x128xf32>
    %c2_158 = arith.constant 2 : index
    %c0_159 = arith.constant 0 : index
    %c0_160 = arith.constant 0 : index
    %324 = vector.load %arg14[%c2_158, %c0_159, %c0_160] : memref<5x1x128xf32, #tpu.memory_space<vmem>>, vector<1x1x128xf32>
    %325 = vector.shape_cast %324 : vector<1x1x128xf32> to vector<1x128xf32>
    %326 = vector.broadcast %316 : vector<1x128xf32> to vector<8x128xf32>
    %327 = arith.subf %312, %326 : vector<8x128xf32>
    %328 = vector.broadcast %325 : vector<1x128xf32> to vector<8x128xf32>
    %329 = arith.mulf %328, %327 : vector<8x128xf32>
    %cst_161 = arith.constant 9.99999974E-6 : f32
    %330 = vector.broadcast %cst_161 : f32 to vector<1x128xf32>
    %331 = arith.addf %323, %330 : vector<1x128xf32>
    %332 = math.rsqrt %331 : vector<1x128xf32>
    %333 = vector.broadcast %332 : vector<1x128xf32> to vector<8x128xf32>
    %334 = arith.mulf %329, %333 : vector<8x128xf32>
    %c2_162 = arith.constant 2 : index
    %c0_163 = arith.constant 0 : index
    %c0_164 = arith.constant 0 : index
    %335 = vector.load %arg15[%c2_162, %c0_163, %c0_164] : memref<5x1x128xf32, #tpu.memory_space<vmem>>, vector<1x1x128xf32>
    %336 = vector.shape_cast %335 : vector<1x1x128xf32> to vector<1x128xf32>
    %337 = vector.broadcast %336 : vector<1x128xf32> to vector<8x128xf32>
    %338 = arith.addf %334, %337 : vector<8x128xf32>
    %339 = arith.negf %338 : vector<8x128xf32>
    %340 = math.exp %339 : vector<8x128xf32>
    %cst_165 = arith.constant 1.000000e+00 : f32
    %341 = vector.broadcast %cst_165 : f32 to vector<8x128xf32>
    %342 = arith.addf %341, %340 : vector<8x128xf32>
    %343 = arith.divf %341, %342 : vector<8x128xf32>
    %344 = arith.truncf %343 : vector<8x128xf32> to vector<8x128xbf16>
    %c3_166 = arith.constant 3 : index
    %c0_167 = arith.constant 0 : index
    %c0_168 = arith.constant 0 : index
    %345 = vector.load %arg12[%c3_166, %c0_167, %c0_168] : memref<5x128x128xbf16, #tpu.memory_space<vmem>>, vector<1x128x128xbf16>
    %346 = vector.shape_cast %345 : vector<1x128x128xbf16> to vector<128x128xbf16>
    %cst_169 = arith.constant dense<0.000000e+00> : vector<8x128xf32>
    %347 = tpu.matmul %344, %346, %cst_169 {dimension_numbers = #tpu.dot_dimension_numbers<[1], [0], [0], [1], [0, 0, 1, 1], [], []>} : vector<8x128xbf16>, vector<128x128xbf16>, vector<8x128xf32> -> vector<8x128xf32>
    %c3_170 = arith.constant 3 : index
    %c0_171 = arith.constant 0 : index
    %c0_172 = arith.constant 0 : index
    %348 = vector.load %arg13[%c3_170, %c0_171, %c0_172] : memref<5x1x128xf32, #tpu.memory_space<vmem>>, vector<1x1x128xf32>
    %349 = vector.shape_cast %348 : vector<1x1x128xf32> to vector<1x128xf32>
    %350 = vector.broadcast %349 : vector<1x128xf32> to vector<8x128xf32>
    %351 = arith.addf %347, %350 : vector<8x128xf32>
    %cst_173 = arith.constant dense<0.000000e+00> : vector<128xf32>
    %352 = vector.multi_reduction <add>, %351, %cst_173 [0] : vector<8x128xf32> to vector<128xf32>
    %353 = vector.shape_cast %352 : vector<128xf32> to vector<1x128xf32>
    %cst_174 = arith.constant 8.000000e+00 : f32
    %354 = vector.broadcast %cst_174 : f32 to vector<1x128xf32>
    %355 = arith.divf %353, %354 : vector<1x128xf32>
    %356 = arith.mulf %351, %351 : vector<8x128xf32>
    %cst_175 = arith.constant dense<0.000000e+00> : vector<128xf32>
    %357 = vector.multi_reduction <add>, %356, %cst_175 [0] : vector<8x128xf32> to vector<128xf32>
    %358 = vector.shape_cast %357 : vector<128xf32> to vector<1x128xf32>
    %cst_176 = arith.constant 8.000000e+00 : f32
    %359 = vector.broadcast %cst_176 : f32 to vector<1x128xf32>
    %360 = arith.divf %358, %359 : vector<1x128xf32>
    %361 = arith.mulf %355, %355 : vector<1x128xf32>
    %362 = arith.subf %360, %361 : vector<1x128xf32>
    %c3_177 = arith.constant 3 : index
    %c0_178 = arith.constant 0 : index
    %c0_179 = arith.constant 0 : index
    %363 = vector.load %arg14[%c3_177, %c0_178, %c0_179] : memref<5x1x128xf32, #tpu.memory_space<vmem>>, vector<1x1x128xf32>
    %364 = vector.shape_cast %363 : vector<1x1x128xf32> to vector<1x128xf32>
    %365 = vector.broadcast %355 : vector<1x128xf32> to vector<8x128xf32>
    %366 = arith.subf %351, %365 : vector<8x128xf32>
    %367 = vector.broadcast %364 : vector<1x128xf32> to vector<8x128xf32>
    %368 = arith.mulf %367, %366 : vector<8x128xf32>
    %cst_180 = arith.constant 9.99999974E-6 : f32
    %369 = vector.broadcast %cst_180 : f32 to vector<1x128xf32>
    %370 = arith.addf %362, %369 : vector<1x128xf32>
    %371 = math.rsqrt %370 : vector<1x128xf32>
    %372 = vector.broadcast %371 : vector<1x128xf32> to vector<8x128xf32>
    %373 = arith.mulf %368, %372 : vector<8x128xf32>
    %c3_181 = arith.constant 3 : index
    %c0_182 = arith.constant 0 : index
    %c0_183 = arith.constant 0 : index
    %374 = vector.load %arg15[%c3_181, %c0_182, %c0_183] : memref<5x1x128xf32, #tpu.memory_space<vmem>>, vector<1x1x128xf32>
    %375 = vector.shape_cast %374 : vector<1x1x128xf32> to vector<1x128xf32>
    %376 = vector.broadcast %375 : vector<1x128xf32> to vector<8x128xf32>
    %377 = arith.addf %373, %376 : vector<8x128xf32>
    %378 = arith.negf %377 : vector<8x128xf32>
    %379 = math.exp %378 : vector<8x128xf32>
    %cst_184 = arith.constant 1.000000e+00 : f32
    %380 = vector.broadcast %cst_184 : f32 to vector<8x128xf32>
    %381 = arith.addf %380, %379 : vector<8x128xf32>
    %382 = arith.divf %380, %381 : vector<8x128xf32>
    %383 = arith.truncf %382 : vector<8x128xf32> to vector<8x128xbf16>
    %c4_185 = arith.constant 4 : index
    %c0_186 = arith.constant 0 : index
    %c0_187 = arith.constant 0 : index
    %384 = vector.load %arg12[%c4_185, %c0_186, %c0_187] : memref<5x128x128xbf16, #tpu.memory_space<vmem>>, vector<1x128x128xbf16>
    %385 = vector.shape_cast %384 : vector<1x128x128xbf16> to vector<128x128xbf16>
    %cst_188 = arith.constant dense<0.000000e+00> : vector<8x128xf32>
    %386 = tpu.matmul %383, %385, %cst_188 {dimension_numbers = #tpu.dot_dimension_numbers<[1], [0], [0], [1], [0, 0, 1, 1], [], []>} : vector<8x128xbf16>, vector<128x128xbf16>, vector<8x128xf32> -> vector<8x128xf32>
    %c4_189 = arith.constant 4 : index
    %c0_190 = arith.constant 0 : index
    %c0_191 = arith.constant 0 : index
    %387 = vector.load %arg13[%c4_189, %c0_190, %c0_191] : memref<5x1x128xf32, #tpu.memory_space<vmem>>, vector<1x1x128xf32>
    %388 = vector.shape_cast %387 : vector<1x1x128xf32> to vector<1x128xf32>
    %389 = vector.broadcast %388 : vector<1x128xf32> to vector<8x128xf32>
    %390 = arith.addf %386, %389 : vector<8x128xf32>
    %cst_192 = arith.constant dense<0.000000e+00> : vector<128xf32>
    %391 = vector.multi_reduction <add>, %390, %cst_192 [0] : vector<8x128xf32> to vector<128xf32>
    %392 = vector.shape_cast %391 : vector<128xf32> to vector<1x128xf32>
    %cst_193 = arith.constant 8.000000e+00 : f32
    %393 = vector.broadcast %cst_193 : f32 to vector<1x128xf32>
    %394 = arith.divf %392, %393 : vector<1x128xf32>
    %395 = arith.mulf %390, %390 : vector<8x128xf32>
    %cst_194 = arith.constant dense<0.000000e+00> : vector<128xf32>
    %396 = vector.multi_reduction <add>, %395, %cst_194 [0] : vector<8x128xf32> to vector<128xf32>
    %397 = vector.shape_cast %396 : vector<128xf32> to vector<1x128xf32>
    %cst_195 = arith.constant 8.000000e+00 : f32
    %398 = vector.broadcast %cst_195 : f32 to vector<1x128xf32>
    %399 = arith.divf %397, %398 : vector<1x128xf32>
    %400 = arith.mulf %394, %394 : vector<1x128xf32>
    %401 = arith.subf %399, %400 : vector<1x128xf32>
    %c4_196 = arith.constant 4 : index
    %c0_197 = arith.constant 0 : index
    %c0_198 = arith.constant 0 : index
    %402 = vector.load %arg14[%c4_196, %c0_197, %c0_198] : memref<5x1x128xf32, #tpu.memory_space<vmem>>, vector<1x1x128xf32>
    %403 = vector.shape_cast %402 : vector<1x1x128xf32> to vector<1x128xf32>
    %404 = vector.broadcast %394 : vector<1x128xf32> to vector<8x128xf32>
    %405 = arith.subf %390, %404 : vector<8x128xf32>
    %406 = vector.broadcast %403 : vector<1x128xf32> to vector<8x128xf32>
    %407 = arith.mulf %406, %405 : vector<8x128xf32>
    %cst_199 = arith.constant 9.99999974E-6 : f32
    %408 = vector.broadcast %cst_199 : f32 to vector<1x128xf32>
    %409 = arith.addf %401, %408 : vector<1x128xf32>
    %410 = math.rsqrt %409 : vector<1x128xf32>
    %411 = vector.broadcast %410 : vector<1x128xf32> to vector<8x128xf32>
    %412 = arith.mulf %407, %411 : vector<8x128xf32>
    %c4_200 = arith.constant 4 : index
    %c0_201 = arith.constant 0 : index
    %c0_202 = arith.constant 0 : index
    %413 = vector.load %arg15[%c4_200, %c0_201, %c0_202] : memref<5x1x128xf32, #tpu.memory_space<vmem>>, vector<1x1x128xf32>
    %414 = vector.shape_cast %413 : vector<1x1x128xf32> to vector<1x128xf32>
    %415 = vector.broadcast %414 : vector<1x128xf32> to vector<8x128xf32>
    %416 = arith.addf %412, %415 : vector<8x128xf32>
    %417 = arith.negf %416 : vector<8x128xf32>
    %418 = math.exp %417 : vector<8x128xf32>
    %cst_203 = arith.constant 1.000000e+00 : f32
    %419 = vector.broadcast %cst_203 : f32 to vector<8x128xf32>
    %420 = arith.addf %419, %418 : vector<8x128xf32>
    %421 = arith.divf %419, %420 : vector<8x128xf32>
    %422 = arith.truncf %421 : vector<8x128xf32> to vector<8x128xbf16>
    %c0_204 = arith.constant 0 : index
    %c0_205 = arith.constant 0 : index
    %423 = vector.load %arg16[%c0_204, %c0_205] : memref<128x256xbf16, #tpu.memory_space<vmem>>, vector<128x256xbf16>
    %cst_206 = arith.constant dense<0.000000e+00> : vector<8x256xf32>
    %424 = tpu.matmul %422, %423, %cst_206 {dimension_numbers = #tpu.dot_dimension_numbers<[1], [0], [0], [1], [0, 0, 1, 1], [], []>} : vector<8x128xbf16>, vector<128x256xbf16>, vector<8x256xf32> -> vector<8x256xf32>
    %c0_207 = arith.constant 0 : index
    %c0_208 = arith.constant 0 : index
    %425 = vector.load %arg17[%c0_207, %c0_208] : memref<1x256xf32, #tpu.memory_space<vmem>>, vector<1x256xf32>
    %426 = vector.broadcast %425 : vector<1x256xf32> to vector<8x256xf32>
    %427 = arith.addf %424, %426 : vector<8x256xf32>
    %428 = vector.extract_strided_slice %427 {offsets = [0, 0], sizes = [8, 128], strides = [1, 1]} : vector<8x256xf32> to vector<8x128xf32>
    %429 = math.exp %428 : vector<8x128xf32>
    %430 = vector.extract_strided_slice %427 {offsets = [0, 128], sizes = [8, 128], strides = [1, 1]} : vector<8x256xf32> to vector<8x128xf32>
    %431 = arith.mulf %429, %225 : vector<8x128xf32>
    %432 = arith.addf %431, %430 : vector<8x128xf32>
    %c0_209 = arith.constant 0 : index
    %c0_210 = arith.constant 0 : index
    %433 = vector.load %arg18[%c0_209, %c0_210] : memref<8x256xf32, #tpu.memory_space<vmem>>, vector<8x128xf32>
    tpu.vector_store %arg18[%c0_209, %c0_210], %432 {strides = array<i32>} : memref<8x256xf32, #tpu.memory_space<vmem>>, vector<8x128xf32>,
    %c0_211 = arith.constant 0 : index
    %c128 = arith.constant 128 : index
    %434 = vector.load %arg18[%c0_211, %c128] : memref<8x256xf32, #tpu.memory_space<vmem>>, vector<8x128xf32>
    tpu.vector_store %arg18[%c0_211, %c128], %226 {strides = array<i32>} : memref<8x256xf32, #tpu.memory_space<vmem>>, vector<8x128xf32>,
    return
  }
}

</mosaic_0001>

<llo_original>
// kernel: tpu_custom_call.1
$region0: #{tpu_custom_call.1}
  #allocation0 [shape = 'u32[]', space=smem, size = 0x4, offset = 0x4, fixed_abs, tag = 'smem constant byte address 0x4 - core index']
  #allocation1 [shape = 'u32[144,128]{1,0:T(1,128)}', space=vmem, size = 0x12000, scoped, tag = 'internal scratch']
  %s0 = inlined_call_operand.hbm [shape: f32[8,128], index: 0, kind: input, shape index: {}]
  %s1 = inlined_call_operand.hbm [shape: bf16[128,640], index: 1, kind: input, shape index: {}]
  %s2 = inlined_call_operand.vmem [shape: f32[1,640], index: 2, kind: input, shape index: {}]
  %s3 = inlined_call_operand.hbm [shape: bf16[5,128,128], index: 3, kind: input, shape index: {}]
  %s4 = inlined_call_operand.hbm [shape: f32[5,1,128], index: 4, kind: input, shape index: {}]
  %s5 = inlined_call_operand.vmem [shape: f32[5,1,128], index: 5, kind: input, shape index: {}]
  %s6 = inlined_call_operand.hbm [shape: f32[5,1,128], index: 6, kind: input, shape index: {}]
  %s7 = inlined_call_operand.hbm [shape: bf16[128,1024], index: 7, kind: input, shape index: {}]
  %s8 = inlined_call_operand.vmem [shape: f32[1,1024], index: 8, kind: input, shape index: {}]
  %s9 = inlined_call_operand.hbm [shape: bf16[512,256], index: 9, kind: input, shape index: {}]
  %s10 = inlined_call_operand.hbm [shape: bf16[128,256], index: 10, kind: input, shape index: {}]
  %s11 = inlined_call_operand.vmem [shape: f32[1,256], index: 11, kind: input, shape index: {}]
  %s12 = inlined_call_operand.hbm [shape: bf16[5,128,128], index: 12, kind: input, shape index: {}]
  %s13 = inlined_call_operand.vmem [shape: f32[5,1,128], index: 13, kind: input, shape index: {}]
  %s14 = inlined_call_operand.vmem [shape: f32[5,1,128], index: 14, kind: input, shape index: {}]
  %s15 = inlined_call_operand.vmem [shape: f32[5,1,128], index: 15, kind: input, shape index: {}]
  %s16 = inlined_call_operand.hbm [shape: bf16[128,256], index: 16, kind: input, shape index: {}]
  %s17 = inlined_call_operand.vmem [shape: f32[1,256], index: 17, kind: input, shape index: {}]
  %s18 = inlined_call_operand.hbm [shape: f32[8,256], index: 18, kind: output, shape index: {}]
  %s19 = sld [smem:[#allocation0]]
  $region122: #{tpu_custom_call.1} parent=0
    _
  %s21 = ssub.s32 1, %s19
  %s22 = scalar_select 0, %s21, %s19
  $region1: #{tpu_custom_call.1} parent=0
    #allocation2 [shape = 'u8[4096]{0}', space=vmem, size = 0x1000, scoped, tag = 'input window, operand 0, single buffered']
    #allocation3 [shape = 's32[1]{0}', space=sflag, size = 0x4, scoped, tag = 'scoped memory for tpu_custom_call.1']
    #allocation4 [shape = 's32[1]{0}', space=sflag, size = 0x4, scoped, tag = 'scoped memory for tpu_custom_call.1']
    #allocation5 [shape = 'u8[163840]{0}', space=vmem, size = 0x28000, scoped, tag = 'input window, operand 1, single buffered']
    #allocation6 [shape = 's32[1]{0}', space=sflag, size = 0x4, scoped, tag = 'scoped memory for tpu_custom_call.1']
    #allocation7 [shape = 'u8[163840]{0}', space=vmem, size = 0x28000, scoped, tag = 'input window, operand 3, single buffered']
    #allocation8 [shape = 'u8[2560]{0}', space=vmem, size = 0xc00, scoped, tag = 'input window, operand 4, single buffered']
    #allocation9 [shape = 's32[1]{0}', space=sflag, size = 0x4, scoped, tag = 'scoped memory for tpu_custom_call.1']
    #allocation10 [shape = 'u8[2560]{0}', space=vmem, size = 0xc00, scoped, tag = 'input window, operand 6, single buffered']
    #allocation11 [shape = 'u8[262144]{0}', space=vmem, size = 0x40000, scoped, tag = 'input window, operand 7, single buffered']
    #allocation12 [shape = 's32[1]{0}', space=sflag, size = 0x4, scoped, tag = 'scoped memory for tpu_custom_call.1']
    #allocation13 [shape = 'u8[262144]{0}', space=vmem, size = 0x40000, scoped, tag = 'input window, operand 9, single buffered']
    #allocation14 [shape = 'u8[65536]{0}', space=vmem, size = 0x10000, scoped, tag = 'input window, operand 10, single buffered']
    #allocation15 [shape = 's32[1]{0}', space=sflag, size = 0x4, scoped, tag = 'scoped memory for tpu_custom_call.1']
    #allocation16 [shape = 'u8[163840]{0}', space=vmem, size = 0x28000, scoped, tag = 'input window, operand 12, single buffered']
    #allocation17 [shape = 'u8[65536]{0}', space=vmem, size = 0x10000, scoped, tag = 'input window, operand 16, single buffered']
    #allocation18 [shape = 's32[1]{0}', space=sflag, size = 0x4, scoped, tag = 'scoped memory for tpu_custom_call.1']
    #allocation19 [shape = 'u8[8192]{0}', space=vmem, size = 0x2000, scoped, tag = 'output window, operand 0, single buffered']
    %23 = vsyncpa [#allocation3], 0
    %24 = vsyncpa [#allocation6], 0
    %25 = vsyncpa [#allocation9], 0
    %26 = vsyncpa [#allocation12], 0
    %27 = vsyncpa [#allocation15], 0
    %28 = vsyncpa [#allocation18], 0
    %29 = vsyncpa [#allocation4], 0
    // Predicated region
    $region2: #{tpu_custom_call.1} parent=1 // pred_check
      _
    $region3: #{tpu_custom_call.1} parent=1 // pred_check_branch
      %31 = sbr.rel (0) target = $region5
    $region4: #{tpu_custom_call.1} parent=1 // pred_region
      %s33 = ssub.s32 128, 128
      %34 = vsyncadd [#allocation3], %s33
      %s36 = sshll.u32 [#allocation2], 4
      %s37 = int_to_ptr.vmem [resolvable:$true] %s36
      %39 = dma.hbm_to_vmem [thread:$0]  %s0, 128, %s37, [#allocation3]
    $region5: #{tpu_custom_call.1} parent=1 // pred_fallthru
      _
    // Predicated region
    $region6: #{tpu_custom_call.1} parent=1 // pred_check
      _
    $region7: #{tpu_custom_call.1} parent=1 // pred_check_branch
      %41 = sbr.rel (0) target = $region9
    $region8: #{tpu_custom_call.1} parent=1 // pred_region
      %s43 = ssub.s32 5120, 5120
      %44 = vsyncadd [#allocation6], %s43
      %s45 = sshll.u32 [#allocation5], 4
      %s46 = int_to_ptr.vmem [resolvable:$true] %s45
      %51 = dma.hbm_to_vmem [thread:$0]  %s1, 5120, %s46, [#allocation6], 320, 320, 20
    $region9: #{tpu_custom_call.1} parent=1 // pred_fallthru
      _
    // Predicated region
    $region10: #{tpu_custom_call.1} parent=1 // pred_check
      _
    $region11: #{tpu_custom_call.1} parent=1 // pred_check_branch
      %53 = sbr.rel (0) target = $region13
    $region12: #{tpu_custom_call.1} parent=1 // pred_region
      _
    $region13: #{tpu_custom_call.1} parent=1 // pred_fallthru
      _
    // Predicated region
    $region14: #{tpu_custom_call.1} parent=1 // pred_check
      _
    $region15: #{tpu_custom_call.1} parent=1 // pred_check_branch
      %55 = sbr.rel (0) target = $region17
    $region16: #{tpu_custom_call.1} parent=1 // pred_region
      %s57 = ssub.s32 5120, 5120
      %58 = vsyncadd [#allocation6], %s57
      %s59 = sshll.u32 [#allocation7], 4
      %s60 = int_to_ptr.vmem [resolvable:$true] %s59
      %65 = dma.hbm_to_vmem [thread:$0]  %s3, 5120, %s60, [#allocation6], 64, 64, 4
    $region17: #{tpu_custom_call.1} parent=1 // pred_fallthru
      _
    // Predicated region
    $region18: #{tpu_custom_call.1} parent=1 // pred_check
      _
    $region19: #{tpu_custom_call.1} parent=1 // pred_check_branch
      %67 = sbr.rel (0) target = $region21
    $region20: #{tpu_custom_call.1} parent=1 // pred_region
      %s69 = ssub.s32 80, 80
      %70 = vsyncadd [#allocation9], %s69
      %s71 = sshll.u32 [#allocation8], 4
      %s72 = int_to_ptr.vmem [resolvable:$true] %s71
      %77 = dma.hbm_to_vmem [thread:$0]  %s4, 80, %s72, [#allocation9], 16, 16, 1
    $region21: #{tpu_custom_call.1} parent=1 // pred_fallthru
      _
    // Predicated region
    $region22: #{tpu_custom_call.1} parent=1 // pred_check
      _
    $region23: #{tpu_custom_call.1} parent=1 // pred_check_branch
      %79 = sbr.rel (0) target = $region25
    $region24: #{tpu_custom_call.1} parent=1 // pred_region
      _
    $region25: #{tpu_custom_call.1} parent=1 // pred_fallthru
      _
    // Predicated region
    $region26: #{tpu_custom_call.1} parent=1 // pred_check
      _
    $region27: #{tpu_custom_call.1} parent=1 // pred_check_branch
      %81 = sbr.rel (0) target = $region29
    $region28: #{tpu_custom_call.1} parent=1 // pred_region
      %s83 = ssub.s32 80, 80
      %84 = vsyncadd [#allocation9], %s83
      %s85 = sshll.u32 [#allocation10], 4
      %s86 = int_to_ptr.vmem [resolvable:$true] %s85
      %91 = dma.hbm_to_vmem [thread:$0]  %s6, 80, %s86, [#allocation9], 16, 16, 1
    $region29: #{tpu_custom_call.1} parent=1 // pred_fallthru
      _
    // Predicated region
    $region30: #{tpu_custom_call.1} parent=1 // pred_check
      _
    $region31: #{tpu_custom_call.1} parent=1 // pred_check_branch
      %93 = sbr.rel (0) target = $region33
    $region32: #{tpu_custom_call.1} parent=1 // pred_region
      %s95 = ssub.s32 8192, 8192
      %96 = vsyncadd [#allocation12], %s95
      %s97 = sshll.u32 [#allocation11], 4
      %s98 = int_to_ptr.vmem [resolvable:$true] %s97
      %103 = dma.hbm_to_vmem [thread:$0]  %s7, 8192, %s98, [#allocation12], 512, 512, 32
    $region33: #{tpu_custom_call.1} parent=1 // pred_fallthru
      _
    // Predicated region
    $region34: #{tpu_custom_call.1} parent=1 // pred_check
      _
    $region35: #{tpu_custom_call.1} parent=1 // pred_check_branch
      %105 = sbr.rel (0) target = $region37
    $region36: #{tpu_custom_call.1} parent=1 // pred_region
      _
    $region37: #{tpu_custom_call.1} parent=1 // pred_fallthru
      _
    // Predicated region
    $region38: #{tpu_custom_call.1} parent=1 // pred_check
      _
    $region39: #{tpu_custom_call.1} parent=1 // pred_check_branch
      %107 = sbr.rel (0) target = $region41
    $region40: #{tpu_custom_call.1} parent=1 // pred_region
      %s109 = ssub.s32 8192, 8192
      %110 = vsyncadd [#allocation12], %s109
      %s111 = sshll.u32 [#allocation13], 4
      %s112 = int_to_ptr.vmem [resolvable:$true] %s111
      %117 = dma.hbm_to_vmem [thread:$0]  %s9, 8192, %s112, [#allocation12], 128, 128, 8
    $region41: #{tpu_custom_call.1} parent=1 // pred_fallthru
      _
    // Predicated region
    $region42: #{tpu_custom_call.1} parent=1 // pred_check
      _
    $region43: #{tpu_custom_call.1} parent=1 // pred_check_branch
      %119 = sbr.rel (0) target = $region45
    $region44: #{tpu_custom_call.1} parent=1 // pred_region
      %s121 = ssub.s32 2048, 2048
      %122 = vsyncadd [#allocation15], %s121
      %s123 = sshll.u32 [#allocation14], 4
      %s124 = int_to_ptr.vmem [resolvable:$true] %s123
      %129 = dma.hbm_to_vmem [thread:$0]  %s10, 2048, %s124, [#allocation15], 128, 128, 8
    $region45: #{tpu_custom_call.1} parent=1 // pred_fallthru
      _
    // Predicated region
    $region46: #{tpu_custom_call.1} parent=1 // pred_check
      _
    $region47: #{tpu_custom_call.1} parent=1 // pred_check_branch
      %131 = sbr.rel (0) target = $region49
    $region48: #{tpu_custom_call.1} parent=1 // pred_region
      _
    $region49: #{tpu_custom_call.1} parent=1 // pred_fallthru
      _
    // Predicated region
    $region50: #{tpu_custom_call.1} parent=1 // pred_check
      _
    $region51: #{tpu_custom_call.1} parent=1 // pred_check_branch
      %133 = sbr.rel (0) target = $region53
    $region52: #{tpu_custom_call.1} parent=1 // pred_region
      %s135 = ssub.s32 5120, 5120
      %136 = vsyncadd [#allocation15], %s135
      %s137 = sshll.u32 [#allocation16], 4
      %s138 = int_to_ptr.vmem [resolvable:$true] %s137
      %143 = dma.hbm_to_vmem [thread:$0]  %s12, 5120, %s138, [#allocation15], 64, 64, 4
    $region53: #{tpu_custom_call.1} parent=1 // pred_fallthru
      _
    // Predicated region
    $region54: #{tpu_custom_call.1} parent=1 // pred_check
      _
    $region55: #{tpu_custom_call.1} parent=1 // pred_check_branch
      %145 = sbr.rel (0) target = $region57
    $region56: #{tpu_custom_call.1} parent=1 // pred_region
      _
    $region57: #{tpu_custom_call.1} parent=1 // pred_fallthru
      _
    // Predicated region
    $region58: #{tpu_custom_call.1} parent=1 // pred_check
      _
    $region59: #{tpu_custom_call.1} parent=1 // pred_check_branch
      %147 = sbr.rel (0) target = $region61
    $region60: #{tpu_custom_call.1} parent=1 // pred_region
      _
    $region61: #{tpu_custom_call.1} parent=1 // pred_fallthru
      _
    // Predicated region
    $region62: #{tpu_custom_call.1} parent=1 // pred_check
      _
    $region63: #{tpu_custom_call.1} parent=1 // pred_check_branch
      %149 = sbr.rel (0) target = $region65
    $region64: #{tpu_custom_call.1} parent=1 // pred_region
      _
    $region65: #{tpu_custom_call.1} parent=1 // pred_fallthru
      _
    // Predicated region
    $region66: #{tpu_custom_call.1} parent=1 // pred_check
      _
    $region67: #{tpu_custom_call.1} parent=1 // pred_check_branch
      %151 = sbr.rel (0) target = $region69
    $region68: #{tpu_custom_call.1} parent=1 // pred_region
      %s153 = ssub.s32 2048, 2048
      %154 = vsyncadd [#allocation18], %s153
      %s155 = sshll.u32 [#allocation17], 4
      %s156 = int_to_ptr.vmem [resolvable:$true] %s155
      %161 = dma.hbm_to_vmem [thread:$0]  %s16, 2048, %s156, [#allocation18], 128, 128, 8
    $region69: #{tpu_custom_call.1} parent=1 // pred_fallthru
      _
    // Predicated region
    $region70: #{tpu_custom_call.1} parent=1 // pred_check
      _
    $region71: #{tpu_custom_call.1} parent=1 // pred_check_branch
      %163 = sbr.rel (0) target = $region73
    $region72: #{tpu_custom_call.1} parent=1 // pred_region
      _
    $region73: #{tpu_custom_call.1} parent=1 // pred_fallthru
      _
    // Predicated region
    $region74: #{tpu_custom_call.1} parent=1 // pred_check
      _
    $region75: #{tpu_custom_call.1} parent=1 // pred_check_branch
      %165 = sbr.rel (0) target = $region77
    $region76: #{tpu_custom_call.1} parent=1 // pred_region
      %166 = dma.done [#allocation3], 128
    $region77: #{tpu_custom_call.1} parent=1 // pred_fallthru
      _
    // Predicated region
    $region78: #{tpu_custom_call.1} parent=1 // pred_check
      _
    $region79: #{tpu_custom_call.1} parent=1 // pred_check_branch
      %168 = sbr.rel (0) target = $region81
    $region80: #{tpu_custom_call.1} parent=1 // pred_region
      %169 = dma.done [#allocation6], 5120
    $region81: #{tpu_custom_call.1} parent=1 // pred_fallthru
      _
    // Predicated region
    $region82: #{tpu_custom_call.1} parent=1 // pred_check
      _
    $region83: #{tpu_custom_call.1} parent=1 // pred_check_branch
      %171 = sbr.rel (0) target = $region85
    $region84: #{tpu_custom_call.1} parent=1 // pred_region
      %172 = dma.done [#allocation6], 5120
    $region85: #{tpu_custom_call.1} parent=1 // pred_fallthru
      _
    // Predicated region
    $region86: #{tpu_custom_call.1} parent=1 // pred_check
      _
    $region87: #{tpu_custom_call.1} parent=1 // pred_check_branch
      %174 = sbr.rel (0) target = $region89
    $region88: #{tpu_custom_call.1} parent=1 // pred_region
      %175 = dma.done [#allocation9], 80
    $region89: #{tpu_custom_call.1} parent=1 // pred_fallthru
      _
    // Predicated region
    $region90: #{tpu_custom_call.1} parent=1 // pred_check
      _
    $region91: #{tpu_custom_call.1} parent=1 // pred_check_branch
      %177 = sbr.rel (0) target = $region93
    $region92: #{tpu_custom_call.1} parent=1 // pred_region
      %178 = dma.done [#allocation9], 80
    $region93: #{tpu_custom_call.1} parent=1 // pred_fallthru
      _
    // Predicated region
    $region94: #{tpu_custom_call.1} parent=1 // pred_check
      _
    $region95: #{tpu_custom_call.1} parent=1 // pred_check_branch
      %180 = sbr.rel (0) target = $region97
    $region96: #{tpu_custom_call.1} parent=1 // pred_region
      %181 = dma.done [#allocation12], 8192
    $region97: #{tpu_custom_call.1} parent=1 // pred_fallthru
      _
    // Predicated region
    $region98: #{tpu_custom_call.1} parent=1 // pred_check
      _
    $region99: #{tpu_custom_call.1} parent=1 // pred_check_branch
      %183 = sbr.rel (0) target = $region101
    $region100: #{tpu_custom_call.1} parent=1 // pred_region
      %184 = dma.done [#allocation12], 8192
    $region101: #{tpu_custom_call.1} parent=1 // pred_fallthru
      _
    // Predicated region
    $region102: #{tpu_custom_call.1} parent=1 // pred_check
      _
    $region103: #{tpu_custom_call.1} parent=1 // pred_check_branch
      %186 = sbr.rel (0) target = $region105
    $region104: #{tpu_custom_call.1} parent=1 // pred_region
      %187 = dma.done [#allocation15], 2048
    $region105: #{tpu_custom_call.1} parent=1 // pred_fallthru
      _
    // Predicated region
    $region106: #{tpu_custom_call.1} parent=1 // pred_check
      _
    $region107: #{tpu_custom_call.1} parent=1 // pred_check_branch
      %189 = sbr.rel (0) target = $region109
    $region108: #{tpu_custom_call.1} parent=1 // pred_region
      %190 = dma.done [#allocation15], 5120
    $region109: #{tpu_custom_call.1} parent=1 // pred_fallthru
      _
    // Predicated region
    $region110: #{tpu_custom_call.1} parent=1 // pred_check
      _
    $region111: #{tpu_custom_call.1} parent=1 // pred_check_branch
      %192 = sbr.rel (0) target = $region113
    $region112: #{tpu_custom_call.1} parent=1 // pred_region
      %193 = dma.done [#allocation18], 2048
    $region113: #{tpu_custom_call.1} parent=1 // pred_fallthru
      _
    %v195 = vld [vmem:[#allocation2] sm:$0xff]
    %v196 = vpack.c.bf16 %v195, %v195
    %v197 = vld [vmem:[#allocation5] sm:$0xff]
    %v198 = vld [vmem:[#allocation5 + $0x8] sm:$0xff]
    %v199 = vld [vmem:[#allocation5 + $0x10] sm:$0xf]
    %v200 = vld [vmem:[#allocation5 + $0x14] sm:$0xff]
    %v201 = vld [vmem:[#allocation5 + $0x1c] sm:$0xff]
    %v202 = vld [vmem:[#allocation5 + $0x24] sm:$0xf]
    %v203 = vld [vmem:[#allocation5 + $0x28] sm:$0xff]
    %v204 = vld [vmem:[#allocation5 + $0x30] sm:$0xff]
    %v205 = vld [vmem:[#allocation5 + $0x38] sm:$0xf]
    %v206 = vld [vmem:[#allocation5 + $0x3c] sm:$0xff]
    %v207 = vld [vmem:[#allocation5 + $0x44] sm:$0xff]
    %v208 = vld [vmem:[#allocation5 + $0x4c] sm:$0xf]
    %v209 = vld [vmem:[#allocation5 + $0x50] sm:$0xff]
    %v210 = vld [vmem:[#allocation5 + $0x58] sm:$0xff]
    %v211 = vld [vmem:[#allocation5 + $0x60] sm:$0xf]
    %v212 = vld [vmem:[#allocation5 + $0x64] sm:$0xff]
    %v213 = vld [vmem:[#allocation5 + $0x6c] sm:$0xff]
    %v214 = vld [vmem:[#allocation5 + $0x74] sm:$0xf]
    %v215 = vld [vmem:[#allocation5 + $0x78] sm:$0xff]
    %v216 = vld [vmem:[#allocation5 + $0x80] sm:$0xff]
    %v217 = vld [vmem:[#allocation5 + $0x88] sm:$0xf]
    %v218 = vld [vmem:[#allocation5 + $0x8c] sm:$0xff]
    %v219 = vld [vmem:[#allocation5 + $0x94] sm:$0xff]
    %v220 = vld [vmem:[#allocation5 + $0x9c] sm:$0xf]
    %v221 = vld [vmem:[#allocation5 + $0xa0] sm:$0xff]
    %v222 = vld [vmem:[#allocation5 + $0xa8] sm:$0xff]
    %v223 = vld [vmem:[#allocation5 + $0xb0] sm:$0xf]
    %v224 = vld [vmem:[#allocation5 + $0xb4] sm:$0xff]
    %v225 = vld [vmem:[#allocation5 + $0xbc] sm:$0xff]
    %v226 = vld [vmem:[#allocation5 + $0xc4] sm:$0xf]
    %v227 = vld [vmem:[#allocation5 + $0xc8] sm:$0xff]
    %v228 = vld [vmem:[#allocation5 + $0xd0] sm:$0xff]
    %v229 = vld [vmem:[#allocation5 + $0xd8] sm:$0xf]
    %v230 = vld [vmem:[#allocation5 + $0xdc] sm:$0xff]
    %v231 = vld [vmem:[#allocation5 + $0xe4] sm:$0xff]
    %v232 = vld [vmem:[#allocation5 + $0xec] sm:$0xf]
    %v233 = vld [vmem:[#allocation5 + $0xf0] sm:$0xff]
    %v234 = vld [vmem:[#allocation5 + $0xf8] sm:$0xff]
    %v235 = vld [vmem:[#allocation5 + $0x100] sm:$0xf]
    %v236 = vld [vmem:[#allocation5 + $0x104] sm:$0xff]
    %v237 = vld [vmem:[#allocation5 + $0x10c] sm:$0xff]
    %v238 = vld [vmem:[#allocation5 + $0x114] sm:$0xf]
    %v239 = vld [vmem:[#allocation5 + $0x118] sm:$0xff]
    %v240 = vld [vmem:[#allocation5 + $0x120] sm:$0xff]
    %v241 = vld [vmem:[#allocation5 + $0x128] sm:$0xf]
    %v242 = vld [vmem:[#allocation5 + $0x12c] sm:$0xff]
    %v243 = vld [vmem:[#allocation5 + $0x134] sm:$0xff]
    %v244 = vld [vmem:[#allocation5 + $0x13c] sm:$0xf]
    %v245 = vld [vmem:[%s2] sm:$0x1f]
    %v247 = vlaneseq
    %v248 = vshrl.u32 %v247, 7
    %v249 = vsub.s32 0, %v248
    %v250 = vrot.slane %v245, %v249
    %v251 = vlaneseq
    %v252 = vshrl.u32 %v251, 7
    %v253 = vsub.s32 1, %v252
    %v254 = vrot.slane %v245, %v253
    %v255 = vlaneseq
    %v256 = vshrl.u32 %v255, 7
    %v257 = vsub.s32 2, %v256
    %v258 = vrot.slane %v245, %v257
    %v259 = vlaneseq
    %v260 = vshrl.u32 %v259, 7
    %v261 = vsub.s32 3, %v260
    %v262 = vrot.slane %v245, %v261
    %v263 = vlaneseq
    %v264 = vshrl.u32 %v263, 7
    %v265 = vsub.s32 4, %v264
    %v266 = vrot.slane %v245, %v265
    %v320 = vunpack.c.l.b16 %v197
    %v321 = vunpack.c.h.b16 %v197
    %v322 = vunpack.c.l.b16 %v198
    %v323 = vunpack.c.h.b16 %v198
    %v324 = vunpack.c.l.b16 %v199
    %v325 = vunpack.c.l.b16 %v200
    %v326 = vunpack.c.h.b16 %v200
    %v327 = vunpack.c.l.b16 %v201
    %v328 = vunpack.c.h.b16 %v201
    %v329 = vunpack.c.l.b16 %v202
    %v330 = vunpack.c.l.b16 %v203
    %v331 = vunpack.c.h.b16 %v203
    %v332 = vunpack.c.l.b16 %v204
    %v333 = vunpack.c.h.b16 %v204
    %v334 = vunpack.c.l.b16 %v205
    %v335 = vunpack.c.l.b16 %v206
    %v336 = vunpack.c.h.b16 %v206
    %v337 = vunpack.c.l.b16 %v207
    %v338 = vunpack.c.h.b16 %v207
    %v339 = vunpack.c.l.b16 %v208
    %v340 = vunpack.c.l.b16 %v209
    %v341 = vunpack.c.h.b16 %v209
    %v342 = vunpack.c.l.b16 %v210
    %v343 = vunpack.c.h.b16 %v210
    %v344 = vunpack.c.l.b16 %v211
    %v345 = vunpack.c.l.b16 %v212
    %v346 = vunpack.c.h.b16 %v212
    %v347 = vunpack.c.l.b16 %v213
    %v348 = vunpack.c.h.b16 %v213
    %v349 = vunpack.c.l.b16 %v214
    %v350 = vunpack.c.l.b16 %v215
    %v351 = vunpack.c.h.b16 %v215
    %v352 = vunpack.c.l.b16 %v216
    %v353 = vunpack.c.h.b16 %v216
    %v354 = vunpack.c.l.b16 %v217
    %v355 = vunpack.c.l.b16 %v218
    %v356 = vunpack.c.h.b16 %v218
    %v357 = vunpack.c.l.b16 %v219
    %v358 = vunpack.c.h.b16 %v219
    %v359 = vunpack.c.l.b16 %v220
    %v360 = vunpack.c.l.b16 %v221
    %v361 = vunpack.c.h.b16 %v221
    %v362 = vunpack.c.l.b16 %v222
    %v363 = vunpack.c.h.b16 %v222
    %v364 = vunpack.c.l.b16 %v223
    %v365 = vunpack.c.l.b16 %v224
    %v366 = vunpack.c.h.b16 %v224
    %v367 = vunpack.c.l.b16 %v225
    %v368 = vunpack.c.h.b16 %v225
    %v369 = vunpack.c.l.b16 %v226
    %v370 = vunpack.c.l.b16 %v227
    %v371 = vunpack.c.h.b16 %v227
    %v372 = vunpack.c.l.b16 %v228
    %v373 = vunpack.c.h.b16 %v228
    %v374 = vunpack.c.l.b16 %v229
    %v375 = vunpack.c.l.b16 %v230
    %v376 = vunpack.c.h.b16 %v230
    %v377 = vunpack.c.l.b16 %v231
    %v378 = vunpack.c.h.b16 %v231
    %v379 = vunpack.c.l.b16 %v232
    %v380 = vunpack.c.l.b16 %v233
    %v381 = vunpack.c.h.b16 %v233
    %v382 = vunpack.c.l.b16 %v234
    %v383 = vunpack.c.h.b16 %v234
    %v384 = vunpack.c.l.b16 %v235
    %v385 = vunpack.c.l.b16 %v236
    %v386 = vunpack.c.h.b16 %v236
    %v387 = vunpack.c.l.b16 %v237
    %v388 = vunpack.c.h.b16 %v237
    %v389 = vunpack.c.l.b16 %v238
    %v390 = vunpack.c.l.b16 %v239
    %v391 = vunpack.c.h.b16 %v239
    %v392 = vunpack.c.l.b16 %v240
    %v393 = vunpack.c.h.b16 %v240
    %v394 = vunpack.c.l.b16 %v241
    %v395 = vunpack.c.l.b16 %v242
    %v396 = vunpack.c.h.b16 %v242
    %v397 = vunpack.c.l.b16 %v243
    %v398 = vunpack.c.h.b16 %v243
    %v399 = vunpack.c.l.b16 %v244
    %v400 = vpack.c.b16 %v325, %v320
    %v401 = vpack.c.b16 %v326, %v321
    %v402 = vpack.c.b16 %v327, %v322
    %v403 = vpack.c.b16 %v328, %v323
    %v404 = vpack.c.b16 %v329, %v324
    %v405 = vpack.c.b16 %v335, %v330
    %v406 = vpack.c.b16 %v336, %v331
    %v407 = vpack.c.b16 %v337, %v332
    %v408 = vpack.c.b16 %v338, %v333
    %v409 = vpack.c.b16 %v339, %v334
    %v410 = vpack.c.b16 %v345, %v340
    %v411 = vpack.c.b16 %v346, %v341
    %v412 = vpack.c.b16 %v347, %v342
    %v413 = vpack.c.b16 %v348, %v343
    %v414 = vpack.c.b16 %v349, %v344
    %v415 = vpack.c.b16 %v355, %v350
    %v416 = vpack.c.b16 %v356, %v351
    %v417 = vpack.c.b16 %v357, %v352
    %v418 = vpack.c.b16 %v358, %v353
    %v419 = vpack.c.b16 %v359, %v354
    %v420 = vpack.c.b16 %v365, %v360
    %v421 = vpack.c.b16 %v366, %v361
    %v422 = vpack.c.b16 %v367, %v362
    %v423 = vpack.c.b16 %v368, %v363
    %v424 = vpack.c.b16 %v369, %v364
    %v425 = vpack.c.b16 %v375, %v370
    %v426 = vpack.c.b16 %v376, %v371
    %v427 = vpack.c.b16 %v377, %v372
    %v428 = vpack.c.b16 %v378, %v373
    %v429 = vpack.c.b16 %v379, %v374
    %v430 = vpack.c.b16 %v385, %v380
    %v431 = vpack.c.b16 %v386, %v381
    %v432 = vpack.c.b16 %v387, %v382
    %v433 = vpack.c.b16 %v388, %v383
    %v434 = vpack.c.b16 %v389, %v384
    %v435 = vpack.c.b16 %v395, %v390
    %v436 = vpack.c.b16 %v396, %v391
    %v437 = vpack.c.b16 %v397, %v392
    %v438 = vpack.c.b16 %v398, %v393
    %v439 = vpack.c.b16 %v399, %v394
    %480 = vmatprep.subr.bf16.mxu0 %v401
    %481 = vmatpush1.bf16.msra.mxu0 %v400
    %482 = vmatprep.subr.bf16.mxu0 %v406
    %483 = vmatpush1.bf16.msra.mxu0 %v405
    %484 = vmatprep.subr.bf16.mxu0 %v411
    %485 = vmatpush1.bf16.msra.mxu0 %v410
    %486 = vmatprep.subr.bf16.mxu0 %v416
    %487 = vmatpush1.bf16.msra.mxu0 %v415
    %488 = vmatprep.subr.bf16.mxu0 %v421
    %489 = vmatpush1.bf16.msra.mxu0 %v420
    %490 = vmatprep.subr.bf16.mxu0 %v426
    %491 = vmatpush1.bf16.msra.mxu0 %v425
    %492 = vmatprep.subr.bf16.mxu0 %v431
    %493 = vmatpush1.bf16.msra.mxu0 %v430
    %494 = vmatprep.subr.bf16.mxu0 %v436
    %495 = vmatpush1.bf16.msra.mxu0 %v435
    %496 = vmatprep.subr.bf16.mxu0 0
    %497 = vmatpush1.bf16.msra.mxu0 0
    %498 = vmatprep.subr.bf16.mxu0 0
    %499 = vmatpush1.bf16.msra.mxu0 0
    %500 = vmatprep.subr.bf16.mxu0 0
    %501 = vmatpush1.bf16.msra.mxu0 0
    %502 = vmatprep.subr.bf16.mxu0 0
    %503 = vmatpush1.bf16.msra.mxu0 0
    %504 = vmatprep.subr.bf16.mxu0 0
    %505 = vmatpush1.bf16.msra.mxu0 0
    %506 = vmatprep.subr.bf16.mxu0 0
    %507 = vmatpush1.bf16.msra.mxu0 0
    %508 = vmatprep.subr.bf16.mxu0 0
    %509 = vmatpush1.bf16.msra.mxu0 0
    %510 = vmatprep.subr.bf16.mxu0 0
    %511 = vmatpush1.bf16.msra.mxu0 0
    %512 = vmatprep.mubr.bf16.mxu0 0
    %513 = vmatmul.mubr.bf16.gmra.mrb[0].mxu0 %v196
    %v514 = vpop.f32.mrb[0].mxu0
    %v515 = vadd.f32 %v250, %v514
    %v516 = vpop.f32.mrb[0].mxu0
    %v517 = vadd.f32 %v254, %v516
    %v518 = vpop.f32.mrb[0].mxu0
    %v519 = vpop.f32.mrb[0].mxu0
    %520 = vdwg.mxu0
    %521 = vmatprep.subr.bf16.mxu0 %v403
    %522 = vmatpush1.bf16.msra.mxu0 %v402
    %523 = vmatprep.subr.bf16.mxu0 %v408
    %524 = vmatpush1.bf16.msra.mxu0 %v407
    %525 = vmatprep.subr.bf16.mxu0 %v413
    %526 = vmatpush1.bf16.msra.mxu0 %v412
    %527 = vmatprep.subr.bf16.mxu0 %v418
    %528 = vmatpush1.bf16.msra.mxu0 %v417
    %529 = vmatprep.subr.bf16.mxu0 %v423
    %530 = vmatpush1.bf16.msra.mxu0 %v422
    %531 = vmatprep.subr.bf16.mxu0 %v428
    %532 = vmatpush1.bf16.msra.mxu0 %v427
    %533 = vmatprep.subr.bf16.mxu0 %v433
    %534 = vmatpush1.bf16.msra.mxu0 %v432
    %535 = vmatprep.subr.bf16.mxu0 %v438
    %536 = vmatpush1.bf16.msra.mxu0 %v437
    %537 = vmatprep.subr.bf16.mxu0 0
    %538 = vmatpush1.bf16.msra.mxu0 0
    %539 = vmatprep.subr.bf16.mxu0 0
    %540 = vmatpush1.bf16.msra.mxu0 0
    %541 = vmatprep.subr.bf16.mxu0 0
    %542 = vmatpush1.bf16.msra.mxu0 0
    %543 = vmatprep.subr.bf16.mxu0 0
    %544 = vmatpush1.bf16.msra.mxu0 0
    %545 = vmatprep.subr.bf16.mxu0 0
    %546 = vmatpush1.bf16.msra.mxu0 0
    %547 = vmatprep.subr.bf16.mxu0 0
    %548 = vmatpush1.bf16.msra.mxu0 0
    %549 = vmatprep.subr.bf16.mxu0 0
    %550 = vmatpush1.bf16.msra.mxu0 0
    %551 = vmatprep.subr.bf16.mxu0 0
    %552 = vmatpush1.bf16.msra.mxu0 0
    %553 = vmatprep.mubr.bf16.mxu0 0
    %554 = vmatmul.mubr.bf16.gmra.mrb[0].mxu0 %v196
    %v555 = vpop.f32.mrb[0].mxu0
    %v556 = vadd.f32 %v258, %v555
    %v557 = vpop.f32.mrb[0].mxu0
    %v558 = vadd.f32 %v262, %v557
    %v559 = vpop.f32.mrb[0].mxu0
    %v560 = vpop.f32.mrb[0].mxu0
    %561 = vdwg.mxu0
    %562 = vmatprep.subr.bf16.mxu0 0
    %563 = vmatpush1.bf16.msra.mxu0 %v404
    %564 = vmatprep.subr.bf16.mxu0 0
    %565 = vmatpush1.bf16.msra.mxu0 %v409
    %566 = vmatprep.subr.bf16.mxu0 0
    %567 = vmatpush1.bf16.msra.mxu0 %v414
    %568 = vmatprep.subr.bf16.mxu0 0
    %569 = vmatpush1.bf16.msra.mxu0 %v419
    %570 = vmatprep.subr.bf16.mxu0 0
    %571 = vmatpush1.bf16.msra.mxu0 %v424
    %572 = vmatprep.subr.bf16.mxu0 0
    %573 = vmatpush1.bf16.msra.mxu0 %v429
    %574 = vmatprep.subr.bf16.mxu0 0
    %575 = vmatpush1.bf16.msra.mxu0 %v434
    %576 = vmatprep.subr.bf16.mxu0 0
    %577 = vmatpush1.bf16.msra.mxu0 %v439
    %578 = vmatprep.subr.bf16.mxu0 0
    %579 = vmatpush1.bf16.msra.mxu0 0
    %580 = vmatprep.subr.bf16.mxu0 0
    %581 = vmatpush1.bf16.msra.mxu0 0
    %582 = vmatprep.subr.bf16.mxu0 0
    %583 = vmatpush1.bf16.msra.mxu0 0
    %584 = vmatprep.subr.bf16.mxu0 0
    %585 = vmatpush1.bf16.msra.mxu0 0
    %586 = vmatprep.subr.bf16.mxu0 0
    %587 = vmatpush1.bf16.msra.mxu0 0
    %588 = vmatprep.subr.bf16.mxu0 0
    %589 = vmatpush1.bf16.msra.mxu0 0
    %590 = vmatprep.subr.bf16.mxu0 0
    %591 = vmatpush1.bf16.msra.mxu0 0
    %592 = vmatprep.subr.bf16.mxu0 0
    %593 = vmatpush1.bf16.msra.mxu0 0
    %594 = vmatprep.mubr.bf16.mxu0 0
    %595 = vmatmul.mubr.bf16.gmra.mrb[0].mxu0 %v196
    %v596 = vpop.f32.mrb[0].mxu0
    %v597 = vadd.f32 %v266, %v596
    %v598 = vpop.f32.mrb[0].mxu0
    %v599 = vpop.f32.mrb[0].mxu0
    %v600 = vpop.f32.mrb[0].mxu0
    %601 = vdwg.mxu0
    %v602 = vpack.c.bf16 %v597, %v597
    %v603 = vld [vmem:[#allocation7] sm:$0xf]
    %v604 = vld [vmem:[#allocation7 + $0x4] sm:$0xf]
    %v605 = vld [vmem:[#allocation7 + $0x8] sm:$0xf]
    %v606 = vld [vmem:[#allocation7 + $0xc] sm:$0xf]
    %v607 = vld [vmem:[#allocation7 + $0x10] sm:$0xf]
    %v608 = vld [vmem:[#allocation7 + $0x14] sm:$0xf]
    %v609 = vld [vmem:[#allocation7 + $0x18] sm:$0xf]
    %v610 = vld [vmem:[#allocation7 + $0x1c] sm:$0xf]
    %v611 = vld [vmem:[#allocation7 + $0x20] sm:$0xf]
    %v612 = vld [vmem:[#allocation7 + $0x24] sm:$0xf]
    %v613 = vld [vmem:[#allocation7 + $0x28] sm:$0xf]
    %v614 = vld [vmem:[#allocation7 + $0x2c] sm:$0xf]
    %v615 = vld [vmem:[#allocation7 + $0x30] sm:$0xf]
    %v616 = vld [vmem:[#allocation7 + $0x34] sm:$0xf]
    %v617 = vld [vmem:[#allocation7 + $0x38] sm:$0xf]
    %v618 = vld [vmem:[#allocation7 + $0x3c] sm:$0xf]
    %v619 = vld [vmem:[#allocation8] sm:$0x1]
    %v621 = vlaneseq
    %v622 = vshrl.u32 %v621, 7
    %v623 = vsub.s32 0, %v622
    %v624 = vrot.slane %v619, %v623
    %v642 = vunpack.c.l.b16 %v603
    %v643 = vunpack.c.l.b16 %v604
    %v644 = vunpack.c.l.b16 %v605
    %v645 = vunpack.c.l.b16 %v606
    %v646 = vunpack.c.l.b16 %v607
    %v647 = vunpack.c.l.b16 %v608
    %v648 = vunpack.c.l.b16 %v609
    %v649 = vunpack.c.l.b16 %v610
    %v650 = vunpack.c.l.b16 %v611
    %v651 = vunpack.c.l.b16 %v612
    %v652 = vunpack.c.l.b16 %v613
    %v653 = vunpack.c.l.b16 %v614
    %v654 = vunpack.c.l.b16 %v615
    %v655 = vunpack.c.l.b16 %v616
    %v656 = vunpack.c.l.b16 %v617
    %v657 = vunpack.c.l.b16 %v618
    %v658 = vpack.c.b16 %v643, %v642
    %v659 = vpack.c.b16 %v645, %v644
    %v660 = vpack.c.b16 %v647, %v646
    %v661 = vpack.c.b16 %v649, %v648
    %v662 = vpack.c.b16 %v651, %v650
    %v663 = vpack.c.b16 %v653, %v652
    %v664 = vpack.c.b16 %v655, %v654
    %v665 = vpack.c.b16 %v657, %v656
    %674 = vmatprep.subr.bf16.mxu0 0
    %675 = vmatpush1.bf16.msra.mxu0 %v658
    %676 = vmatprep.subr.bf16.mxu0 0
    %677 = vmatpush1.bf16.msra.mxu0 %v659
    %678 = vmatprep.subr.bf16.mxu0 0
    %679 = vmatpush1.bf16.msra.mxu0 %v660
    %680 = vmatprep.subr.bf16.mxu0 0
    %681 = vmatpush1.bf16.msra.mxu0 %v661
    %682 = vmatprep.subr.bf16.mxu0 0
    %683 = vmatpush1.bf16.msra.mxu0 %v662
    %684 = vmatprep.subr.bf16.mxu0 0
    %685 = vmatpush1.bf16.msra.mxu0 %v663
    %686 = vmatprep.subr.bf16.mxu0 0
    %687 = vmatpush1.bf16.msra.mxu0 %v664
    %688 = vmatprep.subr.bf16.mxu0 0
    %689 = vmatpush1.bf16.msra.mxu0 %v665
    %690 = vmatprep.subr.bf16.mxu0 0
    %691 = vmatpush1.bf16.msra.mxu0 0
    %692 = vmatprep.subr.bf16.mxu0 0
    %693 = vmatpush1.bf16.msra.mxu0 0
    %694 = vmatprep.subr.bf16.mxu0 0
    %695 = vmatpush1.bf16.msra.mxu0 0
    %696 = vmatprep.subr.bf16.mxu0 0
    %697 = vmatpush1.bf16.msra.mxu0 0
    %698 = vmatprep.subr.bf16.mxu0 0
    %699 = vmatpush1.bf16.msra.mxu0 0
    %700 = vmatprep.subr.bf16.mxu0 0
    %701 = vmatpush1.bf16.msra.mxu0 0
    %702 = vmatprep.subr.bf16.mxu0 0
    %703 = vmatpush1.bf16.msra.mxu0 0
    %704 = vmatprep.subr.bf16.mxu0 0
    %705 = vmatpush1.bf16.msra.mxu0 0
    %706 = vmatprep.mubr.bf16.mxu0 0
    %707 = vmatmul.mubr.bf16.gmra.mrb[0].mxu0 %v602
    %v708 = vpop.f32.mrb[0].mxu0
    %v709 = vadd.f32 %v624, %v708
    %v710 = vpop.f32.mrb[0].mxu0
    %v711 = vpop.f32.mrb[0].mxu0
    %v712 = vpop.f32.mrb[0].mxu0
    %713 = vdwg.mxu0
    %v714 = vrot.slane %v709, 4
    %v715 = vadd.f32 %v709, %v714
    %v716 = vrot.slane %v715, 2
    %v717 = vadd.f32 %v715, %v716
    %v718 = vrot.slane %v717, 1
    %v719 = vadd.f32 %v717, %v718
    %v720 = vrcp.pop 8.0
    %v721 = vmul.f32 %v719, %v720
    %v722 = vmul.f32 %v709, %v709
    %v723 = vrot.slane %v722, 4
    %v724 = vadd.f32 %v722, %v723
    %v725 = vrot.slane %v724, 2
    %v726 = vadd.f32 %v724, %v725
    %v727 = vrot.slane %v726, 1
    %v728 = vadd.f32 %v726, %v727
    %v729 = vmul.f32 %v728, %v720
    %v730 = vmul.f32 %v721, %v721
    %v731 = vsub.f32 %v729, %v730
    %v732 = vld [vmem:[%s5] sm:$0x1]
    %v733 = vsub.f32 %v709, %v721
    %v735 = vlaneseq
    %v736 = vshrl.u32 %v735, 7
    %v737 = vsub.s32 0, %v736
    %v738 = vrot.slane %v732, %v737
    %v740 = vmul.f32 %v738, %v733
    %v741 = vadd.f32 %v731, 1e-05
    %v742 = vrsqrt.pop %v741
    %v743 = vmul.f32 %v740, %v742
    %v744 = vld [vmem:[#allocation10] sm:$0x1]
    %v746 = vlaneseq
    %v747 = vshrl.u32 %v746, 7
    %v748 = vsub.s32 0, %v747
    %v749 = vrot.slane %v744, %v748
    %v751 = vadd.f32 %v743, %v749
    %v752 = vxor.u32 %v751, 2147483648
    %v753 = vmul.f32 %v752, 1.442695
    %v754 = vpow.pop %v753
    %v755 = vadd.f32 %v754, 1.0
    %v756 = vrcp.pop %v755
    %v757 = vmul.f32 1.0, %v756
    %v758 = vpack.c.bf16 %v757, %v757
    %s759 = scalar_lea.vmem [#allocation7], 64
    %v760 = vld [vmem:[%s759] sm:$0xf]
    %v761 = vld [vmem:[%s759 + $0x4] sm:$0xf]
    %v762 = vld [vmem:[%s759 + $0x8] sm:$0xf]
    %v763 = vld [vmem:[%s759 + $0xc] sm:$0xf]
    %v764 = vld [vmem:[%s759 + $0x10] sm:$0xf]
    %v765 = vld [vmem:[%s759 + $0x14] sm:$0xf]
    %v766 = vld [vmem:[%s759 + $0x18] sm:$0xf]
    %v767 = vld [vmem:[%s759 + $0x1c] sm:$0xf]
    %v768 = vld [vmem:[%s759 + $0x20] sm:$0xf]
    %v769 = vld [vmem:[%s759 + $0x24] sm:$0xf]
    %v770 = vld [vmem:[%s759 + $0x28] sm:$0xf]
    %v771 = vld [vmem:[%s759 + $0x2c] sm:$0xf]
    %v772 = vld [vmem:[%s759 + $0x30] sm:$0xf]
    %v773 = vld [vmem:[%s759 + $0x34] sm:$0xf]
    %v774 = vld [vmem:[%s759 + $0x38] sm:$0xf]
    %v775 = vld [vmem:[%s759 + $0x3c] sm:$0xf]
    %s776 = scalar_lea.vmem [#allocation8], 1
    %v777 = vld [vmem:[%s776] sm:$0x1]
    %v779 = vlaneseq
    %v780 = vshrl.u32 %v779, 7
    %v781 = vsub.s32 0, %v780
    %v782 = vrot.slane %v777, %v781
    %v800 = vunpack.c.l.b16 %v760
    %v801 = vunpack.c.l.b16 %v761
    %v802 = vunpack.c.l.b16 %v762
    %v803 = vunpack.c.l.b16 %v763
    %v804 = vunpack.c.l.b16 %v764
    %v805 = vunpack.c.l.b16 %v765
    %v806 = vunpack.c.l.b16 %v766
    %v807 = vunpack.c.l.b16 %v767
    %v808 = vunpack.c.l.b16 %v768
    %v809 = vunpack.c.l.b16 %v769
    %v810 = vunpack.c.l.b16 %v770
    %v811 = vunpack.c.l.b16 %v771
    %v812 = vunpack.c.l.b16 %v772
    %v813 = vunpack.c.l.b16 %v773
    %v814 = vunpack.c.l.b16 %v774
    %v815 = vunpack.c.l.b16 %v775
    %v816 = vpack.c.b16 %v801, %v800
    %v817 = vpack.c.b16 %v803, %v802
    %v818 = vpack.c.b16 %v805, %v804
    %v819 = vpack.c.b16 %v807, %v806
    %v820 = vpack.c.b16 %v809, %v808
    %v821 = vpack.c.b16 %v811, %v810
    %v822 = vpack.c.b16 %v813, %v812
    %v823 = vpack.c.b16 %v815, %v814
    %832 = vmatprep.subr.bf16.mxu0 0
    %833 = vmatpush1.bf16.msra.mxu0 %v816
    %834 = vmatprep.subr.bf16.mxu0 0
    %835 = vmatpush1.bf16.msra.mxu0 %v817
    %836 = vmatprep.subr.bf16.mxu0 0
    %837 = vmatpush1.bf16.msra.mxu0 %v818
    %838 = vmatprep.subr.bf16.mxu0 0
    %839 = vmatpush1.bf16.msra.mxu0 %v819
    %840 = vmatprep.subr.bf16.mxu0 0
    %841 = vmatpush1.bf16.msra.mxu0 %v820
    %842 = vmatprep.subr.bf16.mxu0 0
    %843 = vmatpush1.bf16.msra.mxu0 %v821
    %844 = vmatprep.subr.bf16.mxu0 0
    %845 = vmatpush1.bf16.msra.mxu0 %v822
    %846 = vmatprep.subr.bf16.mxu0 0
    %847 = vmatpush1.bf16.msra.mxu0 %v823
    %848 = vmatprep.subr.bf16.mxu0 0
    %849 = vmatpush1.bf16.msra.mxu0 0
    %850 = vmatprep.subr.bf16.mxu0 0
    %851 = vmatpush1.bf16.msra.mxu0 0
    %852 = vmatprep.subr.bf16.mxu0 0
    %853 = vmatpush1.bf16.msra.mxu0 0
    %854 = vmatprep.subr.bf16.mxu0 0
    %855 = vmatpush1.bf16.msra.mxu0 0
    %856 = vmatprep.subr.bf16.mxu0 0
    %857 = vmatpush1.bf16.msra.mxu0 0
    %858 = vmatprep.subr.bf16.mxu0 0
    %859 = vmatpush1.bf16.msra.mxu0 0
    %860 = vmatprep.subr.bf16.mxu0 0
    %861 = vmatpush1.bf16.msra.mxu0 0
    %862 = vmatprep.subr.bf16.mxu0 0
    %863 = vmatpush1.bf16.msra.mxu0 0
    %864 = vmatprep.mubr.bf16.mxu0 0
    %865 = vmatmul.mubr.bf16.gmra.mrb[0].mxu0 %v758
    %v866 = vpop.f32.mrb[0].mxu0
    %v867 = vadd.f32 %v782, %v866
    %v868 = vpop.f32.mrb[0].mxu0
    %v869 = vpop.f32.mrb[0].mxu0
    %v870 = vpop.f32.mrb[0].mxu0
    %871 = vdwg.mxu0
    %v872 = vrot.slane %v867, 4
    %v873 = vadd.f32 %v867, %v872
    %v874 = vrot.slane %v873, 2
    %v875 = vadd.f32 %v873, %v874
    %v876 = vrot.slane %v875, 1
    %v877 = vadd.f32 %v875, %v876
    %v878 = vmul.f32 %v877, %v720
    %v879 = vmul.f32 %v867, %v867
    %v880 = vrot.slane %v879, 4
    %v881 = vadd.f32 %v879, %v880
    %v882 = vrot.slane %v881, 2
    %v883 = vadd.f32 %v881, %v882
    %v884 = vrot.slane %v883, 1
    %v885 = vadd.f32 %v883, %v884
    %v886 = vmul.f32 %v885, %v720
    %v887 = vmul.f32 %v878, %v878
    %v888 = vsub.f32 %v886, %v887
    %s889 = scalar_lea.vmem %s5, 1
    %v890 = vld [vmem:[%s889] sm:$0x1]
    %v891 = vsub.f32 %v867, %v878
    %v893 = vlaneseq
    %v894 = vshrl.u32 %v893, 7
    %v895 = vsub.s32 0, %v894
    %v896 = vrot.slane %v890, %v895
    %v898 = vmul.f32 %v896, %v891
    %v899 = vadd.f32 %v888, 1e-05
    %v900 = vrsqrt.pop %v899
    %v901 = vmul.f32 %v898, %v900
    %s902 = scalar_lea.vmem [#allocation10], 1
    %v903 = vld [vmem:[%s902] sm:$0x1]
    %v905 = vlaneseq
    %v906 = vshrl.u32 %v905, 7
    %v907 = vsub.s32 0, %v906
    %v908 = vrot.slane %v903, %v907
    %v910 = vadd.f32 %v901, %v908
    %v911 = vxor.u32 %v910, 2147483648
    %v912 = vmul.f32 %v911, 1.442695
    %v913 = vpow.pop %v912
    %v914 = vadd.f32 %v913, 1.0
    %v915 = vrcp.pop %v914
    %v916 = vmul.f32 1.0, %v915
    %v917 = vpack.c.bf16 %v916, %v916
    %s918 = scalar_lea.vmem [#allocation7], 128
    %v919 = vld [vmem:[%s918] sm:$0xf]
    %v920 = vld [vmem:[%s918 + $0x4] sm:$0xf]
    %v921 = vld [vmem:[%s918 + $0x8] sm:$0xf]
    %v922 = vld [vmem:[%s918 + $0xc] sm:$0xf]
    %v923 = vld [vmem:[%s918 + $0x10] sm:$0xf]
    %v924 = vld [vmem:[%s918 + $0x14] sm:$0xf]
    %v925 = vld [vmem:[%s918 + $0x18] sm:$0xf]
    %v926 = vld [vmem:[%s918 + $0x1c] sm:$0xf]
    %v927 = vld [vmem:[%s918 + $0x20] sm:$0xf]
    %v928 = vld [vmem:[%s918 + $0x24] sm:$0xf]
    %v929 = vld [vmem:[%s918 + $0x28] sm:$0xf]
    %v930 = vld [vmem:[%s918 + $0x2c] sm:$0xf]
    %v931 = vld [vmem:[%s918 + $0x30] sm:$0xf]
    %v932 = vld [vmem:[%s918 + $0x34] sm:$0xf]
    %v933 = vld [vmem:[%s918 + $0x38] sm:$0xf]
    %v934 = vld [vmem:[%s918 + $0x3c] sm:$0xf]
    %s935 = scalar_lea.vmem [#allocation8], 2
    %v936 = vld [vmem:[%s935] sm:$0x1]
    %v938 = vlaneseq
    %v939 = vshrl.u32 %v938, 7
    %v940 = vsub.s32 0, %v939
    %v941 = vrot.slane %v936, %v940
    %v959 = vunpack.c.l.b16 %v919
    %v960 = vunpack.c.l.b16 %v920
    %v961 = vunpack.c.l.b16 %v921
    %v962 = vunpack.c.l.b16 %v922
    %v963 = vunpack.c.l.b16 %v923
    %v964 = vunpack.c.l.b16 %v924
    %v965 = vunpack.c.l.b16 %v925
    %v966 = vunpack.c.l.b16 %v926
    %v967 = vunpack.c.l.b16 %v927
    %v968 = vunpack.c.l.b16 %v928
    %v969 = vunpack.c.l.b16 %v929
    %v970 = vunpack.c.l.b16 %v930
    %v971 = vunpack.c.l.b16 %v931
    %v972 = vunpack.c.l.b16 %v932
    %v973 = vunpack.c.l.b16 %v933
    %v974 = vunpack.c.l.b16 %v934
    %v975 = vpack.c.b16 %v960, %v959
    %v976 = vpack.c.b16 %v962, %v961
    %v977 = vpack.c.b16 %v964, %v963
    %v978 = vpack.c.b16 %v966, %v965
    %v979 = vpack.c.b16 %v968, %v967
    %v980 = vpack.c.b16 %v970, %v969
    %v981 = vpack.c.b16 %v972, %v971
    %v982 = vpack.c.b16 %v974, %v973
    %991 = vmatprep.subr.bf16.mxu0 0
    %992 = vmatpush1.bf16.msra.mxu0 %v975
    %993 = vmatprep.subr.bf16.mxu0 0
    %994 = vmatpush1.bf16.msra.mxu0 %v976
    %995 = vmatprep.subr.bf16.mxu0 0
    %996 = vmatpush1.bf16.msra.mxu0 %v977
    %997 = vmatprep.subr.bf16.mxu0 0
    %998 = vmatpush1.bf16.msra.mxu0 %v978
    %999 = vmatprep.subr.bf16.mxu0 0
    %1000 = vmatpush1.bf16.msra.mxu0 %v979
    %1001 = vmatprep.subr.bf16.mxu0 0
    %1002 = vmatpush1.bf16.msra.mxu0 %v980
    %1003 = vmatprep.subr.bf16.mxu0 0
    %1004 = vmatpush1.bf16.msra.mxu0 %v981
    %1005 = vmatprep.subr.bf16.mxu0 0
    %1006 = vmatpush1.bf16.msra.mxu0 %v982
    %1007 = vmatprep.subr.bf16.mxu0 0
    %1008 = vmatpush1.bf16.msra.mxu0 0
    %1009 = vmatprep.subr.bf16.mxu0 0
    %1010 = vmatpush1.bf16.msra.mxu0 0
    %1011 = vmatprep.subr.bf16.mxu0 0
    %1012 = vmatpush1.bf16.msra.mxu0 0
    %1013 = vmatprep.subr.bf16.mxu0 0
    %1014 = vmatpush1.bf16.msra.mxu0 0
    %1015 = vmatprep.subr.bf16.mxu0 0
    %1016 = vmatpush1.bf16.msra.mxu0 0
    %1017 = vmatprep.subr.bf16.mxu0 0
    %1018 = vmatpush1.bf16.msra.mxu0 0
    %1019 = vmatprep.subr.bf16.mxu0 0
    %1020 = vmatpush1.bf16.msra.mxu0 0
    %1021 = vmatprep.subr.bf16.mxu0 0
    %1022 = vmatpush1.bf16.msra.mxu0 0
    %1023 = vmatprep.mubr.bf16.mxu0 0
    %1024 = vmatmul.mubr.bf16.gmra.mrb[0].mxu0 %v917
    %v1025 = vpop.f32.mrb[0].mxu0
    %v1026 = vadd.f32 %v941, %v1025
    %v1027 = vpop.f32.mrb[0].mxu0
    %v1028 = vpop.f32.mrb[0].mxu0
    %v1029 = vpop.f32.mrb[0].mxu0
    %1030 = vdwg.mxu0
    %v1031 = vrot.slane %v1026, 4
    %v1032 = vadd.f32 %v1026, %v1031
    %v1033 = vrot.slane %v1032, 2
    %v1034 = vadd.f32 %v1032, %v1033
    %v1035 = vrot.slane %v1034, 1
    %v1036 = vadd.f32 %v1034, %v1035
    %v1037 = vmul.f32 %v1036, %v720
    %v1038 = vmul.f32 %v1026, %v1026
    %v1039 = vrot.slane %v1038, 4
    %v1040 = vadd.f32 %v1038, %v1039
    %v1041 = vrot.slane %v1040, 2
    %v1042 = vadd.f32 %v1040, %v1041
    %v1043 = vrot.slane %v1042, 1
    %v1044 = vadd.f32 %v1042, %v1043
    %v1045 = vmul.f32 %v1044, %v720
    %v1046 = vmul.f32 %v1037, %v1037
    %v1047 = vsub.f32 %v1045, %v1046
    %s1048 = scalar_lea.vmem %s5, 2
    %v1049 = vld [vmem:[%s1048] sm:$0x1]
    %v1050 = vsub.f32 %v1026, %v1037
    %v1052 = vlaneseq
    %v1053 = vshrl.u32 %v1052, 7
    %v1054 = vsub.s32 0, %v1053
    %v1055 = vrot.slane %v1049, %v1054
    %v1057 = vmul.f32 %v1055, %v1050
    %v1058 = vadd.f32 %v1047, 1e-05
    %v1059 = vrsqrt.pop %v1058
    %v1060 = vmul.f32 %v1057, %v1059
    %s1061 = scalar_lea.vmem [#allocation10], 2
    %v1062 = vld [vmem:[%s1061] sm:$0x1]
    %v1064 = vlaneseq
    %v1065 = vshrl.u32 %v1064, 7
    %v1066 = vsub.s32 0, %v1065
    %v1067 = vrot.slane %v1062, %v1066
    %v1069 = vadd.f32 %v1060, %v1067
    %v1070 = vxor.u32 %v1069, 2147483648
    %v1071 = vmul.f32 %v1070, 1.442695
    %v1072 = vpow.pop %v1071
    %v1073 = vadd.f32 %v1072, 1.0
    %v1074 = vrcp.pop %v1073
    %v1075 = vmul.f32 1.0, %v1074
    %v1076 = vpack.c.bf16 %v1075, %v1075
    %s1077 = scalar_lea.vmem [#allocation7], 192
    %v1078 = vld [vmem:[%s1077] sm:$0xf]
    %v1079 = vld [vmem:[%s1077 + $0x4] sm:$0xf]
    %v1080 = vld [vmem:[%s1077 + $0x8] sm:$0xf]
    %v1081 = vld [vmem:[%s1077 + $0xc] sm:$0xf]
    %v1082 = vld [vmem:[%s1077 + $0x10] sm:$0xf]
    %v1083 = vld [vmem:[%s1077 + $0x14] sm:$0xf]
    %v1084 = vld [vmem:[%s1077 + $0x18] sm:$0xf]
    %v1085 = vld [vmem:[%s1077 + $0x1c] sm:$0xf]
    %v1086 = vld [vmem:[%s1077 + $0x20] sm:$0xf]
    %v1087 = vld [vmem:[%s1077 + $0x24] sm:$0xf]
    %v1088 = vld [vmem:[%s1077 + $0x28] sm:$0xf]
    %v1089 = vld [vmem:[%s1077 + $0x2c] sm:$0xf]
    %v1090 = vld [vmem:[%s1077 + $0x30] sm:$0xf]
    %v1091 = vld [vmem:[%s1077 + $0x34] sm:$0xf]
    %v1092 = vld [vmem:[%s1077 + $0x38] sm:$0xf]
    %v1093 = vld [vmem:[%s1077 + $0x3c] sm:$0xf]
    %s1094 = scalar_lea.vmem [#allocation8], 3
    %v1095 = vld [vmem:[%s1094] sm:$0x1]
    %v1097 = vlaneseq
    %v1098 = vshrl.u32 %v1097, 7
    %v1099 = vsub.s32 0, %v1098
    %v1100 = vrot.slane %v1095, %v1099
    %v1118 = vunpack.c.l.b16 %v1078
    %v1119 = vunpack.c.l.b16 %v1079
    %v1120 = vunpack.c.l.b16 %v1080
    %v1121 = vunpack.c.l.b16 %v1081
    %v1122 = vunpack.c.l.b16 %v1082
    %v1123 = vunpack.c.l.b16 %v1083
    %v1124 = vunpack.c.l.b16 %v1084
    %v1125 = vunpack.c.l.b16 %v1085
    %v1126 = vunpack.c.l.b16 %v1086
    %v1127 = vunpack.c.l.b16 %v1087
    %v1128 = vunpack.c.l.b16 %v1088
    %v1129 = vunpack.c.l.b16 %v1089
    %v1130 = vunpack.c.l.b16 %v1090
    %v1131 = vunpack.c.l.b16 %v1091
    %v1132 = vunpack.c.l.b16 %v1092
    %v1133 = vunpack.c.l.b16 %v1093
    %v1134 = vpack.c.b16 %v1119, %v1118
    %v1135 = vpack.c.b16 %v1121, %v1120
    %v1136 = vpack.c.b16 %v1123, %v1122
    %v1137 = vpack.c.b16 %v1125, %v1124
    %v1138 = vpack.c.b16 %v1127, %v1126
    %v1139 = vpack.c.b16 %v1129, %v1128
    %v1140 = vpack.c.b16 %v1131, %v1130
    %v1141 = vpack.c.b16 %v1133, %v1132
    %1150 = vmatprep.subr.bf16.mxu0 0
    %1151 = vmatpush1.bf16.msra.mxu0 %v1134
    %1152 = vmatprep.subr.bf16.mxu0 0
    %1153 = vmatpush1.bf16.msra.mxu0 %v1135
    %1154 = vmatprep.subr.bf16.mxu0 0
    %1155 = vmatpush1.bf16.msra.mxu0 %v1136
    %1156 = vmatprep.subr.bf16.mxu0 0
    %1157 = vmatpush1.bf16.msra.mxu0 %v1137
    %1158 = vmatprep.subr.bf16.mxu0 0
    %1159 = vmatpush1.bf16.msra.mxu0 %v1138
    %1160 = vmatprep.subr.bf16.mxu0 0
    %1161 = vmatpush1.bf16.msra.mxu0 %v1139
    %1162 = vmatprep.subr.bf16.mxu0 0
    %1163 = vmatpush1.bf16.msra.mxu0 %v1140
    %1164 = vmatprep.subr.bf16.mxu0 0
    %1165 = vmatpush1.bf16.msra.mxu0 %v1141
    %1166 = vmatprep.subr.bf16.mxu0 0
    %1167 = vmatpush1.bf16.msra.mxu0 0
    %1168 = vmatprep.subr.bf16.mxu0 0
    %1169 = vmatpush1.bf16.msra.mxu0 0
    %1170 = vmatprep.subr.bf16.mxu0 0
    %1171 = vmatpush1.bf16.msra.mxu0 0
    %1172 = vmatprep.subr.bf16.mxu0 0
    %1173 = vmatpush1.bf16.msra.mxu0 0
    %1174 = vmatprep.subr.bf16.mxu0 0
    %1175 = vmatpush1.bf16.msra.mxu0 0
    %1176 = vmatprep.subr.bf16.mxu0 0
    %1177 = vmatpush1.bf16.msra.mxu0 0
    %1178 = vmatprep.subr.bf16.mxu0 0
    %1179 = vmatpush1.bf16.msra.mxu0 0
    %1180 = vmatprep.subr.bf16.mxu0 0
    %1181 = vmatpush1.bf16.msra.mxu0 0
    %1182 = vmatprep.mubr.bf16.mxu0 0
    %1183 = vmatmul.mubr.bf16.gmra.mrb[0].mxu0 %v1076
    %v1184 = vpop.f32.mrb[0].mxu0
    %v1185 = vadd.f32 %v1100, %v1184
    %v1186 = vpop.f32.mrb[0].mxu0
    %v1187 = vpop.f32.mrb[0].mxu0
    %v1188 = vpop.f32.mrb[0].mxu0
    %1189 = vdwg.mxu0
    %v1190 = vrot.slane %v1185, 4
    %v1191 = vadd.f32 %v1185, %v1190
    %v1192 = vrot.slane %v1191, 2
    %v1193 = vadd.f32 %v1191, %v1192
    %v1194 = vrot.slane %v1193, 1
    %v1195 = vadd.f32 %v1193, %v1194
    %v1196 = vmul.f32 %v1195, %v720
    %v1197 = vmul.f32 %v1185, %v1185
    %v1198 = vrot.slane %v1197, 4
    %v1199 = vadd.f32 %v1197, %v1198
    %v1200 = vrot.slane %v1199, 2
    %v1201 = vadd.f32 %v1199, %v1200
    %v1202 = vrot.slane %v1201, 1
    %v1203 = vadd.f32 %v1201, %v1202
    %v1204 = vmul.f32 %v1203, %v720
    %v1205 = vmul.f32 %v1196, %v1196
    %v1206 = vsub.f32 %v1204, %v1205
    %s1207 = scalar_lea.vmem %s5, 3
    %v1208 = vld [vmem:[%s1207] sm:$0x1]
    %v1209 = vsub.f32 %v1185, %v1196
    %v1211 = vlaneseq
    %v1212 = vshrl.u32 %v1211, 7
    %v1213 = vsub.s32 0, %v1212
    %v1214 = vrot.slane %v1208, %v1213
    %v1216 = vmul.f32 %v1214, %v1209
    %v1217 = vadd.f32 %v1206, 1e-05
    %v1218 = vrsqrt.pop %v1217
    %v1219 = vmul.f32 %v1216, %v1218
    %s1220 = scalar_lea.vmem [#allocation10], 3
    %v1221 = vld [vmem:[%s1220] sm:$0x1]
    %v1223 = vlaneseq
    %v1224 = vshrl.u32 %v1223, 7
    %v1225 = vsub.s32 0, %v1224
    %v1226 = vrot.slane %v1221, %v1225
    %v1228 = vadd.f32 %v1219, %v1226
    %v1229 = vxor.u32 %v1228, 2147483648
    %v1230 = vmul.f32 %v1229, 1.442695
    %v1231 = vpow.pop %v1230
    %v1232 = vadd.f32 %v1231, 1.0
    %v1233 = vrcp.pop %v1232
    %v1234 = vmul.f32 1.0, %v1233
    %v1235 = vpack.c.bf16 %v1234, %v1234
    %s1236 = scalar_lea.vmem [#allocation7], 256
    %v1237 = vld [vmem:[%s1236] sm:$0xf]
    %v1238 = vld [vmem:[%s1236 + $0x4] sm:$0xf]
    %v1239 = vld [vmem:[%s1236 + $0x8] sm:$0xf]
    %v1240 = vld [vmem:[%s1236 + $0xc] sm:$0xf]
    %v1241 = vld [vmem:[%s1236 + $0x10] sm:$0xf]
    %v1242 = vld [vmem:[%s1236 + $0x14] sm:$0xf]
    %v1243 = vld [vmem:[%s1236 + $0x18] sm:$0xf]
    %v1244 = vld [vmem:[%s1236 + $0x1c] sm:$0xf]
    %v1245 = vld [vmem:[%s1236 + $0x20] sm:$0xf]
    %v1246 = vld [vmem:[%s1236 + $0x24] sm:$0xf]
    %v1247 = vld [vmem:[%s1236 + $0x28] sm:$0xf]
    %v1248 = vld [vmem:[%s1236 + $0x2c] sm:$0xf]
    %v1249 = vld [vmem:[%s1236 + $0x30] sm:$0xf]
    %v1250 = vld [vmem:[%s1236 + $0x34] sm:$0xf]
    %v1251 = vld [vmem:[%s1236 + $0x38] sm:$0xf]
    %v1252 = vld [vmem:[%s1236 + $0x3c] sm:$0xf]
    %s1253 = scalar_lea.vmem [#allocation8], 4
    %v1254 = vld [vmem:[%s1253] sm:$0x1]
    %v1256 = vlaneseq
    %v1257 = vshrl.u32 %v1256, 7
    %v1258 = vsub.s32 0, %v1257
    %v1259 = vrot.slane %v1254, %v1258
    %v1277 = vunpack.c.l.b16 %v1237
    %v1278 = vunpack.c.l.b16 %v1238
    %v1279 = vunpack.c.l.b16 %v1239
    %v1280 = vunpack.c.l.b16 %v1240
    %v1281 = vunpack.c.l.b16 %v1241
    %v1282 = vunpack.c.l.b16 %v1242
    %v1283 = vunpack.c.l.b16 %v1243
    %v1284 = vunpack.c.l.b16 %v1244
    %v1285 = vunpack.c.l.b16 %v1245
    %v1286 = vunpack.c.l.b16 %v1246
    %v1287 = vunpack.c.l.b16 %v1247
    %v1288 = vunpack.c.l.b16 %v1248
    %v1289 = vunpack.c.l.b16 %v1249
    %v1290 = vunpack.c.l.b16 %v1250
    %v1291 = vunpack.c.l.b16 %v1251
    %v1292 = vunpack.c.l.b16 %v1252
    %v1293 = vpack.c.b16 %v1278, %v1277
    %v1294 = vpack.c.b16 %v1280, %v1279
    %v1295 = vpack.c.b16 %v1282, %v1281
    %v1296 = vpack.c.b16 %v1284, %v1283
    %v1297 = vpack.c.b16 %v1286, %v1285
    %v1298 = vpack.c.b16 %v1288, %v1287
    %v1299 = vpack.c.b16 %v1290, %v1289
    %v1300 = vpack.c.b16 %v1292, %v1291
    %1309 = vmatprep.subr.bf16.mxu0 0
    %1310 = vmatpush1.bf16.msra.mxu0 %v1293
    %1311 = vmatprep.subr.bf16.mxu0 0
    %1312 = vmatpush1.bf16.msra.mxu0 %v1294
    %1313 = vmatprep.subr.bf16.mxu0 0
    %1314 = vmatpush1.bf16.msra.mxu0 %v1295
    %1315 = vmatprep.subr.bf16.mxu0 0
    %1316 = vmatpush1.bf16.msra.mxu0 %v1296
    %1317 = vmatprep.subr.bf16.mxu0 0
    %1318 = vmatpush1.bf16.msra.mxu0 %v1297
    %1319 = vmatprep.subr.bf16.mxu0 0
    %1320 = vmatpush1.bf16.msra.mxu0 %v1298
    %1321 = vmatprep.subr.bf16.mxu0 0
    %1322 = vmatpush1.bf16.msra.mxu0 %v1299
    %1323 = vmatprep.subr.bf16.mxu0 0
    %1324 = vmatpush1.bf16.msra.mxu0 %v1300
    %1325 = vmatprep.subr.bf16.mxu0 0
    %1326 = vmatpush1.bf16.msra.mxu0 0
    %1327 = vmatprep.subr.bf16.mxu0 0
    %1328 = vmatpush1.bf16.msra.mxu0 0
    %1329 = vmatprep.subr.bf16.mxu0 0
    %1330 = vmatpush1.bf16.msra.mxu0 0
    %1331 = vmatprep.subr.bf16.mxu0 0
    %1332 = vmatpush1.bf16.msra.mxu0 0
    %1333 = vmatprep.subr.bf16.mxu0 0
    %1334 = vmatpush1.bf16.msra.mxu0 0
    %1335 = vmatprep.subr.bf16.mxu0 0
    %1336 = vmatpush1.bf16.msra.mxu0 0
    %1337 = vmatprep.subr.bf16.mxu0 0
    %1338 = vmatpush1.bf16.msra.mxu0 0
    %1339 = vmatprep.subr.bf16.mxu0 0
    %1340 = vmatpush1.bf16.msra.mxu0 0
    %1341 = vmatprep.mubr.bf16.mxu0 0
    %1342 = vmatmul.mubr.bf16.gmra.mrb[0].mxu0 %v1235
    %v1343 = vpop.f32.mrb[0].mxu0
    %v1344 = vadd.f32 %v1259, %v1343
    %v1345 = vpop.f32.mrb[0].mxu0
    %v1346 = vpop.f32.mrb[0].mxu0
    %v1347 = vpop.f32.mrb[0].mxu0
    %1348 = vdwg.mxu0
    %v1349 = vrot.slane %v1344, 4
    %v1350 = vadd.f32 %v1344, %v1349
    %v1351 = vrot.slane %v1350, 2
    %v1352 = vadd.f32 %v1350, %v1351
    %v1353 = vrot.slane %v1352, 1
    %v1354 = vadd.f32 %v1352, %v1353
    %v1355 = vmul.f32 %v1354, %v720
    %v1356 = vmul.f32 %v1344, %v1344
    %v1357 = vrot.slane %v1356, 4
    %v1358 = vadd.f32 %v1356, %v1357
    %v1359 = vrot.slane %v1358, 2
    %v1360 = vadd.f32 %v1358, %v1359
    %v1361 = vrot.slane %v1360, 1
    %v1362 = vadd.f32 %v1360, %v1361
    %v1363 = vmul.f32 %v1362, %v720
    %v1364 = vmul.f32 %v1355, %v1355
    %v1365 = vsub.f32 %v1363, %v1364
    %s1366 = scalar_lea.vmem %s5, 4
    %v1367 = vld [vmem:[%s1366] sm:$0x1]
    %v1368 = vsub.f32 %v1344, %v1355
    %v1370 = vlaneseq
    %v1371 = vshrl.u32 %v1370, 7
    %v1372 = vsub.s32 0, %v1371
    %v1373 = vrot.slane %v1367, %v1372
    %v1375 = vmul.f32 %v1373, %v1368
    %v1376 = vadd.f32 %v1365, 1e-05
    %v1377 = vrsqrt.pop %v1376
    %v1378 = vmul.f32 %v1375, %v1377
    %s1379 = scalar_lea.vmem [#allocation10], 4
    %v1380 = vld [vmem:[%s1379] sm:$0x1]
    %v1382 = vlaneseq
    %v1383 = vshrl.u32 %v1382, 7
    %v1384 = vsub.s32 0, %v1383
    %v1385 = vrot.slane %v1380, %v1384
    %v1387 = vadd.f32 %v1378, %v1385
    %v1388 = vxor.u32 %v1387, 2147483648
    %v1389 = vmul.f32 %v1388, 1.442695
    %v1390 = vpow.pop %v1389
    %v1391 = vadd.f32 %v1390, 1.0
    %v1392 = vrcp.pop %v1391
    %v1393 = vmul.f32 1.0, %v1392
    %v1394 = vpack.c.bf16 %v1393, %v1393
    %v1395 = vld [vmem:[#allocation11] sm:$0xff]
    %v1396 = vld [vmem:[#allocation11 + $0x8] sm:$0xff]
    %v1397 = vld [vmem:[#allocation11 + $0x10] sm:$0xff]
    %v1398 = vld [vmem:[#allocation11 + $0x18] sm:$0xff]
    %v1399 = vld [vmem:[#allocation11 + $0x20] sm:$0xff]
    %v1400 = vld [vmem:[#allocation11 + $0x28] sm:$0xff]
    %v1401 = vld [vmem:[#allocation11 + $0x30] sm:$0xff]
    %v1402 = vld [vmem:[#allocation11 + $0x38] sm:$0xff]
    %v1403 = vld [vmem:[#allocation11 + $0x40] sm:$0xff]
    %v1404 = vld [vmem:[#allocation11 + $0x48] sm:$0xff]
    %v1405 = vld [vmem:[#allocation11 + $0x50] sm:$0xff]
    %v1406 = vld [vmem:[#allocation11 + $0x58] sm:$0xff]
    %v1407 = vld [vmem:[#allocation11 + $0x60] sm:$0xff]
    %v1408 = vld [vmem:[#allocation11 + $0x68] sm:$0xff]
    %v1409 = vld [vmem:[#allocation11 + $0x70] sm:$0xff]
    %v1410 = vld [vmem:[#allocation11 + $0x78] sm:$0xff]
    %v1411 = vld [vmem:[#allocation11 + $0x80] sm:$0xff]
    %v1412 = vld [vmem:[#allocation11 + $0x88] sm:$0xff]
    %v1413 = vld [vmem:[#allocation11 + $0x90] sm:$0xff]
    %v1414 = vld [vmem:[#allocation11 + $0x98] sm:$0xff]
    %v1415 = vld [vmem:[#allocation11 + $0xa0] sm:$0xff]
    %v1416 = vld [vmem:[#allocation11 + $0xa8] sm:$0xff]
    %v1417 = vld [vmem:[#allocation11 + $0xb0] sm:$0xff]
    %v1418 = vld [vmem:[#allocation11 + $0xb8] sm:$0xff]
    %v1419 = vld [vmem:[#allocation11 + $0xc0] sm:$0xff]
    %v1420 = vld [vmem:[#allocation11 + $0xc8] sm:$0xff]
    %v1421 = vld [vmem:[#allocation11 + $0xd0] sm:$0xff]
    %v1422 = vld [vmem:[#allocation11 + $0xd8] sm:$0xff]
    %v1423 = vld [vmem:[#allocation11 + $0xe0] sm:$0xff]
    %v1424 = vld [vmem:[#allocation11 + $0xe8] sm:$0xff]
    %v1425 = vld [vmem:[#allocation11 + $0xf0] sm:$0xff]
    %v1426 = vld [vmem:[#allocation11 + $0xf8] sm:$0xff]
    %v1427 = vld [vmem:[#allocation11 + $0x100] sm:$0xff]
    %v1428 = vld [vmem:[#allocation11 + $0x108] sm:$0xff]
    %v1429 = vld [vmem:[#allocation11 + $0x110] sm:$0xff]
    %v1430 = vld [vmem:[#allocation11 + $0x118] sm:$0xff]
    %v1431 = vld [vmem:[#allocation11 + $0x120] sm:$0xff]
    %v1432 = vld [vmem:[#allocation11 + $0x128] sm:$0xff]
    %v1433 = vld [vmem:[#allocation11 + $0x130] sm:$0xff]
    %v1434 = vld [vmem:[#allocation11 + $0x138] sm:$0xff]
    %v1435 = vld [vmem:[#allocation11 + $0x140] sm:$0xff]
    %v1436 = vld [vmem:[#allocation11 + $0x148] sm:$0xff]
    %v1437 = vld [vmem:[#allocation11 + $0x150] sm:$0xff]
    %v1438 = vld [vmem:[#allocation11 + $0x158] sm:$0xff]
    %v1439 = vld [vmem:[#allocation11 + $0x160] sm:$0xff]
    %v1440 = vld [vmem:[#allocation11 + $0x168] sm:$0xff]
    %v1441 = vld [vmem:[#allocation11 + $0x170] sm:$0xff]
    %v1442 = vld [vmem:[#allocation11 + $0x178] sm:$0xff]
    %v1443 = vld [vmem:[#allocation11 + $0x180] sm:$0xff]
    %v1444 = vld [vmem:[#allocation11 + $0x188] sm:$0xff]
    %v1445 = vld [vmem:[#allocation11 + $0x190] sm:$0xff]
    %v1446 = vld [vmem:[#allocation11 + $0x198] sm:$0xff]
    %v1447 = vld [vmem:[#allocation11 + $0x1a0] sm:$0xff]
    %v1448 = vld [vmem:[#allocation11 + $0x1a8] sm:$0xff]
    %v1449 = vld [vmem:[#allocation11 + $0x1b0] sm:$0xff]
    %v1450 = vld [vmem:[#allocation11 + $0x1b8] sm:$0xff]
    %v1451 = vld [vmem:[#allocation11 + $0x1c0] sm:$0xff]
    %v1452 = vld [vmem:[#allocation11 + $0x1c8] sm:$0xff]
    %v1453 = vld [vmem:[#allocation11 + $0x1d0] sm:$0xff]
    %v1454 = vld [vmem:[#allocation11 + $0x1d8] sm:$0xff]
    %v1455 = vld [vmem:[#allocation11 + $0x1e0] sm:$0xff]
    %v1456 = vld [vmem:[#allocation11 + $0x1e8] sm:$0xff]
    %v1457 = vld [vmem:[#allocation11 + $0x1f0] sm:$0xff]
    %v1458 = vld [vmem:[#allocation11 + $0x1f8] sm:$0xff]
    %v1459 = vld [vmem:[%s8] sm:$0xff]
    %v1461 = vlaneseq
    %v1462 = vshrl.u32 %v1461, 7
    %v1463 = vsub.s32 0, %v1462
    %v1464 = vrot.slane %v1459, %v1463
    %v1465 = vlaneseq
    %v1466 = vshrl.u32 %v1465, 7
    %v1467 = vsub.s32 1, %v1466
    %v1468 = vrot.slane %v1459, %v1467
    %v1469 = vlaneseq
    %v1470 = vshrl.u32 %v1469, 7
    %v1471 = vsub.s32 2, %v1470
    %v1472 = vrot.slane %v1459, %v1471
    %v1473 = vlaneseq
    %v1474 = vshrl.u32 %v1473, 7
    %v1475 = vsub.s32 3, %v1474
    %v1476 = vrot.slane %v1459, %v1475
    %v1477 = vlaneseq
    %v1478 = vshrl.u32 %v1477, 7
    %v1479 = vsub.s32 4, %v1478
    %v1480 = vrot.slane %v1459, %v1479
    %v1481 = vlaneseq
    %v1482 = vshrl.u32 %v1481, 7
    %v1483 = vsub.s32 5, %v1482
    %v1484 = vrot.slane %v1459, %v1483
    %v1485 = vlaneseq
    %v1486 = vshrl.u32 %v1485, 7
    %v1487 = vsub.s32 6, %v1486
    %v1488 = vrot.slane %v1459, %v1487
    %v1489 = vlaneseq
    %v1490 = vshrl.u32 %v1489, 7
    %v1491 = vsub.s32 7, %v1490
    %v1492 = vrot.slane %v1459, %v1491
    %v1565 = vunpack.c.l.b16 %v1395
    %v1566 = vunpack.c.h.b16 %v1395
    %v1567 = vunpack.c.l.b16 %v1396
    %v1568 = vunpack.c.h.b16 %v1396
    %v1569 = vunpack.c.l.b16 %v1397
    %v1570 = vunpack.c.h.b16 %v1397
    %v1571 = vunpack.c.l.b16 %v1398
    %v1572 = vunpack.c.h.b16 %v1398
    %v1573 = vunpack.c.l.b16 %v1399
    %v1574 = vunpack.c.h.b16 %v1399
    %v1575 = vunpack.c.l.b16 %v1400
    %v1576 = vunpack.c.h.b16 %v1400
    %v1577 = vunpack.c.l.b16 %v1401
    %v1578 = vunpack.c.h.b16 %v1401
    %v1579 = vunpack.c.l.b16 %v1402
    %v1580 = vunpack.c.h.b16 %v1402
    %v1581 = vunpack.c.l.b16 %v1403
    %v1582 = vunpack.c.h.b16 %v1403
    %v1583 = vunpack.c.l.b16 %v1404
    %v1584 = vunpack.c.h.b16 %v1404
    %v1585 = vunpack.c.l.b16 %v1405
    %v1586 = vunpack.c.h.b16 %v1405
    %v1587 = vunpack.c.l.b16 %v1406
    %v1588 = vunpack.c.h.b16 %v1406
    %v1589 = vunpack.c.l.b16 %v1407
    %v1590 = vunpack.c.h.b16 %v1407
    %v1591 = vunpack.c.l.b16 %v1408
    %v1592 = vunpack.c.h.b16 %v1408
    %v1593 = vunpack.c.l.b16 %v1409
    %v1594 = vunpack.c.h.b16 %v1409
    %v1595 = vunpack.c.l.b16 %v1410
    %v1596 = vunpack.c.h.b16 %v1410
    %v1597 = vunpack.c.l.b16 %v1411
    %v1598 = vunpack.c.h.b16 %v1411
    %v1599 = vunpack.c.l.b16 %v1412
    %v1600 = vunpack.c.h.b16 %v1412
    %v1601 = vunpack.c.l.b16 %v1413
    %v1602 = vunpack.c.h.b16 %v1413
    %v1603 = vunpack.c.l.b16 %v1414
    %v1604 = vunpack.c.h.b16 %v1414
    %v1605 = vunpack.c.l.b16 %v1415
    %v1606 = vunpack.c.h.b16 %v1415
    %v1607 = vunpack.c.l.b16 %v1416
    %v1608 = vunpack.c.h.b16 %v1416
    %v1609 = vunpack.c.l.b16 %v1417
    %v1610 = vunpack.c.h.b16 %v1417
    %v1611 = vunpack.c.l.b16 %v1418
    %v1612 = vunpack.c.h.b16 %v1418
    %v1613 = vunpack.c.l.b16 %v1419
    %v1614 = vunpack.c.h.b16 %v1419
    %v1615 = vunpack.c.l.b16 %v1420
    %v1616 = vunpack.c.h.b16 %v1420
    %v1617 = vunpack.c.l.b16 %v1421
    %v1618 = vunpack.c.h.b16 %v1421
    %v1619 = vunpack.c.l.b16 %v1422
    %v1620 = vunpack.c.h.b16 %v1422
    %v1621 = vunpack.c.l.b16 %v1423
    %v1622 = vunpack.c.h.b16 %v1423
    %v1623 = vunpack.c.l.b16 %v1424
    %v1624 = vunpack.c.h.b16 %v1424
    %v1625 = vunpack.c.l.b16 %v1425
    %v1626 = vunpack.c.h.b16 %v1425
    %v1627 = vunpack.c.l.b16 %v1426
    %v1628 = vunpack.c.h.b16 %v1426
    %v1629 = vunpack.c.l.b16 %v1427
    %v1630 = vunpack.c.h.b16 %v1427
    %v1631 = vunpack.c.l.b16 %v1428
    %v1632 = vunpack.c.h.b16 %v1428
    %v1633 = vunpack.c.l.b16 %v1429
    %v1634 = vunpack.c.h.b16 %v1429
    %v1635 = vunpack.c.l.b16 %v1430
    %v1636 = vunpack.c.h.b16 %v1430
    %v1637 = vunpack.c.l.b16 %v1431
    %v1638 = vunpack.c.h.b16 %v1431
    %v1639 = vunpack.c.l.b16 %v1432
    %v1640 = vunpack.c.h.b16 %v1432
    %v1641 = vunpack.c.l.b16 %v1433
    %v1642 = vunpack.c.h.b16 %v1433
    %v1643 = vunpack.c.l.b16 %v1434
    %v1644 = vunpack.c.h.b16 %v1434
    %v1645 = vunpack.c.l.b16 %v1435
    %v1646 = vunpack.c.h.b16 %v1435
    %v1647 = vunpack.c.l.b16 %v1436
    %v1648 = vunpack.c.h.b16 %v1436
    %v1649 = vunpack.c.l.b16 %v1437
    %v1650 = vunpack.c.h.b16 %v1437
    %v1651 = vunpack.c.l.b16 %v1438
    %v1652 = vunpack.c.h.b16 %v1438
    %v1653 = vunpack.c.l.b16 %v1439
    %v1654 = vunpack.c.h.b16 %v1439
    %v1655 = vunpack.c.l.b16 %v1440
    %v1656 = vunpack.c.h.b16 %v1440
    %v1657 = vunpack.c.l.b16 %v1441
    %v1658 = vunpack.c.h.b16 %v1441
    %v1659 = vunpack.c.l.b16 %v1442
    %v1660 = vunpack.c.h.b16 %v1442
    %v1661 = vunpack.c.l.b16 %v1443
    %v1662 = vunpack.c.h.b16 %v1443
    %v1663 = vunpack.c.l.b16 %v1444
    %v1664 = vunpack.c.h.b16 %v1444
    %v1665 = vunpack.c.l.b16 %v1445
    %v1666 = vunpack.c.h.b16 %v1445
    %v1667 = vunpack.c.l.b16 %v1446
    %v1668 = vunpack.c.h.b16 %v1446
    %v1669 = vunpack.c.l.b16 %v1447
    %v1670 = vunpack.c.h.b16 %v1447
    %v1671 = vunpack.c.l.b16 %v1448
    %v1672 = vunpack.c.h.b16 %v1448
    %v1673 = vunpack.c.l.b16 %v1449
    %v1674 = vunpack.c.h.b16 %v1449
    %v1675 = vunpack.c.l.b16 %v1450
    %v1676 = vunpack.c.h.b16 %v1450
    %v1677 = vunpack.c.l.b16 %v1451
    %v1678 = vunpack.c.h.b16 %v1451
    %v1679 = vunpack.c.l.b16 %v1452
    %v1680 = vunpack.c.h.b16 %v1452
    %v1681 = vunpack.c.l.b16 %v1453
    %v1682 = vunpack.c.h.b16 %v1453
    %v1683 = vunpack.c.l.b16 %v1454
    %v1684 = vunpack.c.h.b16 %v1454
    %v1685 = vunpack.c.l.b16 %v1455
    %v1686 = vunpack.c.h.b16 %v1455
    %v1687 = vunpack.c.l.b16 %v1456
    %v1688 = vunpack.c.h.b16 %v1456
    %v1689 = vunpack.c.l.b16 %v1457
    %v1690 = vunpack.c.h.b16 %v1457
    %v1691 = vunpack.c.l.b16 %v1458
    %v1692 = vunpack.c.h.b16 %v1458
    %v1693 = vpack.c.b16 %v1573, %v1565
    %v1694 = vpack.c.b16 %v1574, %v1566
    %v1695 = vpack.c.b16 %v1575, %v1567
    %v1696 = vpack.c.b16 %v1576, %v1568
    %v1697 = vpack.c.b16 %v1577, %v1569
    %v1698 = vpack.c.b16 %v1578, %v1570
    %v1699 = vpack.c.b16 %v1579, %v1571
    %v1700 = vpack.c.b16 %v1580, %v1572
    %v1701 = vpack.c.b16 %v1589, %v1581
    %v1702 = vpack.c.b16 %v1590, %v1582
    %v1703 = vpack.c.b16 %v1591, %v1583
    %v1704 = vpack.c.b16 %v1592, %v1584
    %v1705 = vpack.c.b16 %v1593, %v1585
    %v1706 = vpack.c.b16 %v1594, %v1586
    %v1707 = vpack.c.b16 %v1595, %v1587
    %v1708 = vpack.c.b16 %v1596, %v1588
    %v1709 = vpack.c.b16 %v1605, %v1597
    %v1710 = vpack.c.b16 %v1606, %v1598
    %v1711 = vpack.c.b16 %v1607, %v1599
    %v1712 = vpack.c.b16 %v1608, %v1600
    %v1713 = vpack.c.b16 %v1609, %v1601
    %v1714 = vpack.c.b16 %v1610, %v1602
    %v1715 = vpack.c.b16 %v1611, %v1603
    %v1716 = vpack.c.b16 %v1612, %v1604
    %v1717 = vpack.c.b16 %v1621, %v1613
    %v1718 = vpack.c.b16 %v1622, %v1614
    %v1719 = vpack.c.b16 %v1623, %v1615
    %v1720 = vpack.c.b16 %v1624, %v1616
    %v1721 = vpack.c.b16 %v1625, %v1617
    %v1722 = vpack.c.b16 %v1626, %v1618
    %v1723 = vpack.c.b16 %v1627, %v1619
    %v1724 = vpack.c.b16 %v1628, %v1620
    %v1725 = vpack.c.b16 %v1637, %v1629
    %v1726 = vpack.c.b16 %v1638, %v1630
    %v1727 = vpack.c.b16 %v1639, %v1631
    %v1728 = vpack.c.b16 %v1640, %v1632
    %v1729 = vpack.c.b16 %v1641, %v1633
    %v1730 = vpack.c.b16 %v1642, %v1634
    %v1731 = vpack.c.b16 %v1643, %v1635
    %v1732 = vpack.c.b16 %v1644, %v1636
    %v1733 = vpack.c.b16 %v1653, %v1645
    %v1734 = vpack.c.b16 %v1654, %v1646
    %v1735 = vpack.c.b16 %v1655, %v1647
    %v1736 = vpack.c.b16 %v1656, %v1648
    %v1737 = vpack.c.b16 %v1657, %v1649
    %v1738 = vpack.c.b16 %v1658, %v1650
    %v1739 = vpack.c.b16 %v1659, %v1651
    %v1740 = vpack.c.b16 %v1660, %v1652
    %v1741 = vpack.c.b16 %v1669, %v1661
    %v1742 = vpack.c.b16 %v1670, %v1662
    %v1743 = vpack.c.b16 %v1671, %v1663
    %v1744 = vpack.c.b16 %v1672, %v1664
    %v1745 = vpack.c.b16 %v1673, %v1665
    %v1746 = vpack.c.b16 %v1674, %v1666
    %v1747 = vpack.c.b16 %v1675, %v1667
    %v1748 = vpack.c.b16 %v1676, %v1668
    %v1749 = vpack.c.b16 %v1685, %v1677
    %v1750 = vpack.c.b16 %v1686, %v1678
    %v1751 = vpack.c.b16 %v1687, %v1679
    %v1752 = vpack.c.b16 %v1688, %v1680
    %v1753 = vpack.c.b16 %v1689, %v1681
    %v1754 = vpack.c.b16 %v1690, %v1682
    %v1755 = vpack.c.b16 %v1691, %v1683
    %v1756 = vpack.c.b16 %v1692, %v1684
    %1821 = vmatprep.subr.bf16.mxu0 %v1694
    %1822 = vmatpush1.bf16.msra.mxu0 %v1693
    %1823 = vmatprep.subr.bf16.mxu0 %v1702
    %1824 = vmatpush1.bf16.msra.mxu0 %v1701
    %1825 = vmatprep.subr.bf16.mxu0 %v1710
    %1826 = vmatpush1.bf16.msra.mxu0 %v1709
    %1827 = vmatprep.subr.bf16.mxu0 %v1718
    %1828 = vmatpush1.bf16.msra.mxu0 %v1717
    %1829 = vmatprep.subr.bf16.mxu0 %v1726
    %1830 = vmatpush1.bf16.msra.mxu0 %v1725
    %1831 = vmatprep.subr.bf16.mxu0 %v1734
    %1832 = vmatpush1.bf16.msra.mxu0 %v1733
    %1833 = vmatprep.subr.bf16.mxu0 %v1742
    %1834 = vmatpush1.bf16.msra.mxu0 %v1741
    %1835 = vmatprep.subr.bf16.mxu0 %v1750
    %1836 = vmatpush1.bf16.msra.mxu0 %v1749
    %1837 = vmatprep.subr.bf16.mxu0 0
    %1838 = vmatpush1.bf16.msra.mxu0 0
    %1839 = vmatprep.subr.bf16.mxu0 0
    %1840 = vmatpush1.bf16.msra.mxu0 0
    %1841 = vmatprep.subr.bf16.mxu0 0
    %1842 = vmatpush1.bf16.msra.mxu0 0
    %1843 = vmatprep.subr.bf16.mxu0 0
    %1844 = vmatpush1.bf16.msra.mxu0 0
    %1845 = vmatprep.subr.bf16.mxu0 0
    %1846 = vmatpush1.bf16.msra.mxu0 0
    %1847 = vmatprep.subr.bf16.mxu0 0
    %1848 = vmatpush1.bf16.msra.mxu0 0
    %1849 = vmatprep.subr.bf16.mxu0 0
    %1850 = vmatpush1.bf16.msra.mxu0 0
    %1851 = vmatprep.subr.bf16.mxu0 0
    %1852 = vmatpush1.bf16.msra.mxu0 0
    %1853 = vmatprep.mubr.bf16.mxu0 0
    %1854 = vmatmul.mubr.bf16.gmra.mrb[0].mxu0 %v1394
    %v1855 = vpop.f32.mrb[0].mxu0
    %v1856 = vadd.f32 %v1464, %v1855
    %v1857 = vpop.f32.mrb[0].mxu0
    %v1858 = vadd.f32 %v1468, %v1857
    %v1859 = vpop.f32.mrb[0].mxu0
    %v1860 = vpop.f32.mrb[0].mxu0
    %1861 = vdwg.mxu0
    %1862 = vmatprep.subr.bf16.mxu0 %v1696
    %1863 = vmatpush1.bf16.msra.mxu0 %v1695
    %1864 = vmatprep.subr.bf16.mxu0 %v1704
    %1865 = vmatpush1.bf16.msra.mxu0 %v1703
    %1866 = vmatprep.subr.bf16.mxu0 %v1712
    %1867 = vmatpush1.bf16.msra.mxu0 %v1711
    %1868 = vmatprep.subr.bf16.mxu0 %v1720
    %1869 = vmatpush1.bf16.msra.mxu0 %v1719
    %1870 = vmatprep.subr.bf16.mxu0 %v1728
    %1871 = vmatpush1.bf16.msra.mxu0 %v1727
    %1872 = vmatprep.subr.bf16.mxu0 %v1736
    %1873 = vmatpush1.bf16.msra.mxu0 %v1735
    %1874 = vmatprep.subr.bf16.mxu0 %v1744
    %1875 = vmatpush1.bf16.msra.mxu0 %v1743
    %1876 = vmatprep.subr.bf16.mxu0 %v1752
    %1877 = vmatpush1.bf16.msra.mxu0 %v1751
    %1878 = vmatprep.subr.bf16.mxu0 0
    %1879 = vmatpush1.bf16.msra.mxu0 0
    %1880 = vmatprep.subr.bf16.mxu0 0
    %1881 = vmatpush1.bf16.msra.mxu0 0
    %1882 = vmatprep.subr.bf16.mxu0 0
    %1883 = vmatpush1.bf16.msra.mxu0 0
    %1884 = vmatprep.subr.bf16.mxu0 0
    %1885 = vmatpush1.bf16.msra.mxu0 0
    %1886 = vmatprep.subr.bf16.mxu0 0
    %1887 = vmatpush1.bf16.msra.mxu0 0
    %1888 = vmatprep.subr.bf16.mxu0 0
    %1889 = vmatpush1.bf16.msra.mxu0 0
    %1890 = vmatprep.subr.bf16.mxu0 0
    %1891 = vmatpush1.bf16.msra.mxu0 0
    %1892 = vmatprep.subr.bf16.mxu0 0
    %1893 = vmatpush1.bf16.msra.mxu0 0
    %1894 = vmatprep.mubr.bf16.mxu0 0
    %1895 = vmatmul.mubr.bf16.gmra.mrb[0].mxu0 %v1394
    %v1896 = vpop.f32.mrb[0].mxu0
    %v1897 = vadd.f32 %v1472, %v1896
    %v1898 = vpop.f32.mrb[0].mxu0
    %v1899 = vadd.f32 %v1476, %v1898
    %v1900 = vpop.f32.mrb[0].mxu0
    %v1901 = vpop.f32.mrb[0].mxu0
    %1902 = vdwg.mxu0
    %1903 = vmatprep.subr.bf16.mxu0 %v1698
    %1904 = vmatpush1.bf16.msra.mxu0 %v1697
    %1905 = vmatprep.subr.bf16.mxu0 %v1706
    %1906 = vmatpush1.bf16.msra.mxu0 %v1705
    %1907 = vmatprep.subr.bf16.mxu0 %v1714
    %1908 = vmatpush1.bf16.msra.mxu0 %v1713
    %1909 = vmatprep.subr.bf16.mxu0 %v1722
    %1910 = vmatpush1.bf16.msra.mxu0 %v1721
    %1911 = vmatprep.subr.bf16.mxu0 %v1730
    %1912 = vmatpush1.bf16.msra.mxu0 %v1729
    %1913 = vmatprep.subr.bf16.mxu0 %v1738
    %1914 = vmatpush1.bf16.msra.mxu0 %v1737
    %1915 = vmatprep.subr.bf16.mxu0 %v1746
    %1916 = vmatpush1.bf16.msra.mxu0 %v1745
    %1917 = vmatprep.subr.bf16.mxu0 %v1754
    %1918 = vmatpush1.bf16.msra.mxu0 %v1753
    %1919 = vmatprep.subr.bf16.mxu0 0
    %1920 = vmatpush1.bf16.msra.mxu0 0
    %1921 = vmatprep.subr.bf16.mxu0 0
    %1922 = vmatpush1.bf16.msra.mxu0 0
    %1923 = vmatprep.subr.bf16.mxu0 0
    %1924 = vmatpush1.bf16.msra.mxu0 0
    %1925 = vmatprep.subr.bf16.mxu0 0
    %1926 = vmatpush1.bf16.msra.mxu0 0
    %1927 = vmatprep.subr.bf16.mxu0 0
    %1928 = vmatpush1.bf16.msra.mxu0 0
    %1929 = vmatprep.subr.bf16.mxu0 0
    %1930 = vmatpush1.bf16.msra.mxu0 0
    %1931 = vmatprep.subr.bf16.mxu0 0
    %1932 = vmatpush1.bf16.msra.mxu0 0
    %1933 = vmatprep.subr.bf16.mxu0 0
    %1934 = vmatpush1.bf16.msra.mxu0 0
    %1935 = vmatprep.mubr.bf16.mxu0 0
    %1936 = vmatmul.mubr.bf16.gmra.mrb[0].mxu0 %v1394
    %v1937 = vpop.f32.mrb[0].mxu0
    %v1938 = vadd.f32 %v1480, %v1937
    %v1939 = vpop.f32.mrb[0].mxu0
    %v1940 = vadd.f32 %v1484, %v1939
    %v1941 = vpop.f32.mrb[0].mxu0
    %v1942 = vpop.f32.mrb[0].mxu0
    %1943 = vdwg.mxu0
    %1944 = vmatprep.subr.bf16.mxu0 %v1700
    %1945 = vmatpush1.bf16.msra.mxu0 %v1699
    %1946 = vmatprep.subr.bf16.mxu0 %v1708
    %1947 = vmatpush1.bf16.msra.mxu0 %v1707
    %1948 = vmatprep.subr.bf16.mxu0 %v1716
    %1949 = vmatpush1.bf16.msra.mxu0 %v1715
    %1950 = vmatprep.subr.bf16.mxu0 %v1724
    %1951 = vmatpush1.bf16.msra.mxu0 %v1723
    %1952 = vmatprep.subr.bf16.mxu0 %v1732
    %1953 = vmatpush1.bf16.msra.mxu0 %v1731
    %1954 = vmatprep.subr.bf16.mxu0 %v1740
    %1955 = vmatpush1.bf16.msra.mxu0 %v1739
    %1956 = vmatprep.subr.bf16.mxu0 %v1748
    %1957 = vmatpush1.bf16.msra.mxu0 %v1747
    %1958 = vmatprep.subr.bf16.mxu0 %v1756
    %1959 = vmatpush1.bf16.msra.mxu0 %v1755
    %1960 = vmatprep.subr.bf16.mxu0 0
    %1961 = vmatpush1.bf16.msra.mxu0 0
    %1962 = vmatprep.subr.bf16.mxu0 0
    %1963 = vmatpush1.bf16.msra.mxu0 0
    %1964 = vmatprep.subr.bf16.mxu0 0
    %1965 = vmatpush1.bf16.msra.mxu0 0
    %1966 = vmatprep.subr.bf16.mxu0 0
    %1967 = vmatpush1.bf16.msra.mxu0 0
    %1968 = vmatprep.subr.bf16.mxu0 0
    %1969 = vmatpush1.bf16.msra.mxu0 0
    %1970 = vmatprep.subr.bf16.mxu0 0
    %1971 = vmatpush1.bf16.msra.mxu0 0
    %1972 = vmatprep.subr.bf16.mxu0 0
    %1973 = vmatpush1.bf16.msra.mxu0 0
    %1974 = vmatprep.subr.bf16.mxu0 0
    %1975 = vmatpush1.bf16.msra.mxu0 0
    %1976 = vmatprep.mubr.bf16.mxu0 0
    %1977 = vmatmul.mubr.bf16.gmra.mrb[0].mxu0 %v1394
    %v1978 = vpop.f32.mrb[0].mxu0
    %v1979 = vadd.f32 %v1488, %v1978
    %v1980 = vpop.f32.mrb[0].mxu0
    %v1981 = vadd.f32 %v1492, %v1980
    %v1982 = vpop.f32.mrb[0].mxu0
    %v1983 = vpop.f32.mrb[0].mxu0
    %1984 = vdwg.mxu0
    %v1985 = vmul.f32 %v1856, 1.442695
    %v1986 = vpow.pop %v1985
    %v1987 = vmul.f32 %v1858, 1.442695
    %v1988 = vpow.pop %v1987
    %v1989 = vmul.f32 %v1897, 1.442695
    %v1990 = vpow.pop %v1989
    %v1991 = vmul.f32 %v1899, 1.442695
    %v1992 = vpow.pop %v1991
    %v1993 = vmul.f32 %v1986, %v515
    %v1994 = vmul.f32 %v1988, %v517
    %v1995 = vmul.f32 %v1990, %v556
    %v1996 = vmul.f32 %v1992, %v558
    %v1997 = vadd.f32 %v1993, %v1938
    %v1998 = vadd.f32 %v1994, %v1940
    %v1999 = vadd.f32 %v1995, %v1979
    %v2000 = vadd.f32 %v1996, %v1981
    %v2001 = vpack.c.bf16 %v1997, %v1997
    %v2002 = vpack.c.bf16 %v1998, %v1998
    %v2003 = vpack.c.bf16 %v1999, %v1999
    %v2004 = vpack.c.bf16 %v2000, %v2000
    %v2005 = vld [vmem:[#allocation13] sm:$0xff]
    %v2006 = vld [vmem:[#allocation13 + $0x8] sm:$0xff]
    %v2007 = vld [vmem:[#allocation13 + $0x10] sm:$0xff]
    %v2008 = vld [vmem:[#allocation13 + $0x18] sm:$0xff]
    %v2009 = vld [vmem:[#allocation13 + $0x20] sm:$0xff]
    %v2010 = vld [vmem:[#allocation13 + $0x28] sm:$0xff]
    %v2011 = vld [vmem:[#allocation13 + $0x30] sm:$0xff]
    %v2012 = vld [vmem:[#allocation13 + $0x38] sm:$0xff]
    %v2013 = vld [vmem:[#allocation13 + $0x40] sm:$0xff]
    %v2014 = vld [vmem:[#allocation13 + $0x48] sm:$0xff]
    %v2015 = vld [vmem:[#allocation13 + $0x50] sm:$0xff]
    %v2016 = vld [vmem:[#allocation13 + $0x58] sm:$0xff]
    %v2017 = vld [vmem:[#allocation13 + $0x60] sm:$0xff]
    %v2018 = vld [vmem:[#allocation13 + $0x68] sm:$0xff]
    %v2019 = vld [vmem:[#allocation13 + $0x70] sm:$0xff]
    %v2020 = vld [vmem:[#allocation13 + $0x78] sm:$0xff]
    %v2021 = vld [vmem:[#allocation13 + $0x80] sm:$0xff]
    %v2022 = vld [vmem:[#allocation13 + $0x88] sm:$0xff]
    %v2023 = vld [vmem:[#allocation13 + $0x90] sm:$0xff]
    %v2024 = vld [vmem:[#allocation13 + $0x98] sm:$0xff]
    %v2025 = vld [vmem:[#allocation13 + $0xa0] sm:$0xff]
    %v2026 = vld [vmem:[#allocation13 + $0xa8] sm:$0xff]
    %v2027 = vld [vmem:[#allocation13 + $0xb0] sm:$0xff]
    %v2028 = vld [vmem:[#allocation13 + $0xb8] sm:$0xff]
    %v2029 = vld [vmem:[#allocation13 + $0xc0] sm:$0xff]
    %v2030 = vld [vmem:[#allocation13 + $0xc8] sm:$0xff]
    %v2031 = vld [vmem:[#allocation13 + $0xd0] sm:$0xff]
    %v2032 = vld [vmem:[#allocation13 + $0xd8] sm:$0xff]
    %v2033 = vld [vmem:[#allocation13 + $0xe0] sm:$0xff]
    %v2034 = vld [vmem:[#allocation13 + $0xe8] sm:$0xff]
    %v2035 = vld [vmem:[#allocation13 + $0xf0] sm:$0xff]
    %v2036 = vld [vmem:[#allocation13 + $0xf8] sm:$0xff]
    %v2037 = vld [vmem:[#allocation13 + $0x100] sm:$0xff]
    %v2038 = vld [vmem:[#allocation13 + $0x108] sm:$0xff]
    %v2039 = vld [vmem:[#allocation13 + $0x110] sm:$0xff]
    %v2040 = vld [vmem:[#allocation13 + $0x118] sm:$0xff]
    %v2041 = vld [vmem:[#allocation13 + $0x120] sm:$0xff]
    %v2042 = vld [vmem:[#allocation13 + $0x128] sm:$0xff]
    %v2043 = vld [vmem:[#allocation13 + $0x130] sm:$0xff]
    %v2044 = vld [vmem:[#allocation13 + $0x138] sm:$0xff]
    %v2045 = vld [vmem:[#allocation13 + $0x140] sm:$0xff]
    %v2046 = vld [vmem:[#allocation13 + $0x148] sm:$0xff]
    %v2047 = vld [vmem:[#allocation13 + $0x150] sm:$0xff]
    %v2048 = vld [vmem:[#allocation13 + $0x158] sm:$0xff]
    %v2049 = vld [vmem:[#allocation13 + $0x160] sm:$0xff]
    %v2050 = vld [vmem:[#allocation13 + $0x168] sm:$0xff]
    %v2051 = vld [vmem:[#allocation13 + $0x170] sm:$0xff]
    %v2052 = vld [vmem:[#allocation13 + $0x178] sm:$0xff]
    %v2053 = vld [vmem:[#allocation13 + $0x180] sm:$0xff]
    %v2054 = vld [vmem:[#allocation13 + $0x188] sm:$0xff]
    %v2055 = vld [vmem:[#allocation13 + $0x190] sm:$0xff]
    %v2056 = vld [vmem:[#allocation13 + $0x198] sm:$0xff]
    %v2057 = vld [vmem:[#allocation13 + $0x1a0] sm:$0xff]
    %v2058 = vld [vmem:[#allocation13 + $0x1a8] sm:$0xff]
    %v2059 = vld [vmem:[#allocation13 + $0x1b0] sm:$0xff]
    %v2060 = vld [vmem:[#allocation13 + $0x1b8] sm:$0xff]
    %v2061 = vld [vmem:[#allocation13 + $0x1c0] sm:$0xff]
    %v2062 = vld [vmem:[#allocation13 + $0x1c8] sm:$0xff]
    %v2063 = vld [vmem:[#allocation13 + $0x1d0] sm:$0xff]
    %v2064 = vld [vmem:[#allocation13 + $0x1d8] sm:$0xff]
    %v2065 = vld [vmem:[#allocation13 + $0x1e0] sm:$0xff]
    %v2066 = vld [vmem:[#allocation13 + $0x1e8] sm:$0xff]
    %v2067 = vld [vmem:[#allocation13 + $0x1f0] sm:$0xff]
    %v2068 = vld [vmem:[#allocation13 + $0x1f8] sm:$0xff]
    %v2069 = vld [vmem:[#allocation14] sm:$0xff]
    %v2070 = vld [vmem:[#allocation14 + $0x8] sm:$0xff]
    %v2071 = vld [vmem:[#allocation14 + $0x10] sm:$0xff]
    %v2072 = vld [vmem:[#allocation14 + $0x18] sm:$0xff]
    %v2073 = vld [vmem:[#allocation14 + $0x20] sm:$0xff]
    %v2074 = vld [vmem:[#allocation14 + $0x28] sm:$0xff]
    %v2075 = vld [vmem:[#allocation14 + $0x30] sm:$0xff]
    %v2076 = vld [vmem:[#allocation14 + $0x38] sm:$0xff]
    %v2077 = vld [vmem:[#allocation14 + $0x40] sm:$0xff]
    %v2078 = vld [vmem:[#allocation14 + $0x48] sm:$0xff]
    %v2079 = vld [vmem:[#allocation14 + $0x50] sm:$0xff]
    %v2080 = vld [vmem:[#allocation14 + $0x58] sm:$0xff]
    %v2081 = vld [vmem:[#allocation14 + $0x60] sm:$0xff]
    %v2082 = vld [vmem:[#allocation14 + $0x68] sm:$0xff]
    %v2083 = vld [vmem:[#allocation14 + $0x70] sm:$0xff]
    %v2084 = vld [vmem:[#allocation14 + $0x78] sm:$0xff]
    %v2101 = vunpack.c.l.b16 %v2069
    %v2102 = vunpack.c.h.b16 %v2069
    %v2103 = vunpack.c.l.b16 %v2070
    %v2104 = vunpack.c.h.b16 %v2070
    %v2105 = vunpack.c.l.b16 %v2071
    %v2106 = vunpack.c.h.b16 %v2071
    %v2107 = vunpack.c.l.b16 %v2072
    %v2108 = vunpack.c.h.b16 %v2072
    %v2109 = vunpack.c.l.b16 %v2073
    %v2110 = vunpack.c.h.b16 %v2073
    %v2111 = vunpack.c.l.b16 %v2074
    %v2112 = vunpack.c.h.b16 %v2074
    %v2113 = vunpack.c.l.b16 %v2075
    %v2114 = vunpack.c.h.b16 %v2075
    %v2115 = vunpack.c.l.b16 %v2076
    %v2116 = vunpack.c.h.b16 %v2076
    %v2117 = vunpack.c.l.b16 %v2077
    %v2118 = vunpack.c.h.b16 %v2077
    %v2119 = vunpack.c.l.b16 %v2078
    %v2120 = vunpack.c.h.b16 %v2078
    %v2121 = vunpack.c.l.b16 %v2079
    %v2122 = vunpack.c.h.b16 %v2079
    %v2123 = vunpack.c.l.b16 %v2080
    %v2124 = vunpack.c.h.b16 %v2080
    %v2125 = vunpack.c.l.b16 %v2081
    %v2126 = vunpack.c.h.b16 %v2081
    %v2127 = vunpack.c.l.b16 %v2082
    %v2128 = vunpack.c.h.b16 %v2082
    %v2129 = vunpack.c.l.b16 %v2083
    %v2130 = vunpack.c.h.b16 %v2083
    %v2131 = vunpack.c.l.b16 %v2084
    %v2132 = vunpack.c.h.b16 %v2084
    %v2133 = vpack.c.b16 %v2103, %v2101
    %v2134 = vpack.c.b16 %v2104, %v2102
    %v2135 = vpack.c.b16 %v2107, %v2105
    %v2136 = vpack.c.b16 %v2108, %v2106
    %v2137 = vpack.c.b16 %v2111, %v2109
    %v2138 = vpack.c.b16 %v2112, %v2110
    %v2139 = vpack.c.b16 %v2115, %v2113
    %v2140 = vpack.c.b16 %v2116, %v2114
    %v2141 = vpack.c.b16 %v2119, %v2117
    %v2142 = vpack.c.b16 %v2120, %v2118
    %v2143 = vpack.c.b16 %v2123, %v2121
    %v2144 = vpack.c.b16 %v2124, %v2122
    %v2145 = vpack.c.b16 %v2127, %v2125
    %v2146 = vpack.c.b16 %v2128, %v2126
    %v2147 = vpack.c.b16 %v2131, %v2129
    %v2148 = vpack.c.b16 %v2132, %v2130
    %2165 = vmatprep.subr.bf16.mxu0 %v2134
    %2166 = vmatpush1.bf16.msra.mxu0 %v2133
    %2167 = vmatprep.subr.bf16.mxu0 %v2136
    %2168 = vmatpush1.bf16.msra.mxu0 %v2135
    %2169 = vmatprep.subr.bf16.mxu0 %v2138
    %2170 = vmatpush1.bf16.msra.mxu0 %v2137
    %2171 = vmatprep.subr.bf16.mxu0 %v2140
    %2172 = vmatpush1.bf16.msra.mxu0 %v2139
    %2173 = vmatprep.subr.bf16.mxu0 %v2142
    %2174 = vmatpush1.bf16.msra.mxu0 %v2141
    %2175 = vmatprep.subr.bf16.mxu0 %v2144
    %2176 = vmatpush1.bf16.msra.mxu0 %v2143
    %2177 = vmatprep.subr.bf16.mxu0 %v2146
    %2178 = vmatpush1.bf16.msra.mxu0 %v2145
    %2179 = vmatprep.subr.bf16.mxu0 %v2148
    %2180 = vmatpush1.bf16.msra.mxu0 %v2147
    %2181 = vmatprep.subr.bf16.mxu0 0
    %2182 = vmatpush1.bf16.msra.mxu0 0
    %2183 = vmatprep.subr.bf16.mxu0 0
    %2184 = vmatpush1.bf16.msra.mxu0 0
    %2185 = vmatprep.subr.bf16.mxu0 0
    %2186 = vmatpush1.bf16.msra.mxu0 0
    %2187 = vmatprep.subr.bf16.mxu0 0
    %2188 = vmatpush1.bf16.msra.mxu0 0
    %2189 = vmatprep.subr.bf16.mxu0 0
    %2190 = vmatpush1.bf16.msra.mxu0 0
    %2191 = vmatprep.subr.bf16.mxu0 0
    %2192 = vmatpush1.bf16.msra.mxu0 0
    %2193 = vmatprep.subr.bf16.mxu0 0
    %2194 = vmatpush1.bf16.msra.mxu0 0
    %2195 = vmatprep.subr.bf16.mxu0 0
    %2196 = vmatpush1.bf16.msra.mxu0 0
    %2197 = vmatprep.mubr.bf16.mxu0 0
    %2198 = vmatmul.mubr.bf16.gmra.mrb[0].mxu0 %v602
    %v2199 = vpop.f32.mrb[0].mxu0
    %v2200 = vadd.f32 0.0, %v2199
    %v2201 = vpop.f32.mrb[0].mxu0
    %v2202 = vadd.f32 0.0, %v2201
    %v2203 = vpop.f32.mrb[0].mxu0
    %v2204 = vpop.f32.mrb[0].mxu0
    %2205 = vdwg.mxu0
    %v2270 = vunpack.c.l.b16 %v2005
    %v2271 = vunpack.c.h.b16 %v2005
    %v2272 = vunpack.c.l.b16 %v2006
    %v2273 = vunpack.c.h.b16 %v2006
    %v2274 = vunpack.c.l.b16 %v2007
    %v2275 = vunpack.c.h.b16 %v2007
    %v2276 = vunpack.c.l.b16 %v2008
    %v2277 = vunpack.c.h.b16 %v2008
    %v2278 = vunpack.c.l.b16 %v2009
    %v2279 = vunpack.c.h.b16 %v2009
    %v2280 = vunpack.c.l.b16 %v2010
    %v2281 = vunpack.c.h.b16 %v2010
    %v2282 = vunpack.c.l.b16 %v2011
    %v2283 = vunpack.c.h.b16 %v2011
    %v2284 = vunpack.c.l.b16 %v2012
    %v2285 = vunpack.c.h.b16 %v2012
    %v2286 = vunpack.c.l.b16 %v2013
    %v2287 = vunpack.c.h.b16 %v2013
    %v2288 = vunpack.c.l.b16 %v2014
    %v2289 = vunpack.c.h.b16 %v2014
    %v2290 = vunpack.c.l.b16 %v2015
    %v2291 = vunpack.c.h.b16 %v2015
    %v2292 = vunpack.c.l.b16 %v2016
    %v2293 = vunpack.c.h.b16 %v2016
    %v2294 = vunpack.c.l.b16 %v2017
    %v2295 = vunpack.c.h.b16 %v2017
    %v2296 = vunpack.c.l.b16 %v2018
    %v2297 = vunpack.c.h.b16 %v2018
    %v2298 = vunpack.c.l.b16 %v2019
    %v2299 = vunpack.c.h.b16 %v2019
    %v2300 = vunpack.c.l.b16 %v2020
    %v2301 = vunpack.c.h.b16 %v2020
    %v2302 = vunpack.c.l.b16 %v2021
    %v2303 = vunpack.c.h.b16 %v2021
    %v2304 = vunpack.c.l.b16 %v2022
    %v2305 = vunpack.c.h.b16 %v2022
    %v2306 = vunpack.c.l.b16 %v2023
    %v2307 = vunpack.c.h.b16 %v2023
    %v2308 = vunpack.c.l.b16 %v2024
    %v2309 = vunpack.c.h.b16 %v2024
    %v2310 = vunpack.c.l.b16 %v2025
    %v2311 = vunpack.c.h.b16 %v2025
    %v2312 = vunpack.c.l.b16 %v2026
    %v2313 = vunpack.c.h.b16 %v2026
    %v2314 = vunpack.c.l.b16 %v2027
    %v2315 = vunpack.c.h.b16 %v2027
    %v2316 = vunpack.c.l.b16 %v2028
    %v2317 = vunpack.c.h.b16 %v2028
    %v2318 = vunpack.c.l.b16 %v2029
    %v2319 = vunpack.c.h.b16 %v2029
    %v2320 = vunpack.c.l.b16 %v2030
    %v2321 = vunpack.c.h.b16 %v2030
    %v2322 = vunpack.c.l.b16 %v2031
    %v2323 = vunpack.c.h.b16 %v2031
    %v2324 = vunpack.c.l.b16 %v2032
    %v2325 = vunpack.c.h.b16 %v2032
    %v2326 = vunpack.c.l.b16 %v2033
    %v2327 = vunpack.c.h.b16 %v2033
    %v2328 = vunpack.c.l.b16 %v2034
    %v2329 = vunpack.c.h.b16 %v2034
    %v2330 = vunpack.c.l.b16 %v2035
    %v2331 = vunpack.c.h.b16 %v2035
    %v2332 = vunpack.c.l.b16 %v2036
    %v2333 = vunpack.c.h.b16 %v2036
    %v2334 = vunpack.c.l.b16 %v2037
    %v2335 = vunpack.c.h.b16 %v2037
    %v2336 = vunpack.c.l.b16 %v2038
    %v2337 = vunpack.c.h.b16 %v2038
    %v2338 = vunpack.c.l.b16 %v2039
    %v2339 = vunpack.c.h.b16 %v2039
    %v2340 = vunpack.c.l.b16 %v2040
    %v2341 = vunpack.c.h.b16 %v2040
    %v2342 = vunpack.c.l.b16 %v2041
    %v2343 = vunpack.c.h.b16 %v2041
    %v2344 = vunpack.c.l.b16 %v2042
    %v2345 = vunpack.c.h.b16 %v2042
    %v2346 = vunpack.c.l.b16 %v2043
    %v2347 = vunpack.c.h.b16 %v2043
    %v2348 = vunpack.c.l.b16 %v2044
    %v2349 = vunpack.c.h.b16 %v2044
    %v2350 = vunpack.c.l.b16 %v2045
    %v2351 = vunpack.c.h.b16 %v2045
    %v2352 = vunpack.c.l.b16 %v2046
    %v2353 = vunpack.c.h.b16 %v2046
    %v2354 = vunpack.c.l.b16 %v2047
    %v2355 = vunpack.c.h.b16 %v2047
    %v2356 = vunpack.c.l.b16 %v2048
    %v2357 = vunpack.c.h.b16 %v2048
    %v2358 = vunpack.c.l.b16 %v2049
    %v2359 = vunpack.c.h.b16 %v2049
    %v2360 = vunpack.c.l.b16 %v2050
    %v2361 = vunpack.c.h.b16 %v2050
    %v2362 = vunpack.c.l.b16 %v2051
    %v2363 = vunpack.c.h.b16 %v2051
    %v2364 = vunpack.c.l.b16 %v2052
    %v2365 = vunpack.c.h.b16 %v2052
    %v2366 = vunpack.c.l.b16 %v2053
    %v2367 = vunpack.c.h.b16 %v2053
    %v2368 = vunpack.c.l.b16 %v2054
    %v2369 = vunpack.c.h.b16 %v2054
    %v2370 = vunpack.c.l.b16 %v2055
    %v2371 = vunpack.c.h.b16 %v2055
    %v2372 = vunpack.c.l.b16 %v2056
    %v2373 = vunpack.c.h.b16 %v2056
    %v2374 = vunpack.c.l.b16 %v2057
    %v2375 = vunpack.c.h.b16 %v2057
    %v2376 = vunpack.c.l.b16 %v2058
    %v2377 = vunpack.c.h.b16 %v2058
    %v2378 = vunpack.c.l.b16 %v2059
    %v2379 = vunpack.c.h.b16 %v2059
    %v2380 = vunpack.c.l.b16 %v2060
    %v2381 = vunpack.c.h.b16 %v2060
    %v2382 = vunpack.c.l.b16 %v2061
    %v2383 = vunpack.c.h.b16 %v2061
    %v2384 = vunpack.c.l.b16 %v2062
    %v2385 = vunpack.c.h.b16 %v2062
    %v2386 = vunpack.c.l.b16 %v2063
    %v2387 = vunpack.c.h.b16 %v2063
    %v2388 = vunpack.c.l.b16 %v2064
    %v2389 = vunpack.c.h.b16 %v2064
    %v2390 = vunpack.c.l.b16 %v2065
    %v2391 = vunpack.c.h.b16 %v2065
    %v2392 = vunpack.c.l.b16 %v2066
    %v2393 = vunpack.c.h.b16 %v2066
    %v2394 = vunpack.c.l.b16 %v2067
    %v2395 = vunpack.c.h.b16 %v2067
    %v2396 = vunpack.c.l.b16 %v2068
    %v2397 = vunpack.c.h.b16 %v2068
    %v2398 = vpack.c.b16 %v2272, %v2270
    %v2399 = vpack.c.b16 %v2273, %v2271
    %v2400 = vpack.c.b16 %v2276, %v2274
    %v2401 = vpack.c.b16 %v2277, %v2275
    %v2402 = vpack.c.b16 %v2280, %v2278
    %v2403 = vpack.c.b16 %v2281, %v2279
    %v2404 = vpack.c.b16 %v2284, %v2282
    %v2405 = vpack.c.b16 %v2285, %v2283
    %v2406 = vpack.c.b16 %v2288, %v2286
    %v2407 = vpack.c.b16 %v2289, %v2287
    %v2408 = vpack.c.b16 %v2292, %v2290
    %v2409 = vpack.c.b16 %v2293, %v2291
    %v2410 = vpack.c.b16 %v2296, %v2294
    %v2411 = vpack.c.b16 %v2297, %v2295
    %v2412 = vpack.c.b16 %v2300, %v2298
    %v2413 = vpack.c.b16 %v2301, %v2299
    %v2414 = vpack.c.b16 %v2304, %v2302
    %v2415 = vpack.c.b16 %v2305, %v2303
    %v2416 = vpack.c.b16 %v2308, %v2306
    %v2417 = vpack.c.b16 %v2309, %v2307
    %v2418 = vpack.c.b16 %v2312, %v2310
    %v2419 = vpack.c.b16 %v2313, %v2311
    %v2420 = vpack.c.b16 %v2316, %v2314
    %v2421 = vpack.c.b16 %v2317, %v2315
    %v2422 = vpack.c.b16 %v2320, %v2318
    %v2423 = vpack.c.b16 %v2321, %v2319
    %v2424 = vpack.c.b16 %v2324, %v2322
    %v2425 = vpack.c.b16 %v2325, %v2323
    %v2426 = vpack.c.b16 %v2328, %v2326
    %v2427 = vpack.c.b16 %v2329, %v2327
    %v2428 = vpack.c.b16 %v2332, %v2330
    %v2429 = vpack.c.b16 %v2333, %v2331
    %v2430 = vpack.c.b16 %v2336, %v2334
    %v2431 = vpack.c.b16 %v2337, %v2335
    %v2432 = vpack.c.b16 %v2340, %v2338
    %v2433 = vpack.c.b16 %v2341, %v2339
    %v2434 = vpack.c.b16 %v2344, %v2342
    %v2435 = vpack.c.b16 %v2345, %v2343
    %v2436 = vpack.c.b16 %v2348, %v2346
    %v2437 = vpack.c.b16 %v2349, %v2347
    %v2438 = vpack.c.b16 %v2352, %v2350
    %v2439 = vpack.c.b16 %v2353, %v2351
    %v2440 = vpack.c.b16 %v2356, %v2354
    %v2441 = vpack.c.b16 %v2357, %v2355
    %v2442 = vpack.c.b16 %v2360, %v2358
    %v2443 = vpack.c.b16 %v2361, %v2359
    %v2444 = vpack.c.b16 %v2364, %v2362
    %v2445 = vpack.c.b16 %v2365, %v2363
    %v2446 = vpack.c.b16 %v2368, %v2366
    %v2447 = vpack.c.b16 %v2369, %v2367
    %v2448 = vpack.c.b16 %v2372, %v2370
    %v2449 = vpack.c.b16 %v2373, %v2371
    %v2450 = vpack.c.b16 %v2376, %v2374
    %v2451 = vpack.c.b16 %v2377, %v2375
    %v2452 = vpack.c.b16 %v2380, %v2378
    %v2453 = vpack.c.b16 %v2381, %v2379
    %v2454 = vpack.c.b16 %v2384, %v2382
    %v2455 = vpack.c.b16 %v2385, %v2383
    %v2456 = vpack.c.b16 %v2388, %v2386
    %v2457 = vpack.c.b16 %v2389, %v2387
    %v2458 = vpack.c.b16 %v2392, %v2390
    %v2459 = vpack.c.b16 %v2393, %v2391
    %v2460 = vpack.c.b16 %v2396, %v2394
    %v2461 = vpack.c.b16 %v2397, %v2395
    %2526 = vmatprep.subr.bf16.mxu0 %v2399
    %2527 = vmatpush1.bf16.msra.mxu0 %v2398
    %2528 = vmatprep.subr.bf16.mxu0 %v2401
    %2529 = vmatpush1.bf16.msra.mxu0 %v2400
    %2530 = vmatprep.subr.bf16.mxu0 %v2403
    %2531 = vmatpush1.bf16.msra.mxu0 %v2402
    %2532 = vmatprep.subr.bf16.mxu0 %v2405
    %2533 = vmatpush1.bf16.msra.mxu0 %v2404
    %2534 = vmatprep.subr.bf16.mxu0 %v2407
    %2535 = vmatpush1.bf16.msra.mxu0 %v2406
    %2536 = vmatprep.subr.bf16.mxu0 %v2409
    %2537 = vmatpush1.bf16.msra.mxu0 %v2408
    %2538 = vmatprep.subr.bf16.mxu0 %v2411
    %2539 = vmatpush1.bf16.msra.mxu0 %v2410
    %2540 = vmatprep.subr.bf16.mxu0 %v2413
    %2541 = vmatpush1.bf16.msra.mxu0 %v2412
    %2542 = vmatprep.subr.bf16.mxu0 %v2415
    %2543 = vmatpush1.bf16.msra.mxu0 %v2414
    %2544 = vmatprep.subr.bf16.mxu0 %v2417
    %2545 = vmatpush1.bf16.msra.mxu0 %v2416
    %2546 = vmatprep.subr.bf16.mxu0 %v2419
    %2547 = vmatpush1.bf16.msra.mxu0 %v2418
    %2548 = vmatprep.subr.bf16.mxu0 %v2421
    %2549 = vmatpush1.bf16.msra.mxu0 %v2420
    %2550 = vmatprep.subr.bf16.mxu0 %v2423
    %2551 = vmatpush1.bf16.msra.mxu0 %v2422
    %2552 = vmatprep.subr.bf16.mxu0 %v2425
    %2553 = vmatpush1.bf16.msra.mxu0 %v2424
    %2554 = vmatprep.subr.bf16.mxu0 %v2427
    %2555 = vmatpush1.bf16.msra.mxu0 %v2426
    %2556 = vmatprep.subr.bf16.mxu0 %v2429
    %2557 = vmatpush1.bf16.msra.mxu0 %v2428
    %2558 = vmatprep.mubr.bf16.mxu0 %v2002
    %2559 = vmatmul.mubr.bf16.gmra.mrb[0].mxu0 %v2001
    %v2560 = vpop.f32.mrb[0].mxu0
    %v2561 = vadd.f32 %v2200, %v2560
    %v2562 = vpop.f32.mrb[0].mxu0
    %v2563 = vadd.f32 %v2202, %v2562
    %v2564 = vpop.f32.mrb[0].mxu0
    %v2565 = vpop.f32.mrb[0].mxu0
    %2566 = vdwg.mxu0
    %2567 = vmatprep.subr.bf16.mxu0 %v2431
    %2568 = vmatpush1.bf16.msra.mxu0 %v2430
    %2569 = vmatprep.subr.bf16.mxu0 %v2433
    %2570 = vmatpush1.bf16.msra.mxu0 %v2432
    %2571 = vmatprep.subr.bf16.mxu0 %v2435
    %2572 = vmatpush1.bf16.msra.mxu0 %v2434
    %2573 = vmatprep.subr.bf16.mxu0 %v2437
    %2574 = vmatpush1.bf16.msra.mxu0 %v2436
    %2575 = vmatprep.subr.bf16.mxu0 %v2439
    %2576 = vmatpush1.bf16.msra.mxu0 %v2438
    %2577 = vmatprep.subr.bf16.mxu0 %v2441
    %2578 = vmatpush1.bf16.msra.mxu0 %v2440
    %2579 = vmatprep.subr.bf16.mxu0 %v2443
    %2580 = vmatpush1.bf16.msra.mxu0 %v2442
    %2581 = vmatprep.subr.bf16.mxu0 %v2445
    %2582 = vmatpush1.bf16.msra.mxu0 %v2444
    %2583 = vmatprep.subr.bf16.mxu0 %v2447
    %2584 = vmatpush1.bf16.msra.mxu0 %v2446
    %2585 = vmatprep.subr.bf16.mxu0 %v2449
    %2586 = vmatpush1.bf16.msra.mxu0 %v2448
    %2587 = vmatprep.subr.bf16.mxu0 %v2451
    %2588 = vmatpush1.bf16.msra.mxu0 %v2450
    %2589 = vmatprep.subr.bf16.mxu0 %v2453
    %2590 = vmatpush1.bf16.msra.mxu0 %v2452
    %2591 = vmatprep.subr.bf16.mxu0 %v2455
    %2592 = vmatpush1.bf16.msra.mxu0 %v2454
    %2593 = vmatprep.subr.bf16.mxu0 %v2457
    %2594 = vmatpush1.bf16.msra.mxu0 %v2456
    %2595 = vmatprep.subr.bf16.mxu0 %v2459
    %2596 = vmatpush1.bf16.msra.mxu0 %v2458
    %2597 = vmatprep.subr.bf16.mxu0 %v2461
    %2598 = vmatpush1.bf16.msra.mxu0 %v2460
    %2599 = vmatprep.mubr.bf16.mxu0 %v2004
    %2600 = vmatmul.mubr.bf16.gmra.mrb[0].mxu0 %v2003
    %v2601 = vpop.f32.mrb[0].mxu0
    %v2602 = vadd.f32 %v2561, %v2601
    %v2603 = vpop.f32.mrb[0].mxu0
    %v2604 = vadd.f32 %v2563, %v2603
    %v2605 = vpop.f32.mrb[0].mxu0
    %v2606 = vpop.f32.mrb[0].mxu0
    %2607 = vdwg.mxu0
    %v2608 = vld [vmem:[%s11] sm:$0x3]
    %v2610 = vlaneseq
    %v2611 = vshrl.u32 %v2610, 7
    %v2612 = vsub.s32 0, %v2611
    %v2613 = vrot.slane %v2608, %v2612
    %v2614 = vlaneseq
    %v2615 = vshrl.u32 %v2614, 7
    %v2616 = vsub.s32 1, %v2615
    %v2617 = vrot.slane %v2608, %v2616
    %v2620 = vadd.f32 %v2602, %v2613
    %v2621 = vadd.f32 %v2604, %v2617
    %v2622 = vpack.c.bf16 %v2621, %v2621
    %v2623 = vld [vmem:[#allocation16] sm:$0xf]
    %v2624 = vld [vmem:[#allocation16 + $0x4] sm:$0xf]
    %v2625 = vld [vmem:[#allocation16 + $0x8] sm:$0xf]
    %v2626 = vld [vmem:[#allocation16 + $0xc] sm:$0xf]
    %v2627 = vld [vmem:[#allocation16 + $0x10] sm:$0xf]
    %v2628 = vld [vmem:[#allocation16 + $0x14] sm:$0xf]
    %v2629 = vld [vmem:[#allocation16 + $0x18] sm:$0xf]
    %v2630 = vld [vmem:[#allocation16 + $0x1c] sm:$0xf]
    %v2631 = vld [vmem:[#allocation16 + $0x20] sm:$0xf]
    %v2632 = vld [vmem:[#allocation16 + $0x24] sm:$0xf]
    %v2633 = vld [vmem:[#allocation16 + $0x28] sm:$0xf]
    %v2634 = vld [vmem:[#allocation16 + $0x2c] sm:$0xf]
    %v2635 = vld [vmem:[#allocation16 + $0x30] sm:$0xf]
    %v2636 = vld [vmem:[#allocation16 + $0x34] sm:$0xf]
    %v2637 = vld [vmem:[#allocation16 + $0x38] sm:$0xf]
    %v2638 = vld [vmem:[#allocation16 + $0x3c] sm:$0xf]
    %v2639 = vld [vmem:[%s13] sm:$0x1]
    %v2641 = vlaneseq
    %v2642 = vshrl.u32 %v2641, 7
    %v2643 = vsub.s32 0, %v2642
    %v2644 = vrot.slane %v2639, %v2643
    %v2662 = vunpack.c.l.b16 %v2623
    %v2663 = vunpack.c.l.b16 %v2624
    %v2664 = vunpack.c.l.b16 %v2625
    %v2665 = vunpack.c.l.b16 %v2626
    %v2666 = vunpack.c.l.b16 %v2627
    %v2667 = vunpack.c.l.b16 %v2628
    %v2668 = vunpack.c.l.b16 %v2629
    %v2669 = vunpack.c.l.b16 %v2630
    %v2670 = vunpack.c.l.b16 %v2631
    %v2671 = vunpack.c.l.b16 %v2632
    %v2672 = vunpack.c.l.b16 %v2633
    %v2673 = vunpack.c.l.b16 %v2634
    %v2674 = vunpack.c.l.b16 %v2635
    %v2675 = vunpack.c.l.b16 %v2636
    %v2676 = vunpack.c.l.b16 %v2637
    %v2677 = vunpack.c.l.b16 %v2638
    %v2678 = vpack.c.b16 %v2663, %v2662
    %v2679 = vpack.c.b16 %v2665, %v2664
    %v2680 = vpack.c.b16 %v2667, %v2666
    %v2681 = vpack.c.b16 %v2669, %v2668
    %v2682 = vpack.c.b16 %v2671, %v2670
    %v2683 = vpack.c.b16 %v2673, %v2672
    %v2684 = vpack.c.b16 %v2675, %v2674
    %v2685 = vpack.c.b16 %v2677, %v2676
    %2694 = vmatprep.subr.bf16.mxu0 0
    %2695 = vmatpush1.bf16.msra.mxu0 %v2678
    %2696 = vmatprep.subr.bf16.mxu0 0
    %2697 = vmatpush1.bf16.msra.mxu0 %v2679
    %2698 = vmatprep.subr.bf16.mxu0 0
    %2699 = vmatpush1.bf16.msra.mxu0 %v2680
    %2700 = vmatprep.subr.bf16.mxu0 0
    %2701 = vmatpush1.bf16.msra.mxu0 %v2681
    %2702 = vmatprep.subr.bf16.mxu0 0
    %2703 = vmatpush1.bf16.msra.mxu0 %v2682
    %2704 = vmatprep.subr.bf16.mxu0 0
    %2705 = vmatpush1.bf16.msra.mxu0 %v2683
    %2706 = vmatprep.subr.bf16.mxu0 0
    %2707 = vmatpush1.bf16.msra.mxu0 %v2684
    %2708 = vmatprep.subr.bf16.mxu0 0
    %2709 = vmatpush1.bf16.msra.mxu0 %v2685
    %2710 = vmatprep.subr.bf16.mxu0 0
    %2711 = vmatpush1.bf16.msra.mxu0 0
    %2712 = vmatprep.subr.bf16.mxu0 0
    %2713 = vmatpush1.bf16.msra.mxu0 0
    %2714 = vmatprep.subr.bf16.mxu0 0
    %2715 = vmatpush1.bf16.msra.mxu0 0
    %2716 = vmatprep.subr.bf16.mxu0 0
    %2717 = vmatpush1.bf16.msra.mxu0 0
    %2718 = vmatprep.subr.bf16.mxu0 0
    %2719 = vmatpush1.bf16.msra.mxu0 0
    %2720 = vmatprep.subr.bf16.mxu0 0
    %2721 = vmatpush1.bf16.msra.mxu0 0
    %2722 = vmatprep.subr.bf16.mxu0 0
    %2723 = vmatpush1.bf16.msra.mxu0 0
    %2724 = vmatprep.subr.bf16.mxu0 0
    %2725 = vmatpush1.bf16.msra.mxu0 0
    %2726 = vmatprep.mubr.bf16.mxu0 0
    %2727 = vmatmul.mubr.bf16.gmra.mrb[0].mxu0 %v2622
    %v2728 = vpop.f32.mrb[0].mxu0
    %v2729 = vadd.f32 %v2644, %v2728
    %v2730 = vpop.f32.mrb[0].mxu0
    %v2731 = vpop.f32.mrb[0].mxu0
    %v2732 = vpop.f32.mrb[0].mxu0
    %2733 = vdwg.mxu0
    %v2734 = vrot.slane %v2729, 4
    %v2735 = vadd.f32 %v2729, %v2734
    %v2736 = vrot.slane %v2735, 2
    %v2737 = vadd.f32 %v2735, %v2736
    %v2738 = vrot.slane %v2737, 1
    %v2739 = vadd.f32 %v2737, %v2738
    %v2740 = vmul.f32 %v2739, %v720
    %v2741 = vmul.f32 %v2729, %v2729
    %v2742 = vrot.slane %v2741, 4
    %v2743 = vadd.f32 %v2741, %v2742
    %v2744 = vrot.slane %v2743, 2
    %v2745 = vadd.f32 %v2743, %v2744
    %v2746 = vrot.slane %v2745, 1
    %v2747 = vadd.f32 %v2745, %v2746
    %v2748 = vmul.f32 %v2747, %v720
    %v2749 = vmul.f32 %v2740, %v2740
    %v2750 = vsub.f32 %v2748, %v2749
    %v2751 = vld [vmem:[%s14] sm:$0x1]
    %v2752 = vsub.f32 %v2729, %v2740
    %v2754 = vlaneseq
    %v2755 = vshrl.u32 %v2754, 7
    %v2756 = vsub.s32 0, %v2755
    %v2757 = vrot.slane %v2751, %v2756
    %v2759 = vmul.f32 %v2757, %v2752
    %v2760 = vadd.f32 %v2750, 1e-05
    %v2761 = vrsqrt.pop %v2760
    %v2762 = vmul.f32 %v2759, %v2761
    %v2763 = vld [vmem:[%s15] sm:$0x1]
    %v2765 = vlaneseq
    %v2766 = vshrl.u32 %v2765, 7
    %v2767 = vsub.s32 0, %v2766
    %v2768 = vrot.slane %v2763, %v2767
    %v2770 = vadd.f32 %v2762, %v2768
    %v2771 = vxor.u32 %v2770, 2147483648
    %v2772 = vmul.f32 %v2771, 1.442695
    %v2773 = vpow.pop %v2772
    %v2774 = vadd.f32 %v2773, 1.0
    %v2775 = vrcp.pop %v2774
    %v2776 = vmul.f32 1.0, %v2775
    %v2777 = vpack.c.bf16 %v2776, %v2776
    %s2778 = scalar_lea.vmem [#allocation16], 64
    %v2779 = vld [vmem:[%s2778] sm:$0xf]
    %v2780 = vld [vmem:[%s2778 + $0x4] sm:$0xf]
    %v2781 = vld [vmem:[%s2778 + $0x8] sm:$0xf]
    %v2782 = vld [vmem:[%s2778 + $0xc] sm:$0xf]
    %v2783 = vld [vmem:[%s2778 + $0x10] sm:$0xf]
    %v2784 = vld [vmem:[%s2778 + $0x14] sm:$0xf]
    %v2785 = vld [vmem:[%s2778 + $0x18] sm:$0xf]
    %v2786 = vld [vmem:[%s2778 + $0x1c] sm:$0xf]
    %v2787 = vld [vmem:[%s2778 + $0x20] sm:$0xf]
    %v2788 = vld [vmem:[%s2778 + $0x24] sm:$0xf]
    %v2789 = vld [vmem:[%s2778 + $0x28] sm:$0xf]
    %v2790 = vld [vmem:[%s2778 + $0x2c] sm:$0xf]
    %v2791 = vld [vmem:[%s2778 + $0x30] sm:$0xf]
    %v2792 = vld [vmem:[%s2778 + $0x34] sm:$0xf]
    %v2793 = vld [vmem:[%s2778 + $0x38] sm:$0xf]
    %v2794 = vld [vmem:[%s2778 + $0x3c] sm:$0xf]
    %s2795 = scalar_lea.vmem %s13, 1
    %v2796 = vld [vmem:[%s2795] sm:$0x1]
    %v2798 = vlaneseq
    %v2799 = vshrl.u32 %v2798, 7
    %v2800 = vsub.s32 0, %v2799
    %v2801 = vrot.slane %v2796, %v2800
    %v2819 = vunpack.c.l.b16 %v2779
    %v2820 = vunpack.c.l.b16 %v2780
    %v2821 = vunpack.c.l.b16 %v2781
    %v2822 = vunpack.c.l.b16 %v2782
    %v2823 = vunpack.c.l.b16 %v2783
    %v2824 = vunpack.c.l.b16 %v2784
    %v2825 = vunpack.c.l.b16 %v2785
    %v2826 = vunpack.c.l.b16 %v2786
    %v2827 = vunpack.c.l.b16 %v2787
    %v2828 = vunpack.c.l.b16 %v2788
    %v2829 = vunpack.c.l.b16 %v2789
    %v2830 = vunpack.c.l.b16 %v2790
    %v2831 = vunpack.c.l.b16 %v2791
    %v2832 = vunpack.c.l.b16 %v2792
    %v2833 = vunpack.c.l.b16 %v2793
    %v2834 = vunpack.c.l.b16 %v2794
    %v2835 = vpack.c.b16 %v2820, %v2819
    %v2836 = vpack.c.b16 %v2822, %v2821
    %v2837 = vpack.c.b16 %v2824, %v2823
    %v2838 = vpack.c.b16 %v2826, %v2825
    %v2839 = vpack.c.b16 %v2828, %v2827
    %v2840 = vpack.c.b16 %v2830, %v2829
    %v2841 = vpack.c.b16 %v2832, %v2831
    %v2842 = vpack.c.b16 %v2834, %v2833
    %2851 = vmatprep.subr.bf16.mxu0 0
    %2852 = vmatpush1.bf16.msra.mxu0 %v2835
    %2853 = vmatprep.subr.bf16.mxu0 0
    %2854 = vmatpush1.bf16.msra.mxu0 %v2836
    %2855 = vmatprep.subr.bf16.mxu0 0
    %2856 = vmatpush1.bf16.msra.mxu0 %v2837
    %2857 = vmatprep.subr.bf16.mxu0 0
    %2858 = vmatpush1.bf16.msra.mxu0 %v2838
    %2859 = vmatprep.subr.bf16.mxu0 0
    %2860 = vmatpush1.bf16.msra.mxu0 %v2839
    %2861 = vmatprep.subr.bf16.mxu0 0
    %2862 = vmatpush1.bf16.msra.mxu0 %v2840
    %2863 = vmatprep.subr.bf16.mxu0 0
    %2864 = vmatpush1.bf16.msra.mxu0 %v2841
    %2865 = vmatprep.subr.bf16.mxu0 0
    %2866 = vmatpush1.bf16.msra.mxu0 %v2842
    %2867 = vmatprep.subr.bf16.mxu0 0
    %2868 = vmatpush1.bf16.msra.mxu0 0
    %2869 = vmatprep.subr.bf16.mxu0 0
    %2870 = vmatpush1.bf16.msra.mxu0 0
    %2871 = vmatprep.subr.bf16.mxu0 0
    %2872 = vmatpush1.bf16.msra.mxu0 0
    %2873 = vmatprep.subr.bf16.mxu0 0
    %2874 = vmatpush1.bf16.msra.mxu0 0
    %2875 = vmatprep.subr.bf16.mxu0 0
    %2876 = vmatpush1.bf16.msra.mxu0 0
    %2877 = vmatprep.subr.bf16.mxu0 0
    %2878 = vmatpush1.bf16.msra.mxu0 0
    %2879 = vmatprep.subr.bf16.mxu0 0
    %2880 = vmatpush1.bf16.msra.mxu0 0
    %2881 = vmatprep.subr.bf16.mxu0 0
    %2882 = vmatpush1.bf16.msra.mxu0 0
    %2883 = vmatprep.mubr.bf16.mxu0 0
    %2884 = vmatmul.mubr.bf16.gmra.mrb[0].mxu0 %v2777
    %v2885 = vpop.f32.mrb[0].mxu0
    %v2886 = vadd.f32 %v2801, %v2885
    %v2887 = vpop.f32.mrb[0].mxu0
    %v2888 = vpop.f32.mrb[0].mxu0
    %v2889 = vpop.f32.mrb[0].mxu0
    %2890 = vdwg.mxu0
    %v2891 = vrot.slane %v2886, 4
    %v2892 = vadd.f32 %v2886, %v2891
    %v2893 = vrot.slane %v2892, 2
    %v2894 = vadd.f32 %v2892, %v2893
    %v2895 = vrot.slane %v2894, 1
    %v2896 = vadd.f32 %v2894, %v2895
    %v2897 = vmul.f32 %v2896, %v720
    %v2898 = vmul.f32 %v2886, %v2886
    %v2899 = vrot.slane %v2898, 4
    %v2900 = vadd.f32 %v2898, %v2899
    %v2901 = vrot.slane %v2900, 2
    %v2902 = vadd.f32 %v2900, %v2901
    %v2903 = vrot.slane %v2902, 1
    %v2904 = vadd.f32 %v2902, %v2903
    %v2905 = vmul.f32 %v2904, %v720
    %v2906 = vmul.f32 %v2897, %v2897
    %v2907 = vsub.f32 %v2905, %v2906
    %s2908 = scalar_lea.vmem %s14, 1
    %v2909 = vld [vmem:[%s2908] sm:$0x1]
    %v2910 = vsub.f32 %v2886, %v2897
    %v2912 = vlaneseq
    %v2913 = vshrl.u32 %v2912, 7
    %v2914 = vsub.s32 0, %v2913
    %v2915 = vrot.slane %v2909, %v2914
    %v2917 = vmul.f32 %v2915, %v2910
    %v2918 = vadd.f32 %v2907, 1e-05
    %v2919 = vrsqrt.pop %v2918
    %v2920 = vmul.f32 %v2917, %v2919
    %s2921 = scalar_lea.vmem %s15, 1
    %v2922 = vld [vmem:[%s2921] sm:$0x1]
    %v2924 = vlaneseq
    %v2925 = vshrl.u32 %v2924, 7
    %v2926 = vsub.s32 0, %v2925
    %v2927 = vrot.slane %v2922, %v2926
    %v2929 = vadd.f32 %v2920, %v2927
    %v2930 = vxor.u32 %v2929, 2147483648
    %v2931 = vmul.f32 %v2930, 1.442695
    %v2932 = vpow.pop %v2931
    %v2933 = vadd.f32 %v2932, 1.0
    %v2934 = vrcp.pop %v2933
    %v2935 = vmul.f32 1.0, %v2934
    %v2936 = vpack.c.bf16 %v2935, %v2935
    %s2937 = scalar_lea.vmem [#allocation16], 128
    %v2938 = vld [vmem:[%s2937] sm:$0xf]
    %v2939 = vld [vmem:[%s2937 + $0x4] sm:$0xf]
    %v2940 = vld [vmem:[%s2937 + $0x8] sm:$0xf]
    %v2941 = vld [vmem:[%s2937 + $0xc] sm:$0xf]
    %v2942 = vld [vmem:[%s2937 + $0x10] sm:$0xf]
    %v2943 = vld [vmem:[%s2937 + $0x14] sm:$0xf]
    %v2944 = vld [vmem:[%s2937 + $0x18] sm:$0xf]
    %v2945 = vld [vmem:[%s2937 + $0x1c] sm:$0xf]
    %v2946 = vld [vmem:[%s2937 + $0x20] sm:$0xf]
    %v2947 = vld [vmem:[%s2937 + $0x24] sm:$0xf]
    %v2948 = vld [vmem:[%s2937 + $0x28] sm:$0xf]
    %v2949 = vld [vmem:[%s2937 + $0x2c] sm:$0xf]
    %v2950 = vld [vmem:[%s2937 + $0x30] sm:$0xf]
    %v2951 = vld [vmem:[%s2937 + $0x34] sm:$0xf]
    %v2952 = vld [vmem:[%s2937 + $0x38] sm:$0xf]
    %v2953 = vld [vmem:[%s2937 + $0x3c] sm:$0xf]
    %s2954 = scalar_lea.vmem %s13, 2
    %v2955 = vld [vmem:[%s2954] sm:$0x1]
    %v2957 = vlaneseq
    %v2958 = vshrl.u32 %v2957, 7
    %v2959 = vsub.s32 0, %v2958
    %v2960 = vrot.slane %v2955, %v2959
    %v2978 = vunpack.c.l.b16 %v2938
    %v2979 = vunpack.c.l.b16 %v2939
    %v2980 = vunpack.c.l.b16 %v2940
    %v2981 = vunpack.c.l.b16 %v2941
    %v2982 = vunpack.c.l.b16 %v2942
    %v2983 = vunpack.c.l.b16 %v2943
    %v2984 = vunpack.c.l.b16 %v2944
    %v2985 = vunpack.c.l.b16 %v2945
    %v2986 = vunpack.c.l.b16 %v2946
    %v2987 = vunpack.c.l.b16 %v2947
    %v2988 = vunpack.c.l.b16 %v2948
    %v2989 = vunpack.c.l.b16 %v2949
    %v2990 = vunpack.c.l.b16 %v2950
    %v2991 = vunpack.c.l.b16 %v2951
    %v2992 = vunpack.c.l.b16 %v2952
    %v2993 = vunpack.c.l.b16 %v2953
    %v2994 = vpack.c.b16 %v2979, %v2978
    %v2995 = vpack.c.b16 %v2981, %v2980
    %v2996 = vpack.c.b16 %v2983, %v2982
    %v2997 = vpack.c.b16 %v2985, %v2984
    %v2998 = vpack.c.b16 %v2987, %v2986
    %v2999 = vpack.c.b16 %v2989, %v2988
    %v3000 = vpack.c.b16 %v2991, %v2990
    %v3001 = vpack.c.b16 %v2993, %v2992
    %3010 = vmatprep.subr.bf16.mxu0 0
    %3011 = vmatpush1.bf16.msra.mxu0 %v2994
    %3012 = vmatprep.subr.bf16.mxu0 0
    %3013 = vmatpush1.bf16.msra.mxu0 %v2995
    %3014 = vmatprep.subr.bf16.mxu0 0
    %3015 = vmatpush1.bf16.msra.mxu0 %v2996
    %3016 = vmatprep.subr.bf16.mxu0 0
    %3017 = vmatpush1.bf16.msra.mxu0 %v2997
    %3018 = vmatprep.subr.bf16.mxu0 0
    %3019 = vmatpush1.bf16.msra.mxu0 %v2998
    %3020 = vmatprep.subr.bf16.mxu0 0
    %3021 = vmatpush1.bf16.msra.mxu0 %v2999
    %3022 = vmatprep.subr.bf16.mxu0 0
    %3023 = vmatpush1.bf16.msra.mxu0 %v3000
    %3024 = vmatprep.subr.bf16.mxu0 0
    %3025 = vmatpush1.bf16.msra.mxu0 %v3001
    %3026 = vmatprep.subr.bf16.mxu0 0
    %3027 = vmatpush1.bf16.msra.mxu0 0
    %3028 = vmatprep.subr.bf16.mxu0 0
    %3029 = vmatpush1.bf16.msra.mxu0 0
    %3030 = vmatprep.subr.bf16.mxu0 0
    %3031 = vmatpush1.bf16.msra.mxu0 0
    %3032 = vmatprep.subr.bf16.mxu0 0
    %3033 = vmatpush1.bf16.msra.mxu0 0
    %3034 = vmatprep.subr.bf16.mxu0 0
    %3035 = vmatpush1.bf16.msra.mxu0 0
    %3036 = vmatprep.subr.bf16.mxu0 0
    %3037 = vmatpush1.bf16.msra.mxu0 0
    %3038 = vmatprep.subr.bf16.mxu0 0
    %3039 = vmatpush1.bf16.msra.mxu0 0
    %3040 = vmatprep.subr.bf16.mxu0 0
    %3041 = vmatpush1.bf16.msra.mxu0 0
    %3042 = vmatprep.mubr.bf16.mxu0 0
    %3043 = vmatmul.mubr.bf16.gmra.mrb[0].mxu0 %v2936
    %v3044 = vpop.f32.mrb[0].mxu0
    %v3045 = vadd.f32 %v2960, %v3044
    %v3046 = vpop.f32.mrb[0].mxu0
    %v3047 = vpop.f32.mrb[0].mxu0
    %v3048 = vpop.f32.mrb[0].mxu0
    %3049 = vdwg.mxu0
    %v3050 = vrot.slane %v3045, 4
    %v3051 = vadd.f32 %v3045, %v3050
    %v3052 = vrot.slane %v3051, 2
    %v3053 = vadd.f32 %v3051, %v3052
    %v3054 = vrot.slane %v3053, 1
    %v3055 = vadd.f32 %v3053, %v3054
    %v3056 = vmul.f32 %v3055, %v720
    %v3057 = vmul.f32 %v3045, %v3045
    %v3058 = vrot.slane %v3057, 4
    %v3059 = vadd.f32 %v3057, %v3058
    %v3060 = vrot.slane %v3059, 2
    %v3061 = vadd.f32 %v3059, %v3060
    %v3062 = vrot.slane %v3061, 1
    %v3063 = vadd.f32 %v3061, %v3062
    %v3064 = vmul.f32 %v3063, %v720
    %v3065 = vmul.f32 %v3056, %v3056
    %v3066 = vsub.f32 %v3064, %v3065
    %s3067 = scalar_lea.vmem %s14, 2
    %v3068 = vld [vmem:[%s3067] sm:$0x1]
    %v3069 = vsub.f32 %v3045, %v3056
    %v3071 = vlaneseq
    %v3072 = vshrl.u32 %v3071, 7
    %v3073 = vsub.s32 0, %v3072
    %v3074 = vrot.slane %v3068, %v3073
    %v3076 = vmul.f32 %v3074, %v3069
    %v3077 = vadd.f32 %v3066, 1e-05
    %v3078 = vrsqrt.pop %v3077
    %v3079 = vmul.f32 %v3076, %v3078
    %s3080 = scalar_lea.vmem %s15, 2
    %v3081 = vld [vmem:[%s3080] sm:$0x1]
    %v3083 = vlaneseq
    %v3084 = vshrl.u32 %v3083, 7
    %v3085 = vsub.s32 0, %v3084
    %v3086 = vrot.slane %v3081, %v3085
    %v3088 = vadd.f32 %v3079, %v3086
    %v3089 = vxor.u32 %v3088, 2147483648
    %v3090 = vmul.f32 %v3089, 1.442695
    %v3091 = vpow.pop %v3090
    %v3092 = vadd.f32 %v3091, 1.0
    %v3093 = vrcp.pop %v3092
    %v3094 = vmul.f32 1.0, %v3093
    %v3095 = vpack.c.bf16 %v3094, %v3094
    %s3096 = scalar_lea.vmem [#allocation16], 192
    %v3097 = vld [vmem:[%s3096] sm:$0xf]
    %v3098 = vld [vmem:[%s3096 + $0x4] sm:$0xf]
    %v3099 = vld [vmem:[%s3096 + $0x8] sm:$0xf]
    %v3100 = vld [vmem:[%s3096 + $0xc] sm:$0xf]
    %v3101 = vld [vmem:[%s3096 + $0x10] sm:$0xf]
    %v3102 = vld [vmem:[%s3096 + $0x14] sm:$0xf]
    %v3103 = vld [vmem:[%s3096 + $0x18] sm:$0xf]
    %v3104 = vld [vmem:[%s3096 + $0x1c] sm:$0xf]
    %v3105 = vld [vmem:[%s3096 + $0x20] sm:$0xf]
    %v3106 = vld [vmem:[%s3096 + $0x24] sm:$0xf]
    %v3107 = vld [vmem:[%s3096 + $0x28] sm:$0xf]
    %v3108 = vld [vmem:[%s3096 + $0x2c] sm:$0xf]
    %v3109 = vld [vmem:[%s3096 + $0x30] sm:$0xf]
    %v3110 = vld [vmem:[%s3096 + $0x34] sm:$0xf]
    %v3111 = vld [vmem:[%s3096 + $0x38] sm:$0xf]
    %v3112 = vld [vmem:[%s3096 + $0x3c] sm:$0xf]
    %s3113 = scalar_lea.vmem %s13, 3
    %v3114 = vld [vmem:[%s3113] sm:$0x1]
    %v3116 = vlaneseq
    %v3117 = vshrl.u32 %v3116, 7
    %v3118 = vsub.s32 0, %v3117
    %v3119 = vrot.slane %v3114, %v3118
    %v3137 = vunpack.c.l.b16 %v3097
    %v3138 = vunpack.c.l.b16 %v3098
    %v3139 = vunpack.c.l.b16 %v3099
    %v3140 = vunpack.c.l.b16 %v3100
    %v3141 = vunpack.c.l.b16 %v3101
    %v3142 = vunpack.c.l.b16 %v3102
    %v3143 = vunpack.c.l.b16 %v3103
    %v3144 = vunpack.c.l.b16 %v3104
    %v3145 = vunpack.c.l.b16 %v3105
    %v3146 = vunpack.c.l.b16 %v3106
    %v3147 = vunpack.c.l.b16 %v3107
    %v3148 = vunpack.c.l.b16 %v3108
    %v3149 = vunpack.c.l.b16 %v3109
    %v3150 = vunpack.c.l.b16 %v3110
    %v3151 = vunpack.c.l.b16 %v3111
    %v3152 = vunpack.c.l.b16 %v3112
    %v3153 = vpack.c.b16 %v3138, %v3137
    %v3154 = vpack.c.b16 %v3140, %v3139
    %v3155 = vpack.c.b16 %v3142, %v3141
    %v3156 = vpack.c.b16 %v3144, %v3143
    %v3157 = vpack.c.b16 %v3146, %v3145
    %v3158 = vpack.c.b16 %v3148, %v3147
    %v3159 = vpack.c.b16 %v3150, %v3149
    %v3160 = vpack.c.b16 %v3152, %v3151
    %3169 = vmatprep.subr.bf16.mxu0 0
    %3170 = vmatpush1.bf16.msra.mxu0 %v3153
    %3171 = vmatprep.subr.bf16.mxu0 0
    %3172 = vmatpush1.bf16.msra.mxu0 %v3154
    %3173 = vmatprep.subr.bf16.mxu0 0
    %3174 = vmatpush1.bf16.msra.mxu0 %v3155
    %3175 = vmatprep.subr.bf16.mxu0 0
    %3176 = vmatpush1.bf16.msra.mxu0 %v3156
    %3177 = vmatprep.subr.bf16.mxu0 0
    %3178 = vmatpush1.bf16.msra.mxu0 %v3157
    %3179 = vmatprep.subr.bf16.mxu0 0
    %3180 = vmatpush1.bf16.msra.mxu0 %v3158
    %3181 = vmatprep.subr.bf16.mxu0 0
    %3182 = vmatpush1.bf16.msra.mxu0 %v3159
    %3183 = vmatprep.subr.bf16.mxu0 0
    %3184 = vmatpush1.bf16.msra.mxu0 %v3160
    %3185 = vmatprep.subr.bf16.mxu0 0
    %3186 = vmatpush1.bf16.msra.mxu0 0
    %3187 = vmatprep.subr.bf16.mxu0 0
    %3188 = vmatpush1.bf16.msra.mxu0 0
    %3189 = vmatprep.subr.bf16.mxu0 0
    %3190 = vmatpush1.bf16.msra.mxu0 0
    %3191 = vmatprep.subr.bf16.mxu0 0
    %3192 = vmatpush1.bf16.msra.mxu0 0
    %3193 = vmatprep.subr.bf16.mxu0 0
    %3194 = vmatpush1.bf16.msra.mxu0 0
    %3195 = vmatprep.subr.bf16.mxu0 0
    %3196 = vmatpush1.bf16.msra.mxu0 0
    %3197 = vmatprep.subr.bf16.mxu0 0
    %3198 = vmatpush1.bf16.msra.mxu0 0
    %3199 = vmatprep.subr.bf16.mxu0 0
    %3200 = vmatpush1.bf16.msra.mxu0 0
    %3201 = vmatprep.mubr.bf16.mxu0 0
    %3202 = vmatmul.mubr.bf16.gmra.mrb[0].mxu0 %v3095
    %v3203 = vpop.f32.mrb[0].mxu0
    %v3204 = vadd.f32 %v3119, %v3203
    %v3205 = vpop.f32.mrb[0].mxu0
    %v3206 = vpop.f32.mrb[0].mxu0
    %v3207 = vpop.f32.mrb[0].mxu0
    %3208 = vdwg.mxu0
    %v3209 = vrot.slane %v3204, 4
    %v3210 = vadd.f32 %v3204, %v3209
    %v3211 = vrot.slane %v3210, 2
    %v3212 = vadd.f32 %v3210, %v3211
    %v3213 = vrot.slane %v3212, 1
    %v3214 = vadd.f32 %v3212, %v3213
    %v3215 = vmul.f32 %v3214, %v720
    %v3216 = vmul.f32 %v3204, %v3204
    %v3217 = vrot.slane %v3216, 4
    %v3218 = vadd.f32 %v3216, %v3217
    %v3219 = vrot.slane %v3218, 2
    %v3220 = vadd.f32 %v3218, %v3219
    %v3221 = vrot.slane %v3220, 1
    %v3222 = vadd.f32 %v3220, %v3221
    %v3223 = vmul.f32 %v3222, %v720
    %v3224 = vmul.f32 %v3215, %v3215
    %v3225 = vsub.f32 %v3223, %v3224
    %s3226 = scalar_lea.vmem %s14, 3
    %v3227 = vld [vmem:[%s3226] sm:$0x1]
    %v3228 = vsub.f32 %v3204, %v3215
    %v3230 = vlaneseq
    %v3231 = vshrl.u32 %v3230, 7
    %v3232 = vsub.s32 0, %v3231
    %v3233 = vrot.slane %v3227, %v3232
    %v3235 = vmul.f32 %v3233, %v3228
    %v3236 = vadd.f32 %v3225, 1e-05
    %v3237 = vrsqrt.pop %v3236
    %v3238 = vmul.f32 %v3235, %v3237
    %s3239 = scalar_lea.vmem %s15, 3
    %v3240 = vld [vmem:[%s3239] sm:$0x1]
    %v3242 = vlaneseq
    %v3243 = vshrl.u32 %v3242, 7
    %v3244 = vsub.s32 0, %v3243
    %v3245 = vrot.slane %v3240, %v3244
    %v3247 = vadd.f32 %v3238, %v3245
    %v3248 = vxor.u32 %v3247, 2147483648
    %v3249 = vmul.f32 %v3248, 1.442695
    %v3250 = vpow.pop %v3249
    %v3251 = vadd.f32 %v3250, 1.0
    %v3252 = vrcp.pop %v3251
    %v3253 = vmul.f32 1.0, %v3252
    %v3254 = vpack.c.bf16 %v3253, %v3253
    %s3255 = scalar_lea.vmem [#allocation16], 256
    %v3256 = vld [vmem:[%s3255] sm:$0xf]
    %v3257 = vld [vmem:[%s3255 + $0x4] sm:$0xf]
    %v3258 = vld [vmem:[%s3255 + $0x8] sm:$0xf]
    %v3259 = vld [vmem:[%s3255 + $0xc] sm:$0xf]
    %v3260 = vld [vmem:[%s3255 + $0x10] sm:$0xf]
    %v3261 = vld [vmem:[%s3255 + $0x14] sm:$0xf]
    %v3262 = vld [vmem:[%s3255 + $0x18] sm:$0xf]
    %v3263 = vld [vmem:[%s3255 + $0x1c] sm:$0xf]
    %v3264 = vld [vmem:[%s3255 + $0x20] sm:$0xf]
    %v3265 = vld [vmem:[%s3255 + $0x24] sm:$0xf]
    %v3266 = vld [vmem:[%s3255 + $0x28] sm:$0xf]
    %v3267 = vld [vmem:[%s3255 + $0x2c] sm:$0xf]
    %v3268 = vld [vmem:[%s3255 + $0x30] sm:$0xf]
    %v3269 = vld [vmem:[%s3255 + $0x34] sm:$0xf]
    %v3270 = vld [vmem:[%s3255 + $0x38] sm:$0xf]
    %v3271 = vld [vmem:[%s3255 + $0x3c] sm:$0xf]
    %s3272 = scalar_lea.vmem %s13, 4
    %v3273 = vld [vmem:[%s3272] sm:$0x1]
    %v3275 = vlaneseq
    %v3276 = vshrl.u32 %v3275, 7
    %v3277 = vsub.s32 0, %v3276
    %v3278 = vrot.slane %v3273, %v3277
    %v3296 = vunpack.c.l.b16 %v3256
    %v3297 = vunpack.c.l.b16 %v3257
    %v3298 = vunpack.c.l.b16 %v3258
    %v3299 = vunpack.c.l.b16 %v3259
    %v3300 = vunpack.c.l.b16 %v3260
    %v3301 = vunpack.c.l.b16 %v3261
    %v3302 = vunpack.c.l.b16 %v3262
    %v3303 = vunpack.c.l.b16 %v3263
    %v3304 = vunpack.c.l.b16 %v3264
    %v3305 = vunpack.c.l.b16 %v3265
    %v3306 = vunpack.c.l.b16 %v3266
    %v3307 = vunpack.c.l.b16 %v3267
    %v3308 = vunpack.c.l.b16 %v3268
    %v3309 = vunpack.c.l.b16 %v3269
    %v3310 = vunpack.c.l.b16 %v3270
    %v3311 = vunpack.c.l.b16 %v3271
    %v3312 = vpack.c.b16 %v3297, %v3296
    %v3313 = vpack.c.b16 %v3299, %v3298
    %v3314 = vpack.c.b16 %v3301, %v3300
    %v3315 = vpack.c.b16 %v3303, %v3302
    %v3316 = vpack.c.b16 %v3305, %v3304
    %v3317 = vpack.c.b16 %v3307, %v3306
    %v3318 = vpack.c.b16 %v3309, %v3308
    %v3319 = vpack.c.b16 %v3311, %v3310
    %3328 = vmatprep.subr.bf16.mxu0 0
    %3329 = vmatpush1.bf16.msra.mxu0 %v3312
    %3330 = vmatprep.subr.bf16.mxu0 0
    %3331 = vmatpush1.bf16.msra.mxu0 %v3313
    %3332 = vmatprep.subr.bf16.mxu0 0
    %3333 = vmatpush1.bf16.msra.mxu0 %v3314
    %3334 = vmatprep.subr.bf16.mxu0 0
    %3335 = vmatpush1.bf16.msra.mxu0 %v3315
    %3336 = vmatprep.subr.bf16.mxu0 0
    %3337 = vmatpush1.bf16.msra.mxu0 %v3316
    %3338 = vmatprep.subr.bf16.mxu0 0
    %3339 = vmatpush1.bf16.msra.mxu0 %v3317
    %3340 = vmatprep.subr.bf16.mxu0 0
    %3341 = vmatpush1.bf16.msra.mxu0 %v3318
    %3342 = vmatprep.subr.bf16.mxu0 0
    %3343 = vmatpush1.bf16.msra.mxu0 %v3319
    %3344 = vmatprep.subr.bf16.mxu0 0
    %3345 = vmatpush1.bf16.msra.mxu0 0
    %3346 = vmatprep.subr.bf16.mxu0 0
    %3347 = vmatpush1.bf16.msra.mxu0 0
    %3348 = vmatprep.subr.bf16.mxu0 0
    %3349 = vmatpush1.bf16.msra.mxu0 0
    %3350 = vmatprep.subr.bf16.mxu0 0
    %3351 = vmatpush1.bf16.msra.mxu0 0
    %3352 = vmatprep.subr.bf16.mxu0 0
    %3353 = vmatpush1.bf16.msra.mxu0 0
    %3354 = vmatprep.subr.bf16.mxu0 0
    %3355 = vmatpush1.bf16.msra.mxu0 0
    %3356 = vmatprep.subr.bf16.mxu0 0
    %3357 = vmatpush1.bf16.msra.mxu0 0
    %3358 = vmatprep.subr.bf16.mxu0 0
    %3359 = vmatpush1.bf16.msra.mxu0 0
    %3360 = vmatprep.mubr.bf16.mxu0 0
    %3361 = vmatmul.mubr.bf16.gmra.mrb[0].mxu0 %v3254
    %v3362 = vpop.f32.mrb[0].mxu0
    %v3363 = vadd.f32 %v3278, %v3362
    %v3364 = vpop.f32.mrb[0].mxu0
    %v3365 = vpop.f32.mrb[0].mxu0
    %v3366 = vpop.f32.mrb[0].mxu0
    %3367 = vdwg.mxu0
    %v3368 = vrot.slane %v3363, 4
    %v3369 = vadd.f32 %v3363, %v3368
    %v3370 = vrot.slane %v3369, 2
    %v3371 = vadd.f32 %v3369, %v3370
    %v3372 = vrot.slane %v3371, 1
    %v3373 = vadd.f32 %v3371, %v3372
    %v3374 = vmul.f32 %v3373, %v720
    %v3375 = vmul.f32 %v3363, %v3363
    %v3376 = vrot.slane %v3375, 4
    %v3377 = vadd.f32 %v3375, %v3376
    %v3378 = vrot.slane %v3377, 2
    %v3379 = vadd.f32 %v3377, %v3378
    %v3380 = vrot.slane %v3379, 1
    %v3381 = vadd.f32 %v3379, %v3380
    %v3382 = vmul.f32 %v3381, %v720
    %v3383 = vmul.f32 %v3374, %v3374
    %v3384 = vsub.f32 %v3382, %v3383
    %s3385 = scalar_lea.vmem %s14, 4
    %v3386 = vld [vmem:[%s3385] sm:$0x1]
    %v3387 = vsub.f32 %v3363, %v3374
    %v3389 = vlaneseq
    %v3390 = vshrl.u32 %v3389, 7
    %v3391 = vsub.s32 0, %v3390
    %v3392 = vrot.slane %v3386, %v3391
    %v3394 = vmul.f32 %v3392, %v3387
    %v3395 = vadd.f32 %v3384, 1e-05
    %v3396 = vrsqrt.pop %v3395
    %v3397 = vmul.f32 %v3394, %v3396
    %s3398 = scalar_lea.vmem %s15, 4
    %v3399 = vld [vmem:[%s3398] sm:$0x1]
    %v3401 = vlaneseq
    %v3402 = vshrl.u32 %v3401, 7
    %v3403 = vsub.s32 0, %v3402
    %v3404 = vrot.slane %v3399, %v3403
    %v3406 = vadd.f32 %v3397, %v3404
    %v3407 = vxor.u32 %v3406, 2147483648
    %v3408 = vmul.f32 %v3407, 1.442695
    %v3409 = vpow.pop %v3408
    %v3410 = vadd.f32 %v3409, 1.0
    %v3411 = vrcp.pop %v3410
    %v3412 = vmul.f32 1.0, %v3411
    %v3413 = vpack.c.bf16 %v3412, %v3412
    %v3414 = vld [vmem:[#allocation17] sm:$0xff]
    %v3415 = vld [vmem:[#allocation17 + $0x8] sm:$0xff]
    %v3416 = vld [vmem:[#allocation17 + $0x10] sm:$0xff]
    %v3417 = vld [vmem:[#allocation17 + $0x18] sm:$0xff]
    %v3418 = vld [vmem:[#allocation17 + $0x20] sm:$0xff]
    %v3419 = vld [vmem:[#allocation17 + $0x28] sm:$0xff]
    %v3420 = vld [vmem:[#allocation17 + $0x30] sm:$0xff]
    %v3421 = vld [vmem:[#allocation17 + $0x38] sm:$0xff]
    %v3422 = vld [vmem:[#allocation17 + $0x40] sm:$0xff]
    %v3423 = vld [vmem:[#allocation17 + $0x48] sm:$0xff]
    %v3424 = vld [vmem:[#allocation17 + $0x50] sm:$0xff]
    %v3425 = vld [vmem:[#allocation17 + $0x58] sm:$0xff]
    %v3426 = vld [vmem:[#allocation17 + $0x60] sm:$0xff]
    %v3427 = vld [vmem:[#allocation17 + $0x68] sm:$0xff]
    %v3428 = vld [vmem:[#allocation17 + $0x70] sm:$0xff]
    %v3429 = vld [vmem:[#allocation17 + $0x78] sm:$0xff]
    %v3430 = vld [vmem:[%s17] sm:$0x3]
    %v3432 = vlaneseq
    %v3433 = vshrl.u32 %v3432, 7
    %v3434 = vsub.s32 0, %v3433
    %v3435 = vrot.slane %v3430, %v3434
    %v3436 = vlaneseq
    %v3437 = vshrl.u32 %v3436, 7
    %v3438 = vsub.s32 1, %v3437
    %v3439 = vrot.slane %v3430, %v3438
    %v3458 = vunpack.c.l.b16 %v3414
    %v3459 = vunpack.c.h.b16 %v3414
    %v3460 = vunpack.c.l.b16 %v3415
    %v3461 = vunpack.c.h.b16 %v3415
    %v3462 = vunpack.c.l.b16 %v3416
    %v3463 = vunpack.c.h.b16 %v3416
    %v3464 = vunpack.c.l.b16 %v3417
    %v3465 = vunpack.c.h.b16 %v3417
    %v3466 = vunpack.c.l.b16 %v3418
    %v3467 = vunpack.c.h.b16 %v3418
    %v3468 = vunpack.c.l.b16 %v3419
    %v3469 = vunpack.c.h.b16 %v3419
    %v3470 = vunpack.c.l.b16 %v3420
    %v3471 = vunpack.c.h.b16 %v3420
    %v3472 = vunpack.c.l.b16 %v3421
    %v3473 = vunpack.c.h.b16 %v3421
    %v3474 = vunpack.c.l.b16 %v3422
    %v3475 = vunpack.c.h.b16 %v3422
    %v3476 = vunpack.c.l.b16 %v3423
    %v3477 = vunpack.c.h.b16 %v3423
    %v3478 = vunpack.c.l.b16 %v3424
    %v3479 = vunpack.c.h.b16 %v3424
    %v3480 = vunpack.c.l.b16 %v3425
    %v3481 = vunpack.c.h.b16 %v3425
    %v3482 = vunpack.c.l.b16 %v3426
    %v3483 = vunpack.c.h.b16 %v3426
    %v3484 = vunpack.c.l.b16 %v3427
    %v3485 = vunpack.c.h.b16 %v3427
    %v3486 = vunpack.c.l.b16 %v3428
    %v3487 = vunpack.c.h.b16 %v3428
    %v3488 = vunpack.c.l.b16 %v3429
    %v3489 = vunpack.c.h.b16 %v3429
    %v3490 = vpack.c.b16 %v3460, %v3458
    %v3491 = vpack.c.b16 %v3461, %v3459
    %v3492 = vpack.c.b16 %v3464, %v3462
    %v3493 = vpack.c.b16 %v3465, %v3463
    %v3494 = vpack.c.b16 %v3468, %v3466
    %v3495 = vpack.c.b16 %v3469, %v3467
    %v3496 = vpack.c.b16 %v3472, %v3470
    %v3497 = vpack.c.b16 %v3473, %v3471
    %v3498 = vpack.c.b16 %v3476, %v3474
    %v3499 = vpack.c.b16 %v3477, %v3475
    %v3500 = vpack.c.b16 %v3480, %v3478
    %v3501 = vpack.c.b16 %v3481, %v3479
    %v3502 = vpack.c.b16 %v3484, %v3482
    %v3503 = vpack.c.b16 %v3485, %v3483
    %v3504 = vpack.c.b16 %v3488, %v3486
    %v3505 = vpack.c.b16 %v3489, %v3487
    %3522 = vmatprep.subr.bf16.mxu0 %v3491
    %3523 = vmatpush1.bf16.msra.mxu0 %v3490
    %3524 = vmatprep.subr.bf16.mxu0 %v3493
    %3525 = vmatpush1.bf16.msra.mxu0 %v3492
    %3526 = vmatprep.subr.bf16.mxu0 %v3495
    %3527 = vmatpush1.bf16.msra.mxu0 %v3494
    %3528 = vmatprep.subr.bf16.mxu0 %v3497
    %3529 = vmatpush1.bf16.msra.mxu0 %v3496
    %3530 = vmatprep.subr.bf16.mxu0 %v3499
    %3531 = vmatpush1.bf16.msra.mxu0 %v3498
    %3532 = vmatprep.subr.bf16.mxu0 %v3501
    %3533 = vmatpush1.bf16.msra.mxu0 %v3500
    %3534 = vmatprep.subr.bf16.mxu0 %v3503
    %3535 = vmatpush1.bf16.msra.mxu0 %v3502
    %3536 = vmatprep.subr.bf16.mxu0 %v3505
    %3537 = vmatpush1.bf16.msra.mxu0 %v3504
    %3538 = vmatprep.subr.bf16.mxu0 0
    %3539 = vmatpush1.bf16.msra.mxu0 0
    %3540 = vmatprep.subr.bf16.mxu0 0
    %3541 = vmatpush1.bf16.msra.mxu0 0
    %3542 = vmatprep.subr.bf16.mxu0 0
    %3543 = vmatpush1.bf16.msra.mxu0 0
    %3544 = vmatprep.subr.bf16.mxu0 0
    %3545 = vmatpush1.bf16.msra.mxu0 0
    %3546 = vmatprep.subr.bf16.mxu0 0
    %3547 = vmatpush1.bf16.msra.mxu0 0
    %3548 = vmatprep.subr.bf16.mxu0 0
    %3549 = vmatpush1.bf16.msra.mxu0 0
    %3550 = vmatprep.subr.bf16.mxu0 0
    %3551 = vmatpush1.bf16.msra.mxu0 0
    %3552 = vmatprep.subr.bf16.mxu0 0
    %3553 = vmatpush1.bf16.msra.mxu0 0
    %3554 = vmatprep.mubr.bf16.mxu0 0
    %3555 = vmatmul.mubr.bf16.gmra.mrb[0].mxu0 %v3413
    %v3556 = vpop.f32.mrb[0].mxu0
    %v3557 = vadd.f32 %v3435, %v3556
    %v3558 = vpop.f32.mrb[0].mxu0
    %v3559 = vadd.f32 %v3439, %v3558
    %v3560 = vpop.f32.mrb[0].mxu0
    %v3561 = vpop.f32.mrb[0].mxu0
    %3562 = vdwg.mxu0
    %v3563 = vmul.f32 %v3557, 1.442695
    %v3564 = vpow.pop %v3563
    %v3565 = vmul.f32 %v3564, %v2620
    %v3566 = vadd.f32 %v3565, %v3559
    %3567 = vst [vmem:[#allocation19] sm:$0xff] %v3566
    %3568 = vst [vmem:[#allocation19 + $0x8] sm:$0xff] %v2621
    // Predicated region
    $region114: #{tpu_custom_call.1} parent=1 // pred_check
      _
    $region115: #{tpu_custom_call.1} parent=1 // pred_check_branch
      %3570 = sbr.rel (0) target = $region117
    $region116: #{tpu_custom_call.1} parent=1 // pred_region
      %s3572 = ssub.s32 256, 256
      %3573 = vsyncadd [#allocation4], %s3572
      %s3575 = sshll.u32 [#allocation19], 4
      %s3576 = int_to_ptr.vmem [resolvable:$true] %s3575
      %3578 = dma.vmem_to_hbm [thread:$0]  %s3576, 256, %s18, [#allocation4]
    $region117: #{tpu_custom_call.1} parent=1 // pred_fallthru
      _
    // Predicated region
    $region118: #{tpu_custom_call.1} parent=1 // pred_check
      _
    $region119: #{tpu_custom_call.1} parent=1 // pred_check_branch
      %3580 = sbr.rel (0) target = $region121
    $region120: #{tpu_custom_call.1} parent=1 // pred_region
      %3581 = dma.done [#allocation4], 256
    $region121: #{tpu_custom_call.1} parent=1 // pred_fallthru
      _
    %3582 = vsyncpa [#allocation3], 1
    %3583 = vsyncpa [#allocation6], 1
    %3584 = vsyncpa [#allocation9], 1
    %3585 = vsyncpa [#allocation12], 1
    %3586 = vsyncpa [#allocation15], 1
    %3587 = vsyncpa [#allocation18], 1
    %3588 = vsyncpa [#allocation4], 1

</llo_original>
